<compile_context>
chip_gen: v6e
topology: v6e:2x2x1
jax: 0.10.0
libtpu: 0.0.40
codegen_flags: <defaults>
</compile_context>

<pallas_src>
import numpy as np
import jax
import jax.numpy as jnp
from jax.experimental import pallas as pl
from jax.experimental.pallas import tpu as pltpu

EPS = 1e-5          # nn.InstanceNorm3d default eps
NEG_SLOPE = 0.01    # nn.LeakyReLU(negative_slope=0.01)


def _leaky_relu(y):
    return jnp.where(y > 0, y, NEG_SLOPE * y)


def _banded_weights(w, W):
    """Fold the kw taps AND all W positions into the contraction dim.

    w: (3, 3, 3, Cin, Cout).  Returns (9*W*Cin, W*Cout) where row
    ((kd*3+kh)*W + iw)*Cin + ci, column ow*Cout + co holds w[kd, kh, kw, ci, co]
    with iw = ow + kw - 1.  Out-of-range taps (iw < 0 or iw >= W) are simply
    omitted, which implements the W zero-padding with NO pad lanes in the
    data, so every in-kernel scratch write is lane-offset-free.
    """
    Kd, Kh, Kw, Cin, Cout = w.shape
    sel = np.zeros((Kw, W, W), np.float32)            # sel[kw, iw, ow]
    for kw in range(Kw):
        for ow in range(W):
            iw = ow + kw - 1
            if 0 <= iw < W:
                sel[kw, iw, ow] = 1.0
    band = jnp.einsum('kio,dhkce->dhicoe', jnp.asarray(sel), w)
    return band.reshape(Kd * Kh * W * Cin, W * Cout)


def basic_block_3d_forward(x, params):
    """x: (N, Cin, D, H, W) float32 (PyTorch NCDHW).  Returns same layout."""
    w1, g1, b1, w2, g2, b2 = params
    N, Cin, D, H, W = x.shape
    C = w1.shape[-1]
    assert Cin == C, "downsample=None path requires inplanes == planes"

    WC = W * C                  # lane width of one (d, h) activation row
    R = D * H                   # rows of the flattened activation
    KB = 9 * WC                 # contraction depth of the fused banded matmul
    inv_nsp = 1.0 / float(D * H * W)

    # ---- host-side layout prep (one fused transpose; NO padding in HBM) ----
    # TODO(synk): fold the NCDHW<->channels-last boundary transposes into the
    # kernel (strided DMA / Element index_map over C) -- for real volumes they
    # cost as much HBM traffic as the kernel itself.
    x_l = jnp.transpose(x, (0, 2, 3, 4, 1)).reshape(N, D, H, WC)
    x_l = x_l.astype(jnp.float32)

    wm1 = _banded_weights(w1, W).astype(jnp.bfloat16)       # (9*WC, WC)
    wm2 = _banded_weights(w2, W).astype(jnp.bfloat16)
    # per-channel affine params pre-tiled across the W lane groups -> (1, W*C)
    g1_l = jnp.tile(g1.reshape(1, C), (1, W)).astype(jnp.float32)
    b1_l = jnp.tile(b1.reshape(1, C), (1, W)).astype(jnp.float32)
    g2_l = jnp.tile(g2.reshape(1, C), (1, W)).astype(jnp.float32)
    b2_l = jnp.tile(b2.reshape(1, C), (1, W)).astype(jnp.float32)
    # channel-broadcast projector: (v @ P)[w*C+c] = sum_{w'} v[w'*C+c]
    proj = jnp.tile(jnp.eye(C, dtype=jnp.float32), (W, W))   # (WC, WC)

    def kernel(x_ref, w1_ref, w2_ref, g1_ref, b1_ref, g2_ref, b2_ref, p_ref,
               o_ref, pad_ref, stg_ref):
        # Re-zero ONLY the halo of the padded scratch; the interior is fully
        # overwritten by both stages every step.
        pad_ref[0:1] = jnp.zeros((1, H + 2, WC), jnp.float32)
        pad_ref[D + 1:D + 2] = jnp.zeros((1, H + 2, WC), jnp.float32)
        pad_ref[1:D + 1, 0:1, :] = jnp.zeros((D, 1, WC), jnp.float32)
        pad_ref[1:D + 1, H + 1:H + 2, :] = jnp.zeros((D, 1, WC), jnp.float32)

        def conv_in(wm_ref, g_row, b_row):
            # Gather the 9 (kd, kh)-shifted slabs side by side at 128-aligned
            # lane offsets, then ONE K=9*WC bf16 MXU matmul.
            # TODO(synk): switch pad_ref to bf16 (drops these 9 casts and
            # halves slab bytes) once packed-dtype stores at odd sublane
            # offsets are validated on all target generations.
            for kd in range(3):
                for kh in range(3):
                    g = kd * 3 + kh
                    slab = pad_ref[kd:kd + D, kh:kh + H, :]      # (D, H, WC)
                    slab = slab.reshape(R, WC).astype(jnp.bfloat16)
                    stg_ref[:, g * WC:(g + 1) * WC] = slab
            acc = jnp.dot(stg_ref[...], wm_ref[...],
                          preferred_element_type=jnp.float32)    # (R, WC) f32
            # InstanceNorm3d (biased var, f32): per-channel stats.  A single
            # projector matmul broadcasts the per-(w,c)-lane sums across the
            # W lane groups; sum and sum-of-squares share the (2, WC) matmul.
            srows = jnp.concatenate(
                [jnp.sum(acc, axis=0, keepdims=True),
                 jnp.sum(acc * acc, axis=0, keepdims=True)], axis=0)
            stats = jnp.dot(srows, p_ref[...],
                            preferred_element_type=jnp.float32) * inv_nsp
            mean = stats[0:1, :]
            var = stats[1:2, :] - mean * mean
            return (acc - mean) * jax.lax.rsqrt(var + EPS) * g_row + b_row

        x3 = x_ref[0]                                # (D, H, WC) f32

        # ---- stage 1: y1 = leaky_relu(bn1(conv1(x))) ----
        pad_ref[1:D + 1, 1:H + 1, :] = x3            # aligned, offset-free
        y1 = _leaky_relu(conv_in(w1_ref, g1_ref[...], b1_ref[...]))

        # ---- stage 2: out = leaky_relu(bn2(conv2(y1)) + x) ----
        pad_ref[1:D + 1, 1:H + 1, :] = y1.reshape(D, H, WC)
        y2 = conv_in(w2_ref, g2_ref[...], b2_ref[...])
        y2 = y2 + x3.reshape(R, WC)                  # identity = pre-norm input
        o_ref[0] = _leaky_relu(y2).astype(o_ref.dtype)

    def full(shape):
        return pl.BlockSpec(shape, lambda b: (0,) * len(shape))

    # TODO(synk): production UNet shapes need per-generation re-tiling: tile
    # D/H with a +1 halo and split the IN sums across tiles (pl.when finalize),
    # tile W inside the band (the fold wastes ~W/3x MXU flops / weight bytes at
    # large W -- switch to the compact K=3*Cin form once 3*Cin >= MXU depth),
    # mark the constant-index weight/proj specs pipeline_mode=pl.Buffered(1) so
    # the banded weights are not double-buffered on v7x (64 MiB VMEM), and use
    # a batch-folded (M=N*D*H, grid-free) variant on single-TC v5e/v6e.
    out = pl.pallas_call(
        kernel,
        out_shape=jax.ShapeDtypeStruct((N, R, WC), jnp.float32),
        grid=(N,),
        in_specs=[
            pl.BlockSpec((1, D, H, WC), lambda b: (b, 0, 0, 0)),
            full((KB, WC)),
            full((KB, WC)),
            full((1, WC)), full((1, WC)), full((1, WC)), full((1, WC)),
            full((WC, WC)),
        ],
        out_specs=pl.BlockSpec((1, R, WC), lambda b: (b, 0, 0)),
        scratch_shapes=[
            pltpu.VMEM((D + 2, H + 2, WC), jnp.float32),   # zero-halo pad
            pltpu.VMEM((R, KB), jnp.bfloat16),             # K-concat staging
        ],
        compiler_params=pltpu.CompilerParams(
            dimension_semantics=("parallel",)),
    )(x_l, wm1, wm2, g1_l, b1_l, g2_l, b2_l, proj)

    out = out.reshape(N, D, H, W, C)
    return jnp.transpose(out, (0, 4, 1, 2, 3))


def _reference_forward(x, params):
    """Plain-JAX f32 reference (mirrors the PyTorch forward) for validation."""
    w1, g1, b1, w2, g2, b2 = params
    xn = jnp.transpose(x, (0, 2, 3, 4, 1)).astype(jnp.float32)

    def conv(z, w):
        return jax.lax.conv_general_dilated(
            z, w, window_strides=(1, 1, 1),
            padding=((1, 1), (1, 1), (1, 1)),
            dimension_numbers=("NDHWC", "DHWIO", "NDHWC"))

    def inorm(z, g, bta):
        m = jnp.mean(z, axis=(1, 2, 3), keepdims=True)
        v = jnp.mean((z - m) ** 2, axis=(1, 2, 3), keepdims=True)
        zn = (z - m) * jax.lax.rsqrt(v + EPS)
        return zn * g.reshape(1, 1, 1, 1, -1) + bta.reshape(1, 1, 1, 1, -1)

    y = _leaky_relu(inorm(conv(xn, w1), g1, b1))
    y = inorm(conv(y, w2), g2, b2) + xn
    y = _leaky_relu(y)
    return jnp.transpose(y, (0, 4, 1, 2, 3))


if __name__ == "__main__":
    # inplanes == planes == 16 -> W*C = 128 (lane-dense I/O blocks)
    N, C, D, H, W = 2, 16, 8, 8, 8
    planes = C

    key = jax.random.PRNGKey(0)
    k = jax.random.split(key, 7)
    x = jax.random.normal(k[0], (N, C, D, H, W), jnp.float32)

    # Deterministic synthetic parameters (conv3x3x3 no-bias, InstanceNorm affine).
    w1 = 0.1 * jax.random.normal(k[1], (3, 3, 3, C, planes), jnp.float32)
    g1 = 1.0 + 0.1 * jax.random.normal(k[2], (planes,), jnp.float32)
    b1 = 0.1 * jax.random.normal(k[3], (planes,), jnp.float32)
    w2 = 0.1 * jax.random.normal(k[4], (3, 3, 3, planes, planes), jnp.float32)
    g2 = 1.0 + 0.1 * jax.random.normal(k[5], (planes,), jnp.float32)
    b2 = 0.1 * jax.random.normal(k[6], (planes,), jnp.float32)
    params = (w1, g1, b1, w2, g2, b2)

    out = jax.block_until_ready(basic_block_3d_forward(x, params))
    ref = jax.block_until_ready(_reference_forward(x, params))

    assert out.shape == (N, planes, D, H, W)
    err = float(jnp.max(jnp.abs(out - ref)))
    # bf16 matmul operands (norm/residual math in f32) -> slightly looser tol.
    assert err < 5e-2, f"mismatch vs reference: max abs err = {err}"

    print("KERNEL_OK")
</pallas_src>

<mosaic_0001>
module attributes {stable_mosaic.version = 11 : i64} {
  func.func @kernel(%arg0: i32, %arg1: memref<1x8x8x128xf32, #tpu.memory_space<vmem>>, %arg2: memref<1152x128xbf16, #tpu.memory_space<vmem>>, %arg3: memref<1152x128xbf16, #tpu.memory_space<vmem>>, %arg4: memref<1x128xf32, #tpu.memory_space<vmem>>, %arg5: memref<1x128xf32, #tpu.memory_space<vmem>>, %arg6: memref<1x128xf32, #tpu.memory_space<vmem>>, %arg7: memref<1x128xf32, #tpu.memory_space<vmem>>, %arg8: memref<128x128xf32, #tpu.memory_space<vmem>>, %arg9: memref<1x64x128xf32, #tpu.memory_space<vmem>>, %arg10: memref<10x10x128xf32, #tpu.memory_space<vmem>>, %arg11: memref<64x1152xbf16, #tpu.memory_space<vmem>>) attributes {dimension_semantics = [#tpu.dimension_semantics<parallel>], iteration_bounds = array<i64: 2>, scalar_prefetch = 0 : i64, scratch_operands = 2 : i64, tpu.core_type = #tpu.core_type<tc>, window_params = [{transform_indices = @transform_0, window_bounds = array<i64: 1, 8, 8, 128>}, {pipeline_mode = #tpu.pipeline_mode<synchronous>, transform_indices = @transform_1, window_bounds = array<i64: 1152, 128>}, {pipeline_mode = #tpu.pipeline_mode<synchronous>, transform_indices = @transform_2, window_bounds = array<i64: 1152, 128>}, {pipeline_mode = #tpu.pipeline_mode<synchronous>, transform_indices = @transform_3, window_bounds = array<i64: 1, 128>}, {pipeline_mode = #tpu.pipeline_mode<synchronous>, transform_indices = @transform_4, window_bounds = array<i64: 1, 128>}, {pipeline_mode = #tpu.pipeline_mode<synchronous>, transform_indices = @transform_5, window_bounds = array<i64: 1, 128>}, {pipeline_mode = #tpu.pipeline_mode<synchronous>, transform_indices = @transform_6, window_bounds = array<i64: 1, 128>}, {pipeline_mode = #tpu.pipeline_mode<synchronous>, transform_indices = @transform_7, window_bounds = array<i64: 128, 128>}, {transform_indices = @transform_8, window_bounds = array<i64: 1, 64, 128>}]} {
    %cst = arith.constant 0.000000e+00 : f32
    %0 = vector.broadcast %cst : f32 to vector<1x10x128xf32>
    %c0 = arith.constant 0 : index
    %c0_0 = arith.constant 0 : index
    %c0_1 = arith.constant 0 : index
    %1 = vector.load %arg10[%c0, %c0_0, %c0_1] : memref<10x10x128xf32, #tpu.memory_space<vmem>>, vector<1x10x128xf32>
    tpu.vector_store %arg10[%c0, %c0_0, %c0_1], %0 {strides = array<i32>} : memref<10x10x128xf32, #tpu.memory_space<vmem>>, vector<1x10x128xf32>,
    %cst_2 = arith.constant 0.000000e+00 : f32
    %2 = vector.broadcast %cst_2 : f32 to vector<1x10x128xf32>
    %c9 = arith.constant 9 : index
    %c0_3 = arith.constant 0 : index
    %c0_4 = arith.constant 0 : index
    %3 = vector.load %arg10[%c9, %c0_3, %c0_4] : memref<10x10x128xf32, #tpu.memory_space<vmem>>, vector<1x10x128xf32>
    tpu.vector_store %arg10[%c9, %c0_3, %c0_4], %2 {strides = array<i32>} : memref<10x10x128xf32, #tpu.memory_space<vmem>>, vector<1x10x128xf32>,
    %cst_5 = arith.constant 0.000000e+00 : f32
    %4 = vector.broadcast %cst_5 : f32 to vector<8x1x128xf32>
    %c1 = arith.constant 1 : index
    %c0_6 = arith.constant 0 : index
    %c0_7 = arith.constant 0 : index
    %5 = vector.load %arg10[%c1, %c0_6, %c0_7] : memref<10x10x128xf32, #tpu.memory_space<vmem>>, vector<8x1x128xf32>
    tpu.vector_store %arg10[%c1, %c0_6, %c0_7], %4 {strides = array<i32>} : memref<10x10x128xf32, #tpu.memory_space<vmem>>, vector<8x1x128xf32>,
    %cst_8 = arith.constant 0.000000e+00 : f32
    %6 = vector.broadcast %cst_8 : f32 to vector<8x1x128xf32>
    %c1_9 = arith.constant 1 : index
    %c9_10 = arith.constant 9 : index
    %c0_11 = arith.constant 0 : index
    %7 = vector.load %arg10[%c1_9, %c9_10, %c0_11] : memref<10x10x128xf32, #tpu.memory_space<vmem>>, vector<8x1x128xf32>
    tpu.vector_store %arg10[%c1_9, %c9_10, %c0_11], %6 {strides = array<i32>} : memref<10x10x128xf32, #tpu.memory_space<vmem>>, vector<8x1x128xf32>,
    %c0_12 = arith.constant 0 : index
    %c0_13 = arith.constant 0 : index
    %c0_14 = arith.constant 0 : index
    %c0_15 = arith.constant 0 : index
    %8 = vector.load %arg1[%c0_12, %c0_13, %c0_14, %c0_15] : memref<1x8x8x128xf32, #tpu.memory_space<vmem>>, vector<1x8x8x128xf32>
    %9 = vector.shape_cast %8 : vector<1x8x8x128xf32> to vector<8x8x128xf32>
    %c1_16 = arith.constant 1 : index
    %c1_17 = arith.constant 1 : index
    %c0_18 = arith.constant 0 : index
    %10 = vector.load %arg10[%c1_16, %c1_17, %c0_18] : memref<10x10x128xf32, #tpu.memory_space<vmem>>, vector<8x8x128xf32>
    tpu.vector_store %arg10[%c1_16, %c1_17, %c0_18], %9 {strides = array<i32>} : memref<10x10x128xf32, #tpu.memory_space<vmem>>, vector<8x8x128xf32>,
    %c0_19 = arith.constant 0 : index
    %c0_20 = arith.constant 0 : index
    %11 = vector.load %arg4[%c0_19, %c0_20] : memref<1x128xf32, #tpu.memory_space<vmem>>, vector<1x128xf32>
    %c0_21 = arith.constant 0 : index
    %c0_22 = arith.constant 0 : index
    %12 = vector.load %arg5[%c0_21, %c0_22] : memref<1x128xf32, #tpu.memory_space<vmem>>, vector<1x128xf32>
    %c0_23 = arith.constant 0 : index
    %c0_24 = arith.constant 0 : index
    %c0_25 = arith.constant 0 : index
    %13 = vector.load %arg10[%c0_23, %c0_24, %c0_25] : memref<10x10x128xf32, #tpu.memory_space<vmem>>, vector<8x8x128xf32>
    %14 = vector.shape_cast %13 : vector<8x8x128xf32> to vector<64x128xf32>
    %15 = arith.truncf %14 : vector<64x128xf32> to vector<64x128xbf16>
    %c0_26 = arith.constant 0 : index
    %c0_27 = arith.constant 0 : index
    %16 = vector.load %arg11[%c0_26, %c0_27] : memref<64x1152xbf16, #tpu.memory_space<vmem>>, vector<64x128xbf16>
    tpu.vector_store %arg11[%c0_26, %c0_27], %15 {strides = array<i32>} : memref<64x1152xbf16, #tpu.memory_space<vmem>>, vector<64x128xbf16>,
    %c0_28 = arith.constant 0 : index
    %c1_29 = arith.constant 1 : index
    %c0_30 = arith.constant 0 : index
    %17 = vector.load %arg10[%c0_28, %c1_29, %c0_30] : memref<10x10x128xf32, #tpu.memory_space<vmem>>, vector<8x8x128xf32>
    %18 = vector.shape_cast %17 : vector<8x8x128xf32> to vector<64x128xf32>
    %19 = arith.truncf %18 : vector<64x128xf32> to vector<64x128xbf16>
    %c0_31 = arith.constant 0 : index
    %c128 = arith.constant 128 : index
    %20 = vector.load %arg11[%c0_31, %c128] : memref<64x1152xbf16, #tpu.memory_space<vmem>>, vector<64x128xbf16>
    tpu.vector_store %arg11[%c0_31, %c128], %19 {strides = array<i32>} : memref<64x1152xbf16, #tpu.memory_space<vmem>>, vector<64x128xbf16>,
    %c0_32 = arith.constant 0 : index
    %c2 = arith.constant 2 : index
    %c0_33 = arith.constant 0 : index
    %21 = vector.load %arg10[%c0_32, %c2, %c0_33] : memref<10x10x128xf32, #tpu.memory_space<vmem>>, vector<8x8x128xf32>
    %22 = vector.shape_cast %21 : vector<8x8x128xf32> to vector<64x128xf32>
    %23 = arith.truncf %22 : vector<64x128xf32> to vector<64x128xbf16>
    %c0_34 = arith.constant 0 : index
    %c256 = arith.constant 256 : index
    %24 = vector.load %arg11[%c0_34, %c256] : memref<64x1152xbf16, #tpu.memory_space<vmem>>, vector<64x128xbf16>
    tpu.vector_store %arg11[%c0_34, %c256], %23 {strides = array<i32>} : memref<64x1152xbf16, #tpu.memory_space<vmem>>, vector<64x128xbf16>,
    %c1_35 = arith.constant 1 : index
    %c0_36 = arith.constant 0 : index
    %c0_37 = arith.constant 0 : index
    %25 = vector.load %arg10[%c1_35, %c0_36, %c0_37] : memref<10x10x128xf32, #tpu.memory_space<vmem>>, vector<8x8x128xf32>
    %26 = vector.shape_cast %25 : vector<8x8x128xf32> to vector<64x128xf32>
    %27 = arith.truncf %26 : vector<64x128xf32> to vector<64x128xbf16>
    %c0_38 = arith.constant 0 : index
    %c384 = arith.constant 384 : index
    %28 = vector.load %arg11[%c0_38, %c384] : memref<64x1152xbf16, #tpu.memory_space<vmem>>, vector<64x128xbf16>
    tpu.vector_store %arg11[%c0_38, %c384], %27 {strides = array<i32>} : memref<64x1152xbf16, #tpu.memory_space<vmem>>, vector<64x128xbf16>,
    %c1_39 = arith.constant 1 : index
    %c1_40 = arith.constant 1 : index
    %c0_41 = arith.constant 0 : index
    %29 = vector.load %arg10[%c1_39, %c1_40, %c0_41] : memref<10x10x128xf32, #tpu.memory_space<vmem>>, vector<8x8x128xf32>
    %30 = vector.shape_cast %29 : vector<8x8x128xf32> to vector<64x128xf32>
    %31 = arith.truncf %30 : vector<64x128xf32> to vector<64x128xbf16>
    %c0_42 = arith.constant 0 : index
    %c512 = arith.constant 512 : index
    %32 = vector.load %arg11[%c0_42, %c512] : memref<64x1152xbf16, #tpu.memory_space<vmem>>, vector<64x128xbf16>
    tpu.vector_store %arg11[%c0_42, %c512], %31 {strides = array<i32>} : memref<64x1152xbf16, #tpu.memory_space<vmem>>, vector<64x128xbf16>,
    %c1_43 = arith.constant 1 : index
    %c2_44 = arith.constant 2 : index
    %c0_45 = arith.constant 0 : index
    %33 = vector.load %arg10[%c1_43, %c2_44, %c0_45] : memref<10x10x128xf32, #tpu.memory_space<vmem>>, vector<8x8x128xf32>
    %34 = vector.shape_cast %33 : vector<8x8x128xf32> to vector<64x128xf32>
    %35 = arith.truncf %34 : vector<64x128xf32> to vector<64x128xbf16>
    %c0_46 = arith.constant 0 : index
    %c640 = arith.constant 640 : index
    %36 = vector.load %arg11[%c0_46, %c640] : memref<64x1152xbf16, #tpu.memory_space<vmem>>, vector<64x128xbf16>
    tpu.vector_store %arg11[%c0_46, %c640], %35 {strides = array<i32>} : memref<64x1152xbf16, #tpu.memory_space<vmem>>, vector<64x128xbf16>,
    %c2_47 = arith.constant 2 : index
    %c0_48 = arith.constant 0 : index
    %c0_49 = arith.constant 0 : index
    %37 = vector.load %arg10[%c2_47, %c0_48, %c0_49] : memref<10x10x128xf32, #tpu.memory_space<vmem>>, vector<8x8x128xf32>
    %38 = vector.shape_cast %37 : vector<8x8x128xf32> to vector<64x128xf32>
    %39 = arith.truncf %38 : vector<64x128xf32> to vector<64x128xbf16>
    %c0_50 = arith.constant 0 : index
    %c768 = arith.constant 768 : index
    %40 = vector.load %arg11[%c0_50, %c768] : memref<64x1152xbf16, #tpu.memory_space<vmem>>, vector<64x128xbf16>
    tpu.vector_store %arg11[%c0_50, %c768], %39 {strides = array<i32>} : memref<64x1152xbf16, #tpu.memory_space<vmem>>, vector<64x128xbf16>,
    %c2_51 = arith.constant 2 : index
    %c1_52 = arith.constant 1 : index
    %c0_53 = arith.constant 0 : index
    %41 = vector.load %arg10[%c2_51, %c1_52, %c0_53] : memref<10x10x128xf32, #tpu.memory_space<vmem>>, vector<8x8x128xf32>
    %42 = vector.shape_cast %41 : vector<8x8x128xf32> to vector<64x128xf32>
    %43 = arith.truncf %42 : vector<64x128xf32> to vector<64x128xbf16>
    %c0_54 = arith.constant 0 : index
    %c896 = arith.constant 896 : index
    %44 = vector.load %arg11[%c0_54, %c896] : memref<64x1152xbf16, #tpu.memory_space<vmem>>, vector<64x128xbf16>
    tpu.vector_store %arg11[%c0_54, %c896], %43 {strides = array<i32>} : memref<64x1152xbf16, #tpu.memory_space<vmem>>, vector<64x128xbf16>,
    %c2_55 = arith.constant 2 : index
    %c2_56 = arith.constant 2 : index
    %c0_57 = arith.constant 0 : index
    %45 = vector.load %arg10[%c2_55, %c2_56, %c0_57] : memref<10x10x128xf32, #tpu.memory_space<vmem>>, vector<8x8x128xf32>
    %46 = vector.shape_cast %45 : vector<8x8x128xf32> to vector<64x128xf32>
    %47 = arith.truncf %46 : vector<64x128xf32> to vector<64x128xbf16>
    %c0_58 = arith.constant 0 : index
    %c1024 = arith.constant 1024 : index
    %48 = vector.load %arg11[%c0_58, %c1024] : memref<64x1152xbf16, #tpu.memory_space<vmem>>, vector<64x128xbf16>
    tpu.vector_store %arg11[%c0_58, %c1024], %47 {strides = array<i32>} : memref<64x1152xbf16, #tpu.memory_space<vmem>>, vector<64x128xbf16>,
    %c0_59 = arith.constant 0 : index
    %c0_60 = arith.constant 0 : index
    %49 = vector.load %arg11[%c0_59, %c0_60] : memref<64x1152xbf16, #tpu.memory_space<vmem>>, vector<64x1152xbf16>
    %c0_61 = arith.constant 0 : index
    %c0_62 = arith.constant 0 : index
    %50 = vector.load %arg2[%c0_61, %c0_62] : memref<1152x128xbf16, #tpu.memory_space<vmem>>, vector<1152x128xbf16>
    %cst_63 = arith.constant dense<0.000000e+00> : vector<64x128xf32>
    %51 = tpu.matmul %49, %50, %cst_63 {dimension_numbers = #tpu.dot_dimension_numbers<[1], [0], [0], [1], [0, 0, 1, 1], [], []>} : vector<64x1152xbf16>, vector<1152x128xbf16>, vector<64x128xf32> -> vector<64x128xf32>
    %cst_64 = arith.constant dense<0.000000e+00> : vector<128xf32>
    %52 = vector.multi_reduction <add>, %51, %cst_64 [0] : vector<64x128xf32> to vector<128xf32>
    %53 = vector.shape_cast %52 : vector<128xf32> to vector<1x128xf32>
    %54 = arith.mulf %51, %51 : vector<64x128xf32>
    %cst_65 = arith.constant dense<0.000000e+00> : vector<128xf32>
    %55 = vector.multi_reduction <add>, %54, %cst_65 [0] : vector<64x128xf32> to vector<128xf32>
    %56 = vector.shape_cast %55 : vector<128xf32> to vector<1x128xf32>
    %57 = tpu.concatenate %53, %56 in 0 : vector<1x128xf32>, vector<1x128xf32> -> vector<2x128xf32>
    %c0_66 = arith.constant 0 : index
    %c0_67 = arith.constant 0 : index
    %58 = vector.load %arg8[%c0_66, %c0_67] : memref<128x128xf32, #tpu.memory_space<vmem>>, vector<128x128xf32>
    %cst_68 = arith.constant dense<0.000000e+00> : vector<2x128xf32>
    %59 = tpu.matmul %57, %58, %cst_68 {dimension_numbers = #tpu.dot_dimension_numbers<[1], [0], [0], [1], [0, 0, 1, 1], [], []>} : vector<2x128xf32>, vector<128x128xf32>, vector<2x128xf32> -> vector<2x128xf32>
    %cst_69 = arith.constant 0.001953125 : f32
    %60 = vector.broadcast %cst_69 : f32 to vector<2x128xf32>
    %61 = arith.mulf %59, %60 : vector<2x128xf32>
    %62 = vector.extract_strided_slice %61 {offsets = [0, 0], sizes = [1, 128], strides = [1, 1]} : vector<2x128xf32> to vector<1x128xf32>
    %63 = vector.extract_strided_slice %61 {offsets = [1, 0], sizes = [1, 128], strides = [1, 1]} : vector<2x128xf32> to vector<1x128xf32>
    %64 = arith.mulf %62, %62 : vector<1x128xf32>
    %65 = arith.subf %63, %64 : vector<1x128xf32>
    %66 = vector.broadcast %62 : vector<1x128xf32> to vector<64x128xf32>
    %67 = arith.subf %51, %66 : vector<64x128xf32>
    %cst_70 = arith.constant 9.99999974E-6 : f32
    %68 = vector.broadcast %cst_70 : f32 to vector<1x128xf32>
    %69 = arith.addf %65, %68 : vector<1x128xf32>
    %70 = math.rsqrt %69 : vector<1x128xf32>
    %71 = vector.broadcast %70 : vector<1x128xf32> to vector<64x128xf32>
    %72 = arith.mulf %67, %71 : vector<64x128xf32>
    %73 = vector.broadcast %11 : vector<1x128xf32> to vector<64x128xf32>
    %74 = arith.mulf %72, %73 : vector<64x128xf32>
    %75 = vector.broadcast %12 : vector<1x128xf32> to vector<64x128xf32>
    %76 = arith.addf %74, %75 : vector<64x128xf32>
    %cst_71 = arith.constant 0.000000e+00 : f32
    %77 = vector.broadcast %cst_71 : f32 to vector<64x128xf32>
    %78 = arith.cmpf ogt, %76, %77 : vector<64x128xf32>
    %cst_72 = arith.constant 0.00999999977 : f32
    %79 = vector.broadcast %cst_72 : f32 to vector<64x128xf32>
    %80 = arith.mulf %79, %76 : vector<64x128xf32>
    %81 = arith.select %78, %76, %80 : vector<64x128xi1>, vector<64x128xf32>
    %82 = vector.shape_cast %81 : vector<64x128xf32> to vector<8x8x128xf32>
    %c1_73 = arith.constant 1 : index
    %c1_74 = arith.constant 1 : index
    %c0_75 = arith.constant 0 : index
    %83 = vector.load %arg10[%c1_73, %c1_74, %c0_75] : memref<10x10x128xf32, #tpu.memory_space<vmem>>, vector<8x8x128xf32>
    tpu.vector_store %arg10[%c1_73, %c1_74, %c0_75], %82 {strides = array<i32>} : memref<10x10x128xf32, #tpu.memory_space<vmem>>, vector<8x8x128xf32>,
    %c0_76 = arith.constant 0 : index
    %c0_77 = arith.constant 0 : index
    %84 = vector.load %arg6[%c0_76, %c0_77] : memref<1x128xf32, #tpu.memory_space<vmem>>, vector<1x128xf32>
    %c0_78 = arith.constant 0 : index
    %c0_79 = arith.constant 0 : index
    %85 = vector.load %arg7[%c0_78, %c0_79] : memref<1x128xf32, #tpu.memory_space<vmem>>, vector<1x128xf32>
    %c0_80 = arith.constant 0 : index
    %c0_81 = arith.constant 0 : index
    %c0_82 = arith.constant 0 : index
    %86 = vector.load %arg10[%c0_80, %c0_81, %c0_82] : memref<10x10x128xf32, #tpu.memory_space<vmem>>, vector<8x8x128xf32>
    %87 = vector.shape_cast %86 : vector<8x8x128xf32> to vector<64x128xf32>
    %88 = arith.truncf %87 : vector<64x128xf32> to vector<64x128xbf16>
    %c0_83 = arith.constant 0 : index
    %c0_84 = arith.constant 0 : index
    %89 = vector.load %arg11[%c0_83, %c0_84] : memref<64x1152xbf16, #tpu.memory_space<vmem>>, vector<64x128xbf16>
    tpu.vector_store %arg11[%c0_83, %c0_84], %88 {strides = array<i32>} : memref<64x1152xbf16, #tpu.memory_space<vmem>>, vector<64x128xbf16>,
    %c0_85 = arith.constant 0 : index
    %c1_86 = arith.constant 1 : index
    %c0_87 = arith.constant 0 : index
    %90 = vector.load %arg10[%c0_85, %c1_86, %c0_87] : memref<10x10x128xf32, #tpu.memory_space<vmem>>, vector<8x8x128xf32>
    %91 = vector.shape_cast %90 : vector<8x8x128xf32> to vector<64x128xf32>
    %92 = arith.truncf %91 : vector<64x128xf32> to vector<64x128xbf16>
    %c0_88 = arith.constant 0 : index
    %c128_89 = arith.constant 128 : index
    %93 = vector.load %arg11[%c0_88, %c128_89] : memref<64x1152xbf16, #tpu.memory_space<vmem>>, vector<64x128xbf16>
    tpu.vector_store %arg11[%c0_88, %c128_89], %92 {strides = array<i32>} : memref<64x1152xbf16, #tpu.memory_space<vmem>>, vector<64x128xbf16>,
    %c0_90 = arith.constant 0 : index
    %c2_91 = arith.constant 2 : index
    %c0_92 = arith.constant 0 : index
    %94 = vector.load %arg10[%c0_90, %c2_91, %c0_92] : memref<10x10x128xf32, #tpu.memory_space<vmem>>, vector<8x8x128xf32>
    %95 = vector.shape_cast %94 : vector<8x8x128xf32> to vector<64x128xf32>
    %96 = arith.truncf %95 : vector<64x128xf32> to vector<64x128xbf16>
    %c0_93 = arith.constant 0 : index
    %c256_94 = arith.constant 256 : index
    %97 = vector.load %arg11[%c0_93, %c256_94] : memref<64x1152xbf16, #tpu.memory_space<vmem>>, vector<64x128xbf16>
    tpu.vector_store %arg11[%c0_93, %c256_94], %96 {strides = array<i32>} : memref<64x1152xbf16, #tpu.memory_space<vmem>>, vector<64x128xbf16>,
    %c1_95 = arith.constant 1 : index
    %c0_96 = arith.constant 0 : index
    %c0_97 = arith.constant 0 : index
    %98 = vector.load %arg10[%c1_95, %c0_96, %c0_97] : memref<10x10x128xf32, #tpu.memory_space<vmem>>, vector<8x8x128xf32>
    %99 = vector.shape_cast %98 : vector<8x8x128xf32> to vector<64x128xf32>
    %100 = arith.truncf %99 : vector<64x128xf32> to vector<64x128xbf16>
    %c0_98 = arith.constant 0 : index
    %c384_99 = arith.constant 384 : index
    %101 = vector.load %arg11[%c0_98, %c384_99] : memref<64x1152xbf16, #tpu.memory_space<vmem>>, vector<64x128xbf16>
    tpu.vector_store %arg11[%c0_98, %c384_99], %100 {strides = array<i32>} : memref<64x1152xbf16, #tpu.memory_space<vmem>>, vector<64x128xbf16>,
    %c1_100 = arith.constant 1 : index
    %c1_101 = arith.constant 1 : index
    %c0_102 = arith.constant 0 : index
    %102 = vector.load %arg10[%c1_100, %c1_101, %c0_102] : memref<10x10x128xf32, #tpu.memory_space<vmem>>, vector<8x8x128xf32>
    %103 = vector.shape_cast %102 : vector<8x8x128xf32> to vector<64x128xf32>
    %104 = arith.truncf %103 : vector<64x128xf32> to vector<64x128xbf16>
    %c0_103 = arith.constant 0 : index
    %c512_104 = arith.constant 512 : index
    %105 = vector.load %arg11[%c0_103, %c512_104] : memref<64x1152xbf16, #tpu.memory_space<vmem>>, vector<64x128xbf16>
    tpu.vector_store %arg11[%c0_103, %c512_104], %104 {strides = array<i32>} : memref<64x1152xbf16, #tpu.memory_space<vmem>>, vector<64x128xbf16>,
    %c1_105 = arith.constant 1 : index
    %c2_106 = arith.constant 2 : index
    %c0_107 = arith.constant 0 : index
    %106 = vector.load %arg10[%c1_105, %c2_106, %c0_107] : memref<10x10x128xf32, #tpu.memory_space<vmem>>, vector<8x8x128xf32>
    %107 = vector.shape_cast %106 : vector<8x8x128xf32> to vector<64x128xf32>
    %108 = arith.truncf %107 : vector<64x128xf32> to vector<64x128xbf16>
    %c0_108 = arith.constant 0 : index
    %c640_109 = arith.constant 640 : index
    %109 = vector.load %arg11[%c0_108, %c640_109] : memref<64x1152xbf16, #tpu.memory_space<vmem>>, vector<64x128xbf16>
    tpu.vector_store %arg11[%c0_108, %c640_109], %108 {strides = array<i32>} : memref<64x1152xbf16, #tpu.memory_space<vmem>>, vector<64x128xbf16>,
    %c2_110 = arith.constant 2 : index
    %c0_111 = arith.constant 0 : index
    %c0_112 = arith.constant 0 : index
    %110 = vector.load %arg10[%c2_110, %c0_111, %c0_112] : memref<10x10x128xf32, #tpu.memory_space<vmem>>, vector<8x8x128xf32>
    %111 = vector.shape_cast %110 : vector<8x8x128xf32> to vector<64x128xf32>
    %112 = arith.truncf %111 : vector<64x128xf32> to vector<64x128xbf16>
    %c0_113 = arith.constant 0 : index
    %c768_114 = arith.constant 768 : index
    %113 = vector.load %arg11[%c0_113, %c768_114] : memref<64x1152xbf16, #tpu.memory_space<vmem>>, vector<64x128xbf16>
    tpu.vector_store %arg11[%c0_113, %c768_114], %112 {strides = array<i32>} : memref<64x1152xbf16, #tpu.memory_space<vmem>>, vector<64x128xbf16>,
    %c2_115 = arith.constant 2 : index
    %c1_116 = arith.constant 1 : index
    %c0_117 = arith.constant 0 : index
    %114 = vector.load %arg10[%c2_115, %c1_116, %c0_117] : memref<10x10x128xf32, #tpu.memory_space<vmem>>, vector<8x8x128xf32>
    %115 = vector.shape_cast %114 : vector<8x8x128xf32> to vector<64x128xf32>
    %116 = arith.truncf %115 : vector<64x128xf32> to vector<64x128xbf16>
    %c0_118 = arith.constant 0 : index
    %c896_119 = arith.constant 896 : index
    %117 = vector.load %arg11[%c0_118, %c896_119] : memref<64x1152xbf16, #tpu.memory_space<vmem>>, vector<64x128xbf16>
    tpu.vector_store %arg11[%c0_118, %c896_119], %116 {strides = array<i32>} : memref<64x1152xbf16, #tpu.memory_space<vmem>>, vector<64x128xbf16>,
    %c2_120 = arith.constant 2 : index
    %c2_121 = arith.constant 2 : index
    %c0_122 = arith.constant 0 : index
    %118 = vector.load %arg10[%c2_120, %c2_121, %c0_122] : memref<10x10x128xf32, #tpu.memory_space<vmem>>, vector<8x8x128xf32>
    %119 = vector.shape_cast %118 : vector<8x8x128xf32> to vector<64x128xf32>
    %120 = arith.truncf %119 : vector<64x128xf32> to vector<64x128xbf16>
    %c0_123 = arith.constant 0 : index
    %c1024_124 = arith.constant 1024 : index
    %121 = vector.load %arg11[%c0_123, %c1024_124] : memref<64x1152xbf16, #tpu.memory_space<vmem>>, vector<64x128xbf16>
    tpu.vector_store %arg11[%c0_123, %c1024_124], %120 {strides = array<i32>} : memref<64x1152xbf16, #tpu.memory_space<vmem>>, vector<64x128xbf16>,
    %c0_125 = arith.constant 0 : index
    %c0_126 = arith.constant 0 : index
    %122 = vector.load %arg11[%c0_125, %c0_126] : memref<64x1152xbf16, #tpu.memory_space<vmem>>, vector<64x1152xbf16>
    %c0_127 = arith.constant 0 : index
    %c0_128 = arith.constant 0 : index
    %123 = vector.load %arg3[%c0_127, %c0_128] : memref<1152x128xbf16, #tpu.memory_space<vmem>>, vector<1152x128xbf16>
    %cst_129 = arith.constant dense<0.000000e+00> : vector<64x128xf32>
    %124 = tpu.matmul %122, %123, %cst_129 {dimension_numbers = #tpu.dot_dimension_numbers<[1], [0], [0], [1], [0, 0, 1, 1], [], []>} : vector<64x1152xbf16>, vector<1152x128xbf16>, vector<64x128xf32> -> vector<64x128xf32>
    %cst_130 = arith.constant dense<0.000000e+00> : vector<128xf32>
    %125 = vector.multi_reduction <add>, %124, %cst_130 [0] : vector<64x128xf32> to vector<128xf32>
    %126 = vector.shape_cast %125 : vector<128xf32> to vector<1x128xf32>
    %127 = arith.mulf %124, %124 : vector<64x128xf32>
    %cst_131 = arith.constant dense<0.000000e+00> : vector<128xf32>
    %128 = vector.multi_reduction <add>, %127, %cst_131 [0] : vector<64x128xf32> to vector<128xf32>
    %129 = vector.shape_cast %128 : vector<128xf32> to vector<1x128xf32>
    %130 = tpu.concatenate %126, %129 in 0 : vector<1x128xf32>, vector<1x128xf32> -> vector<2x128xf32>
    %c0_132 = arith.constant 0 : index
    %c0_133 = arith.constant 0 : index
    %131 = vector.load %arg8[%c0_132, %c0_133] : memref<128x128xf32, #tpu.memory_space<vmem>>, vector<128x128xf32>
    %cst_134 = arith.constant dense<0.000000e+00> : vector<2x128xf32>
    %132 = tpu.matmul %130, %131, %cst_134 {dimension_numbers = #tpu.dot_dimension_numbers<[1], [0], [0], [1], [0, 0, 1, 1], [], []>} : vector<2x128xf32>, vector<128x128xf32>, vector<2x128xf32> -> vector<2x128xf32>
    %cst_135 = arith.constant 0.001953125 : f32
    %133 = vector.broadcast %cst_135 : f32 to vector<2x128xf32>
    %134 = arith.mulf %132, %133 : vector<2x128xf32>
    %135 = vector.extract_strided_slice %134 {offsets = [0, 0], sizes = [1, 128], strides = [1, 1]} : vector<2x128xf32> to vector<1x128xf32>
    %136 = vector.extract_strided_slice %134 {offsets = [1, 0], sizes = [1, 128], strides = [1, 1]} : vector<2x128xf32> to vector<1x128xf32>
    %137 = arith.mulf %135, %135 : vector<1x128xf32>
    %138 = arith.subf %136, %137 : vector<1x128xf32>
    %139 = vector.broadcast %135 : vector<1x128xf32> to vector<64x128xf32>
    %140 = arith.subf %124, %139 : vector<64x128xf32>
    %cst_136 = arith.constant 9.99999974E-6 : f32
    %141 = vector.broadcast %cst_136 : f32 to vector<1x128xf32>
    %142 = arith.addf %138, %141 : vector<1x128xf32>
    %143 = math.rsqrt %142 : vector<1x128xf32>
    %144 = vector.broadcast %143 : vector<1x128xf32> to vector<64x128xf32>
    %145 = arith.mulf %140, %144 : vector<64x128xf32>
    %146 = vector.broadcast %84 : vector<1x128xf32> to vector<64x128xf32>
    %147 = arith.mulf %145, %146 : vector<64x128xf32>
    %148 = vector.broadcast %85 : vector<1x128xf32> to vector<64x128xf32>
    %149 = arith.addf %147, %148 : vector<64x128xf32>
    %150 = vector.shape_cast %9 : vector<8x8x128xf32> to vector<64x128xf32>
    %151 = arith.addf %149, %150 : vector<64x128xf32>
    %cst_137 = arith.constant 0.000000e+00 : f32
    %152 = vector.broadcast %cst_137 : f32 to vector<64x128xf32>
    %153 = arith.cmpf ogt, %151, %152 : vector<64x128xf32>
    %cst_138 = arith.constant 0.00999999977 : f32
    %154 = vector.broadcast %cst_138 : f32 to vector<64x128xf32>
    %155 = arith.mulf %154, %151 : vector<64x128xf32>
    %156 = arith.select %153, %151, %155 : vector<64x128xi1>, vector<64x128xf32>
    %c0_139 = arith.constant 0 : index
    %c0_140 = arith.constant 0 : index
    %c0_141 = arith.constant 0 : index
    %157 = vector.load %arg9[%c0_139, %c0_140, %c0_141] : memref<1x64x128xf32, #tpu.memory_space<vmem>>, vector<1x64x128xf32>
    %158 = vector.shape_cast %157 : vector<1x64x128xf32> to vector<64x128xf32>
    %159 = vector.shape_cast %156 : vector<64x128xf32> to vector<1x64x128xf32>
    tpu.vector_store %arg9[%c0_139, %c0_140, %c0_141], %159 {strides = array<i32>} : memref<1x64x128xf32, #tpu.memory_space<vmem>>, vector<1x64x128xf32>,
    return
  }
  func.func @transform_0(%arg0: i32) -> (i32, i32, i32, i32) {
    %c0_i32 = arith.constant 0 : i32
    %c0_i32_0 = arith.constant 0 : i32
    %c0_i32_1 = arith.constant 0 : i32
    %c0_i32_2 = arith.constant 0 : i32
    return %arg0, %c0_i32, %c0_i32_0, %c0_i32_1 : i32, i32, i32, i32
  }
  func.func @transform_1(%arg0: i32) -> (i32, i32) {
    %c0_i32 = arith.constant 0 : i32
    %c0_i32_0 = arith.constant 0 : i32
    %c0_i32_1 = arith.constant 0 : i32
    return %c0_i32, %c0_i32_0 : i32, i32
  }
  func.func @transform_2(%arg0: i32) -> (i32, i32) {
    %c0_i32 = arith.constant 0 : i32
    %c0_i32_0 = arith.constant 0 : i32
    %c0_i32_1 = arith.constant 0 : i32
    return %c0_i32, %c0_i32_0 : i32, i32
  }
  func.func @transform_3(%arg0: i32) -> (i32, i32) {
    %c0_i32 = arith.constant 0 : i32
    %c0_i32_0 = arith.constant 0 : i32
    %c0_i32_1 = arith.constant 0 : i32
    return %c0_i32, %c0_i32_0 : i32, i32
  }
  func.func @transform_4(%arg0: i32) -> (i32, i32) {
    %c0_i32 = arith.constant 0 : i32
    %c0_i32_0 = arith.constant 0 : i32
    %c0_i32_1 = arith.constant 0 : i32
    return %c0_i32, %c0_i32_0 : i32, i32
  }
  func.func @transform_5(%arg0: i32) -> (i32, i32) {
    %c0_i32 = arith.constant 0 : i32
    %c0_i32_0 = arith.constant 0 : i32
    %c0_i32_1 = arith.constant 0 : i32
    return %c0_i32, %c0_i32_0 : i32, i32
  }
  func.func @transform_6(%arg0: i32) -> (i32, i32) {
    %c0_i32 = arith.constant 0 : i32
    %c0_i32_0 = arith.constant 0 : i32
    %c0_i32_1 = arith.constant 0 : i32
    return %c0_i32, %c0_i32_0 : i32, i32
  }
  func.func @transform_7(%arg0: i32) -> (i32, i32) {
    %c0_i32 = arith.constant 0 : i32
    %c0_i32_0 = arith.constant 0 : i32
    %c0_i32_1 = arith.constant 0 : i32
    return %c0_i32, %c0_i32_0 : i32, i32
  }
  func.func @transform_8(%arg0: i32) -> (i32, i32, i32) {
    %c0_i32 = arith.constant 0 : i32
    %c0_i32_0 = arith.constant 0 : i32
    %c0_i32_1 = arith.constant 0 : i32
    return %arg0, %c0_i32, %c0_i32_0 : i32, i32, i32
  }
}

</mosaic_0001>

<llo_original>
// kernel: tpu_custom_call.1
$region0: #{tpu_custom_call.1}
  #allocation0 [shape = 'u32[]', space=smem, size = 0x4, offset = 0x4, fixed_abs, tag = 'smem constant byte address 0x4 - core index']
  #allocation1 [shape = 'u32[144,128]{1,0:T(1,128)}', space=vmem, size = 0x12000, scoped, tag = 'internal scratch']
  #allocation2 [shape = 'f32[10,10,128]{2,1,0:T(8,128)}', space=vmem, size = 0x14000, scoped, tag = 'scratch operand']
  #allocation3 [shape = 'bf16[64,1152]{1,0:T(8,128)(2,1)}', space=vmem, size = 0x24000, scoped, tag = 'scratch operand']
  %s0 = inlined_call_operand.hbm [shape: f32[2,8,8,128], index: 0, kind: input, shape index: {}]
  %s1 = inlined_call_operand.hbm [shape: bf16[1152,128], index: 1, kind: input, shape index: {}]
  %s2 = inlined_call_operand.hbm [shape: bf16[1152,128], index: 2, kind: input, shape index: {}]
  %s3 = inlined_call_operand.vmem [shape: f32[1,128], index: 3, kind: input, shape index: {}]
  %s4 = inlined_call_operand.vmem [shape: f32[1,128], index: 4, kind: input, shape index: {}]
  %s5 = inlined_call_operand.vmem [shape: f32[1,128], index: 5, kind: input, shape index: {}]
  %s6 = inlined_call_operand.vmem [shape: f32[1,128], index: 6, kind: input, shape index: {}]
  %s7 = inlined_call_operand.hbm [shape: f32[128,128], index: 7, kind: input, shape index: {}]
  %s8 = inlined_call_operand.hbm [shape: f32[2,64,128], index: 8, kind: output, shape index: {}]
  %s9 = sld [smem:[#allocation0]]
  $region81: #{tpu_custom_call.1} parent=0
    _
  %s11 = ssub.s32 1, %s9
  %s12 = scalar_select 0, %s11, %s9
  $region1: #{tpu_custom_call.1} parent=0
    #allocation4 [shape = 'u8[65536]{0}', space=vmem, size = 0x10000, scoped, tag = 'input window, operand 0']
    #allocation5 [shape = 's32[2]{0}', space=sflag, size = 0x8, scoped, tag = 'scoped memory for tpu_custom_call.1']
    #allocation6 [shape = 's32[2]{0}', space=sflag, size = 0x8, scoped, tag = 'scoped memory for tpu_custom_call.1']
    #allocation7 [shape = 'u8[294912]{0}', space=vmem, size = 0x48000, scoped, tag = 'input window, operand 1, single buffered']
    #allocation8 [shape = 's32[1]{0}', space=sflag, size = 0x4, scoped, tag = 'scoped memory for tpu_custom_call.1']
    #allocation9 [shape = 'u8[294912]{0}', space=vmem, size = 0x48000, scoped, tag = 'input window, operand 2, single buffered']
    #allocation10 [shape = 'u8[65536]{0}', space=vmem, size = 0x10000, scoped, tag = 'input window, operand 7, single buffered']
    #allocation11 [shape = 's32[1]{0}', space=sflag, size = 0x4, scoped, tag = 'scoped memory for tpu_custom_call.1']
    #allocation12 [shape = 'u8[65536]{0}', space=vmem, size = 0x10000, scoped, tag = 'output window, operand 0']
    %13 = vsyncpa [#allocation5], 0
    %s14 = scalar_lea.sflag [#allocation5], 1
    %15 = vsyncpa %s14, 0
    %16 = vsyncpa [#allocation8], 0
    %17 = vsyncpa [#allocation11], 0
    %18 = vsyncpa [#allocation6], 0
    %s19 = scalar_lea.sflag [#allocation6], 1
    %20 = vsyncpa %s19, 0
    loop: start=0, step=1, limit=4
    $region2: #{tpu_custom_call.1} parent=1 // loop_pre_header
      _
    $region3: #{tpu_custom_call.1} parent=1 // loop_header
      %s22 = sphi 0, %s26
      %p23 = scmp.ge.s32.totalorder %s22, 4
      %s32 = sphi 0, %s34
      %s35 = sphi 0, %s32
      %s36 = sphi 0, %s35
      %s52 = sphi 0, %s36
      %s56 = sphi 0, %s56
      %s58 = sphi 0, %s56
      %s59 = sphi 0, %s58
      %s73 = sphi 0, %s59
      %s77 = sphi 0, %s77
      %s79 = sphi 0, %s77
      %s80 = sphi 0, %s79
      %s94 = sphi 0, %s80
      %s98 = sphi 0, %s98
      %s100 = sphi 0, %s98
      %s101 = sphi 0, %s100
      %s115 = sphi 0, %s101
      %s119 = sphi 0, %s119
      %s121 = sphi 0, %s119
      %s122 = sphi 0, %s121
      %s136 = sphi 0, %s122
      %s140 = sphi 0, %s140
      %s142 = sphi 0, %s140
      %s143 = sphi 0, %s142
      %s157 = sphi 0, %s143
      %s161 = sphi 0, %s161
      %s163 = sphi 0, %s161
      %s164 = sphi 0, %s163
      %s178 = sphi 0, %s164
      %s182 = sphi 0, %s182
      %s184 = sphi 0, %s182
      %s185 = sphi 0, %s184
      %s199 = sphi 0, %s185
      %s205 = sphi 0, %s207
      %s208 = sphi 0, %s205
      %s209 = sphi 0, %s208
      %s225 = sphi 0, %s209
    $region4: #{tpu_custom_call.1} parent=1 // loop_header_branch
      %25 = sbr.rel (%p23) target = $region8
    $region5: #{tpu_custom_call.1} parent=1 // loop_body
      %s27 = ssub.s32 %s22, 1
      %s28 = ssub.s32 %s22, 2
      %s29 = sadd.s32 %s22, 1
      %s30 = ssub.s32 %s22, %s29
      %p31 = scmp.eq.s32.totalorder %s30, 0
      %s33 = sadd.s32 %s32, 1
      %s34 = scalar_select %p31, %s32, %s33
      %p37 = pneg %p31
      %p38 = scmp.eq.s32.totalorder %s22, 1
      %p39 = por %p37, %p38
      %p40 = scmp.ne.s32.totalorder %s32, %s35
      %p41 = scmp.eq.s32.totalorder %s22, 0
      %p42 = por %p40, %p41
      %p43 = scmp.ne.s32.totalorder %s32, %s35
      %p44 = scmp.eq.s32.totalorder %s27, 1
      %p45 = por %p43, %p44
      %p46 = scmp.ne.s32.totalorder %s35, %s36
      %p47 = scmp.eq.s32.totalorder %s27, 0
      %p48 = por %p46, %p47
      %p49 = scmp.ne.s32.totalorder %s35, %s36
      %p50 = scmp.eq.s32.totalorder %s28, 1
      %p51 = por %p49, %p50
      %p53 = scmp.ne.s32.totalorder %s36, %s52
      %p54 = scmp.eq.s32.totalorder %s28, 0
      %p55 = por %p53, %p54
      %s57 = sadd.s32 %s56, 1
      %p60 = scmp.eq.s32.totalorder %s22, 1
      %p61 = scmp.ne.s32.totalorder %s56, %s58
      %p62 = scmp.eq.s32.totalorder %s22, 0
      %p63 = por %p61, %p62
      %p64 = scmp.ne.s32.totalorder %s56, %s58
      %p65 = scmp.eq.s32.totalorder %s27, 1
      %p66 = por %p64, %p65
      %p67 = scmp.ne.s32.totalorder %s58, %s59
      %p68 = scmp.eq.s32.totalorder %s27, 0
      %p69 = por %p67, %p68
      %p70 = scmp.ne.s32.totalorder %s58, %s59
      %p71 = scmp.eq.s32.totalorder %s28, 1
      %p72 = por %p70, %p71
      %p74 = scmp.ne.s32.totalorder %s59, %s73
      %p75 = scmp.eq.s32.totalorder %s28, 0
      %p76 = por %p74, %p75
      %s78 = sadd.s32 %s77, 1
      %p81 = scmp.eq.s32.totalorder %s22, 1
      %p82 = scmp.ne.s32.totalorder %s77, %s79
      %p83 = scmp.eq.s32.totalorder %s22, 0
      %p84 = por %p82, %p83
      %p85 = scmp.ne.s32.totalorder %s77, %s79
      %p86 = scmp.eq.s32.totalorder %s27, 1
      %p87 = por %p85, %p86
      %p88 = scmp.ne.s32.totalorder %s79, %s80
      %p89 = scmp.eq.s32.totalorder %s27, 0
      %p90 = por %p88, %p89
      %p91 = scmp.ne.s32.totalorder %s79, %s80
      %p92 = scmp.eq.s32.totalorder %s28, 1
      %p93 = por %p91, %p92
      %p95 = scmp.ne.s32.totalorder %s80, %s94
      %p96 = scmp.eq.s32.totalorder %s28, 0
      %p97 = por %p95, %p96
      %s99 = sadd.s32 %s98, 1
      %p102 = scmp.eq.s32.totalorder %s22, 1
      %p103 = scmp.ne.s32.totalorder %s98, %s100
      %p104 = scmp.eq.s32.totalorder %s22, 0
      %p105 = por %p103, %p104
      %p106 = scmp.ne.s32.totalorder %s98, %s100
      %p107 = scmp.eq.s32.totalorder %s27, 1
      %p108 = por %p106, %p107
      %p109 = scmp.ne.s32.totalorder %s100, %s101
      %p110 = scmp.eq.s32.totalorder %s27, 0
      %p111 = por %p109, %p110
      %p112 = scmp.ne.s32.totalorder %s100, %s101
      %p113 = scmp.eq.s32.totalorder %s28, 1
      %p114 = por %p112, %p113
      %p116 = scmp.ne.s32.totalorder %s101, %s115
      %p117 = scmp.eq.s32.totalorder %s28, 0
      %p118 = por %p116, %p117
      %s120 = sadd.s32 %s119, 1
      %p123 = scmp.eq.s32.totalorder %s22, 1
      %p124 = scmp.ne.s32.totalorder %s119, %s121
      %p125 = scmp.eq.s32.totalorder %s22, 0
      %p126 = por %p124, %p125
      %p127 = scmp.ne.s32.totalorder %s119, %s121
      %p128 = scmp.eq.s32.totalorder %s27, 1
      %p129 = por %p127, %p128
      %p130 = scmp.ne.s32.totalorder %s121, %s122
      %p131 = scmp.eq.s32.totalorder %s27, 0
      %p132 = por %p130, %p131
      %p133 = scmp.ne.s32.totalorder %s121, %s122
      %p134 = scmp.eq.s32.totalorder %s28, 1
      %p135 = por %p133, %p134
      %p137 = scmp.ne.s32.totalorder %s122, %s136
      %p138 = scmp.eq.s32.totalorder %s28, 0
      %p139 = por %p137, %p138
      %s141 = sadd.s32 %s140, 1
      %p144 = scmp.eq.s32.totalorder %s22, 1
      %p145 = scmp.ne.s32.totalorder %s140, %s142
      %p146 = scmp.eq.s32.totalorder %s22, 0
      %p147 = por %p145, %p146
      %p148 = scmp.ne.s32.totalorder %s140, %s142
      %p149 = scmp.eq.s32.totalorder %s27, 1
      %p150 = por %p148, %p149
      %p151 = scmp.ne.s32.totalorder %s142, %s143
      %p152 = scmp.eq.s32.totalorder %s27, 0
      %p153 = por %p151, %p152
      %p154 = scmp.ne.s32.totalorder %s142, %s143
      %p155 = scmp.eq.s32.totalorder %s28, 1
      %p156 = por %p154, %p155
      %p158 = scmp.ne.s32.totalorder %s143, %s157
      %p159 = scmp.eq.s32.totalorder %s28, 0
      %p160 = por %p158, %p159
      %s162 = sadd.s32 %s161, 1
      %p165 = scmp.eq.s32.totalorder %s22, 1
      %p166 = scmp.ne.s32.totalorder %s161, %s163
      %p167 = scmp.eq.s32.totalorder %s22, 0
      %p168 = por %p166, %p167
      %p169 = scmp.ne.s32.totalorder %s161, %s163
      %p170 = scmp.eq.s32.totalorder %s27, 1
      %p171 = por %p169, %p170
      %p172 = scmp.ne.s32.totalorder %s163, %s164
      %p173 = scmp.eq.s32.totalorder %s27, 0
      %p174 = por %p172, %p173
      %p175 = scmp.ne.s32.totalorder %s163, %s164
      %p176 = scmp.eq.s32.totalorder %s28, 1
      %p177 = por %p175, %p176
      %p179 = scmp.ne.s32.totalorder %s164, %s178
      %p180 = scmp.eq.s32.totalorder %s28, 0
      %p181 = por %p179, %p180
      %s183 = sadd.s32 %s182, 1
      %p186 = scmp.eq.s32.totalorder %s22, 1
      %p187 = scmp.ne.s32.totalorder %s182, %s184
      %p188 = scmp.eq.s32.totalorder %s22, 0
      %p189 = por %p187, %p188
      %p190 = scmp.ne.s32.totalorder %s182, %s184
      %p191 = scmp.eq.s32.totalorder %s27, 1
      %p192 = por %p190, %p191
      %p193 = scmp.ne.s32.totalorder %s184, %s185
      %p194 = scmp.eq.s32.totalorder %s27, 0
      %p195 = por %p193, %p194
      %p196 = scmp.ne.s32.totalorder %s184, %s185
      %p197 = scmp.eq.s32.totalorder %s28, 1
      %p198 = por %p196, %p197
      %p200 = scmp.ne.s32.totalorder %s185, %s199
      %p201 = scmp.eq.s32.totalorder %s28, 0
      %p202 = por %p200, %p201
      %s203 = ssub.s32 %s22, %s29
      %p204 = scmp.eq.s32.totalorder %s203, 0
      %s206 = sadd.s32 %s205, 1
      %s207 = scalar_select %p204, %s205, %s206
      %p210 = pneg %p204
      %p211 = scmp.eq.s32.totalorder %s22, 1
      %p212 = por %p210, %p211
      %p213 = scmp.ne.s32.totalorder %s205, %s208
      %p214 = scmp.eq.s32.totalorder %s22, 0
      %p215 = por %p213, %p214
      %p216 = scmp.ne.s32.totalorder %s205, %s208
      %p217 = scmp.eq.s32.totalorder %s27, 1
      %p218 = por %p216, %p217
      %p219 = scmp.ne.s32.totalorder %s208, %s209
      %p220 = scmp.eq.s32.totalorder %s27, 0
      %p221 = por %p219, %p220
      %p222 = scmp.ne.s32.totalorder %s208, %s209
      %p223 = scmp.eq.s32.totalorder %s28, 1
      %p224 = por %p222, %p223
      %p226 = scmp.ne.s32.totalorder %s209, %s225
      %p227 = scmp.eq.s32.totalorder %s28, 0
      %p228 = por %p226, %p227
      %p229 = scmp.le.s32.totalorder 1, %s22
      %p230 = scmp.lt.s32.totalorder %s22, 3
      %p231 = pnand %p229, %p230
      %p232 = pneg %p231
      // Predicated region
      $region9: #{tpu_custom_call.1} parent=5 // pred_check
        _
      $region10: #{tpu_custom_call.1} parent=5 // pred_check_branch
        %234 = sbr.rel (%p231) target = $region12
      $region11: #{tpu_custom_call.1} parent=5 // pred_region
        %s235 = ssub.s32 %s22, 1
        // Predicated region
        $region13: #{tpu_custom_call.1} parent=11 // pred_check
          %p236 = pneg %p69
        $region14: #{tpu_custom_call.1} parent=11 // pred_check_branch
          %238 = sbr.rel (%p236) target = $region16
        $region15: #{tpu_custom_call.1} parent=11 // pred_region
          %s240 = ssub.s32 9216, 9216
          %241 = vsyncadd [#allocation8], %s240
          %s242 = sshll.u32 [#allocation7], 4
          %s243 = int_to_ptr.vmem [resolvable:$true] %s242
          %248 = dma.hbm_to_vmem [thread:$0]  %s1, 9216, %s243, [#allocation8], 64, 64, 4
        $region16: #{tpu_custom_call.1} parent=11 // pred_fallthru
          _
        // Predicated region
        $region17: #{tpu_custom_call.1} parent=11 // pred_check
          %p249 = pneg %p90
        $region18: #{tpu_custom_call.1} parent=11 // pred_check_branch
          %251 = sbr.rel (%p249) target = $region20
        $region19: #{tpu_custom_call.1} parent=11 // pred_region
          %s253 = ssub.s32 9216, 9216
          %254 = vsyncadd [#allocation8], %s253
          %s255 = sshll.u32 [#allocation9], 4
          %s256 = int_to_ptr.vmem [resolvable:$true] %s255
          %261 = dma.hbm_to_vmem [thread:$0]  %s2, 9216, %s256, [#allocation8], 64, 64, 4
        $region20: #{tpu_custom_call.1} parent=11 // pred_fallthru
          _
        // Predicated region
        $region21: #{tpu_custom_call.1} parent=11 // pred_check
          %p262 = pneg %p111
        $region22: #{tpu_custom_call.1} parent=11 // pred_check_branch
          %264 = sbr.rel (%p262) target = $region24
        $region23: #{tpu_custom_call.1} parent=11 // pred_region
          _
        $region24: #{tpu_custom_call.1} parent=11 // pred_fallthru
          _
        // Predicated region
        $region25: #{tpu_custom_call.1} parent=11 // pred_check
          %p265 = pneg %p132
        $region26: #{tpu_custom_call.1} parent=11 // pred_check_branch
          %267 = sbr.rel (%p265) target = $region28
        $region27: #{tpu_custom_call.1} parent=11 // pred_region
          _
        $region28: #{tpu_custom_call.1} parent=11 // pred_fallthru
          _
        // Predicated region
        $region29: #{tpu_custom_call.1} parent=11 // pred_check
          %p268 = pneg %p153
        $region30: #{tpu_custom_call.1} parent=11 // pred_check_branch
          %270 = sbr.rel (%p268) target = $region32
        $region31: #{tpu_custom_call.1} parent=11 // pred_region
          _
        $region32: #{tpu_custom_call.1} parent=11 // pred_fallthru
          _
        // Predicated region
        $region33: #{tpu_custom_call.1} parent=11 // pred_check
          %p271 = pneg %p174
        $region34: #{tpu_custom_call.1} parent=11 // pred_check_branch
          %273 = sbr.rel (%p271) target = $region36
        $region35: #{tpu_custom_call.1} parent=11 // pred_region
          _
        $region36: #{tpu_custom_call.1} parent=11 // pred_fallthru
          _
        // Predicated region
        $region37: #{tpu_custom_call.1} parent=11 // pred_check
          %p274 = pneg %p195
        $region38: #{tpu_custom_call.1} parent=11 // pred_check_branch
          %276 = sbr.rel (%p274) target = $region40
        $region39: #{tpu_custom_call.1} parent=11 // pred_region
          %s278 = ssub.s32 2048, 2048
          %279 = vsyncadd [#allocation11], %s278
          %s280 = sshll.u32 [#allocation10], 4
          %s281 = int_to_ptr.vmem [resolvable:$true] %s280
          %286 = dma.hbm_to_vmem [thread:$0]  %s7, 2048, %s281, [#allocation11], 128, 128, 8
        $region40: #{tpu_custom_call.1} parent=11 // pred_fallthru
          _
      $region12: #{tpu_custom_call.1} parent=5 // pred_fallthru
        _
      %p287 = scmp.lt.s32.totalorder %s22, 2
      // Predicated region
      $region41: #{tpu_custom_call.1} parent=5 // pred_check
        %p288 = pneg %p287
      $region42: #{tpu_custom_call.1} parent=5 // pred_check_branch
        %290 = sbr.rel (%p288) target = $region44
      $region43: #{tpu_custom_call.1} parent=5 // pred_region
        // Predicated region
        $region45: #{tpu_custom_call.1} parent=43 // pred_check
          %p291 = pneg %p42
        $region46: #{tpu_custom_call.1} parent=43 // pred_check_branch
          %293 = sbr.rel (%p291) target = $region48
        $region47: #{tpu_custom_call.1} parent=43 // pred_region
          %s294 = sand.u32 %s32, 1
          %s295 = scalar_lea.sflag [#allocation5], %s294
          %s296 = sand.u32 %s32, 1
          %s297 = smul.addr %s296, 64
          %s298 = scalar_lea.vmem [#allocation4], %s297
          %s300 = ssub.s32 1024, 1024
          %301 = vsyncadd %s295, %s300
          %s302 = smul.addr %s22, 8
          %s303 = smul.addr %s302, 128
          %s304 = scalar_lea.hbm %s0, %s303
          %s305 = sshll.u32 %s298, 4
          %s306 = int_to_ptr.vmem [resolvable:$true] %s305
          %311 = dma.hbm_to_vmem [thread:$0]  %s304, 1024, %s306, %s295, 128, 128, 8
        $region48: #{tpu_custom_call.1} parent=43 // pred_fallthru
          _
      $region44: #{tpu_custom_call.1} parent=5 // pred_fallthru
        _
      %p312 = scmp.le.s32.totalorder 1, %s22
      %p313 = scmp.lt.s32.totalorder %s22, 3
      %p314 = pnand %p312, %p313
      %p315 = pneg %p314
      // Predicated region
      $region49: #{tpu_custom_call.1} parent=5 // pred_check
        _
      $region50: #{tpu_custom_call.1} parent=5 // pred_check_branch
        %317 = sbr.rel (%p314) target = $region52
      $region51: #{tpu_custom_call.1} parent=5 // pred_region
        %s318 = ssub.s32 %s22, 1
        %s319 = sand.u32 %s35, 1
        %s320 = scalar_lea.sflag [#allocation5], %s319
        %s321 = sand.u32 %s35, 1
        %s322 = smul.addr %s321, 64
        %s323 = scalar_lea.vmem [#allocation4], %s322
        // Predicated region
        $region53: #{tpu_custom_call.1} parent=51 // pred_check
          %p324 = pneg %p48
        $region54: #{tpu_custom_call.1} parent=51 // pred_check_branch
          %326 = sbr.rel (%p324) target = $region56
        $region55: #{tpu_custom_call.1} parent=51 // pred_region
          %327 = dma.done %s320, 1024
        $region56: #{tpu_custom_call.1} parent=51 // pred_fallthru
          _
        // Predicated region
        $region57: #{tpu_custom_call.1} parent=51 // pred_check
          %p328 = pneg %p69
        $region58: #{tpu_custom_call.1} parent=51 // pred_check_branch
          %330 = sbr.rel (%p328) target = $region60
        $region59: #{tpu_custom_call.1} parent=51 // pred_region
          %331 = dma.done [#allocation8], 9216
        $region60: #{tpu_custom_call.1} parent=51 // pred_fallthru
          _
        // Predicated region
        $region61: #{tpu_custom_call.1} parent=51 // pred_check
          %p332 = pneg %p90
        $region62: #{tpu_custom_call.1} parent=51 // pred_check_branch
          %334 = sbr.rel (%p332) target = $region64
        $region63: #{tpu_custom_call.1} parent=51 // pred_region
          %335 = dma.done [#allocation8], 9216
        $region64: #{tpu_custom_call.1} parent=51 // pred_fallthru
          _
        // Predicated region
        $region65: #{tpu_custom_call.1} parent=51 // pred_check
          %p336 = pneg %p195
        $region66: #{tpu_custom_call.1} parent=51 // pred_check_branch
          %338 = sbr.rel (%p336) target = $region68
        $region67: #{tpu_custom_call.1} parent=51 // pred_region
          %339 = dma.done [#allocation11], 2048
        $region68: #{tpu_custom_call.1} parent=51 // pred_fallthru
          _
        %s340 = sand.u32 %s35, 1
        %s341 = scalar_lea.sflag [#allocation5], %s340
        %s342 = sand.u32 %s35, 1
        %s343 = smul.addr %s342, 64
        %s344 = scalar_lea.vmem [#allocation4], %s343
        %p345 = pneg %p48
        %p346 = pneg %p45
        %p347 = pneg %p69
        %p348 = pneg %p66
        %p349 = pneg %p90
        %p350 = pneg %p87
        %p351 = pneg %p111
        %p352 = pneg %p108
        %p353 = pneg %p132
        %p354 = pneg %p129
        %p355 = pneg %p153
        %p356 = pneg %p150
        %p357 = pneg %p174
        %p358 = pneg %p171
        %p359 = pneg %p195
        %p360 = pneg %p192
        %p361 = pneg %p221
        %p362 = pneg %p218
        %s363 = sand.u32 %s208, 1
        %s364 = scalar_lea.sflag [#allocation6], %s363
        %s365 = sand.u32 %s208, 1
        %s366 = smul.addr %s365, 64
        %s367 = scalar_lea.vmem [#allocation12], %s366
        %369 = vst [vmem:[#allocation2] sm:$0xff] 0.0
        %370 = vst [vmem:[#allocation2 + $0x8] sm:$0x3] 0.0
        %s371 = scalar_lea.vmem [#allocation2], 144
        %372 = vst [vmem:[%s371] sm:$0xff] 0.0
        %373 = vst [vmem:[%s371 + $0x8] sm:$0x3] 0.0
        %s374 = scalar_lea.vmem [#allocation2], 16
        %375 = vst [vmem:[%s374] sm:$0x1] 0.0
        %376 = vst [vmem:[%s374 + $0x10] sm:$0x1] 0.0
        %377 = vst [vmem:[%s374 + $0x20] sm:$0x1] 0.0
        %378 = vst [vmem:[%s374 + $0x30] sm:$0x1] 0.0
        %379 = vst [vmem:[%s374 + $0x40] sm:$0x1] 0.0
        %380 = vst [vmem:[%s374 + $0x50] sm:$0x1] 0.0
        %381 = vst [vmem:[%s374 + $0x60] sm:$0x1] 0.0
        %382 = vst [vmem:[%s374 + $0x70] sm:$0x1] 0.0
        %383 = vst [vmem:[%s374 + $0x9] sm:$0x1] 0.0
        %384 = vst [vmem:[%s374 + $0x19] sm:$0x1] 0.0
        %385 = vst [vmem:[%s374 + $0x29] sm:$0x1] 0.0
        %386 = vst [vmem:[%s374 + $0x39] sm:$0x1] 0.0
        %387 = vst [vmem:[%s374 + $0x49] sm:$0x1] 0.0
        %388 = vst [vmem:[%s374 + $0x59] sm:$0x1] 0.0
        %389 = vst [vmem:[%s374 + $0x69] sm:$0x1] 0.0
        %390 = vst [vmem:[%s374 + $0x79] sm:$0x1] 0.0
        %v391 = vld [vmem:[%s323] sm:$0xff]
        %v392 = vld [vmem:[%s323 + $0x8] sm:$0xff]
        %v393 = vld [vmem:[%s323 + $0x10] sm:$0xff]
        %v394 = vld [vmem:[%s323 + $0x18] sm:$0xff]
        %v395 = vld [vmem:[%s323 + $0x20] sm:$0xff]
        %v396 = vld [vmem:[%s323 + $0x28] sm:$0xff]
        %v397 = vld [vmem:[%s323 + $0x30] sm:$0xff]
        %v398 = vld [vmem:[%s323 + $0x38] sm:$0xff]
        %399 = vst [vmem:[%s374 + $0x1] sm:$0xff] %v391
        %400 = vst [vmem:[%s374 + $0x11] sm:$0xff] %v392
        %401 = vst [vmem:[%s374 + $0x21] sm:$0xff] %v393
        %402 = vst [vmem:[%s374 + $0x31] sm:$0xff] %v394
        %403 = vst [vmem:[%s374 + $0x41] sm:$0xff] %v395
        %404 = vst [vmem:[%s374 + $0x51] sm:$0xff] %v396
        %405 = vst [vmem:[%s374 + $0x61] sm:$0xff] %v397
        %406 = vst [vmem:[%s374 + $0x71] sm:$0xff] %v398
        %v407 = vld [vmem:[%s3] sm:$0x1]
        %v408 = vld [vmem:[%s4] sm:$0x1]
        %v409 = vld [vmem:[#allocation2] sm:$0xff]
        %v410 = vld [vmem:[#allocation2 + $0x10] sm:$0xff]
        %v411 = vld [vmem:[#allocation2 + $0x20] sm:$0xff]
        %v412 = vld [vmem:[#allocation2 + $0x30] sm:$0xff]
        %v413 = vld [vmem:[#allocation2 + $0x40] sm:$0xff]
        %v414 = vld [vmem:[#allocation2 + $0x50] sm:$0xff]
        %v415 = vld [vmem:[#allocation2 + $0x60] sm:$0xff]
        %v416 = vld [vmem:[#allocation2 + $0x70] sm:$0xff]
        %v417 = vpack.c.bf16 %v410, %v409
        %v418 = vpack.c.bf16 %v412, %v411
        %v419 = vpack.c.bf16 %v414, %v413
        %v420 = vpack.c.bf16 %v416, %v415
        %v425 = vunpack.c.l.b16 %v417
        %v426 = vunpack.c.h.b16 %v417
        %v427 = vunpack.c.l.b16 %v418
        %v428 = vunpack.c.h.b16 %v418
        %v429 = vunpack.c.l.b16 %v419
        %v430 = vunpack.c.h.b16 %v419
        %v431 = vunpack.c.l.b16 %v420
        %v432 = vunpack.c.h.b16 %v420
        %v433 = vpack.c.b16 %v425, %v425
        %v434 = vpack.c.b16 %v426, %v426
        %v435 = vpack.c.b16 %v427, %v427
        %v436 = vpack.c.b16 %v428, %v428
        %v437 = vpack.c.b16 %v429, %v429
        %v438 = vpack.c.b16 %v430, %v430
        %v439 = vpack.c.b16 %v431, %v431
        %v440 = vpack.c.b16 %v432, %v432
        %449 = vst [vmem:[#allocation3] sm:$0xf] %v433
        %450 = vst [vmem:[#allocation3 + $0x24] sm:$0xf] %v434
        %451 = vst [vmem:[#allocation3 + $0x48] sm:$0xf] %v435
        %452 = vst [vmem:[#allocation3 + $0x6c] sm:$0xf] %v436
        %453 = vst [vmem:[#allocation3 + $0x90] sm:$0xf] %v437
        %454 = vst [vmem:[#allocation3 + $0xb4] sm:$0xf] %v438
        %455 = vst [vmem:[#allocation3 + $0xd8] sm:$0xf] %v439
        %456 = vst [vmem:[#allocation3 + $0xfc] sm:$0xf] %v440
        %v457 = vld [vmem:[#allocation2 + $0x1] sm:$0xff]
        %v458 = vld [vmem:[#allocation2 + $0x11] sm:$0xff]
        %v459 = vld [vmem:[#allocation2 + $0x21] sm:$0xff]
        %v460 = vld [vmem:[#allocation2 + $0x31] sm:$0xff]
        %v461 = vld [vmem:[#allocation2 + $0x41] sm:$0xff]
        %v462 = vld [vmem:[#allocation2 + $0x51] sm:$0xff]
        %v463 = vld [vmem:[#allocation2 + $0x61] sm:$0xff]
        %v464 = vld [vmem:[#allocation2 + $0x71] sm:$0xff]
        %v465 = vpack.c.bf16 %v458, %v457
        %v466 = vpack.c.bf16 %v460, %v459
        %v467 = vpack.c.bf16 %v462, %v461
        %v468 = vpack.c.bf16 %v464, %v463
        %v473 = vunpack.c.l.b16 %v465
        %v474 = vunpack.c.h.b16 %v465
        %v475 = vunpack.c.l.b16 %v466
        %v476 = vunpack.c.h.b16 %v466
        %v477 = vunpack.c.l.b16 %v467
        %v478 = vunpack.c.h.b16 %v467
        %v479 = vunpack.c.l.b16 %v468
        %v480 = vunpack.c.h.b16 %v468
        %v481 = vpack.c.b16 %v473, %v473
        %v482 = vpack.c.b16 %v474, %v474
        %v483 = vpack.c.b16 %v475, %v475
        %v484 = vpack.c.b16 %v476, %v476
        %v485 = vpack.c.b16 %v477, %v477
        %v486 = vpack.c.b16 %v478, %v478
        %v487 = vpack.c.b16 %v479, %v479
        %v488 = vpack.c.b16 %v480, %v480
        %497 = vst [vmem:[#allocation3 + $0x4] sm:$0xf] %v481
        %498 = vst [vmem:[#allocation3 + $0x28] sm:$0xf] %v482
        %499 = vst [vmem:[#allocation3 + $0x4c] sm:$0xf] %v483
        %500 = vst [vmem:[#allocation3 + $0x70] sm:$0xf] %v484
        %501 = vst [vmem:[#allocation3 + $0x94] sm:$0xf] %v485
        %502 = vst [vmem:[#allocation3 + $0xb8] sm:$0xf] %v486
        %503 = vst [vmem:[#allocation3 + $0xdc] sm:$0xf] %v487
        %504 = vst [vmem:[#allocation3 + $0x100] sm:$0xf] %v488
        %v505 = vld [vmem:[#allocation2 + $0x2] sm:$0xff]
        %v506 = vld [vmem:[#allocation2 + $0x12] sm:$0xff]
        %v507 = vld [vmem:[#allocation2 + $0x22] sm:$0xff]
        %v508 = vld [vmem:[#allocation2 + $0x32] sm:$0xff]
        %v509 = vld [vmem:[#allocation2 + $0x42] sm:$0xff]
        %v510 = vld [vmem:[#allocation2 + $0x52] sm:$0xff]
        %v511 = vld [vmem:[#allocation2 + $0x62] sm:$0xff]
        %v512 = vld [vmem:[#allocation2 + $0x72] sm:$0xff]
        %v513 = vpack.c.bf16 %v506, %v505
        %v514 = vpack.c.bf16 %v508, %v507
        %v515 = vpack.c.bf16 %v510, %v509
        %v516 = vpack.c.bf16 %v512, %v511
        %v521 = vunpack.c.l.b16 %v513
        %v522 = vunpack.c.h.b16 %v513
        %v523 = vunpack.c.l.b16 %v514
        %v524 = vunpack.c.h.b16 %v514
        %v525 = vunpack.c.l.b16 %v515
        %v526 = vunpack.c.h.b16 %v515
        %v527 = vunpack.c.l.b16 %v516
        %v528 = vunpack.c.h.b16 %v516
        %v529 = vpack.c.b16 %v521, %v521
        %v530 = vpack.c.b16 %v522, %v522
        %v531 = vpack.c.b16 %v523, %v523
        %v532 = vpack.c.b16 %v524, %v524
        %v533 = vpack.c.b16 %v525, %v525
        %v534 = vpack.c.b16 %v526, %v526
        %v535 = vpack.c.b16 %v527, %v527
        %v536 = vpack.c.b16 %v528, %v528
        %545 = vst [vmem:[#allocation3 + $0x8] sm:$0xf] %v529
        %546 = vst [vmem:[#allocation3 + $0x2c] sm:$0xf] %v530
        %547 = vst [vmem:[#allocation3 + $0x50] sm:$0xf] %v531
        %548 = vst [vmem:[#allocation3 + $0x74] sm:$0xf] %v532
        %549 = vst [vmem:[#allocation3 + $0x98] sm:$0xf] %v533
        %550 = vst [vmem:[#allocation3 + $0xbc] sm:$0xf] %v534
        %551 = vst [vmem:[#allocation3 + $0xe0] sm:$0xf] %v535
        %552 = vst [vmem:[#allocation3 + $0x104] sm:$0xf] %v536
        %v553 = vld [vmem:[%s374] sm:$0xff]
        %v554 = vld [vmem:[%s374 + $0x10] sm:$0xff]
        %v555 = vld [vmem:[%s374 + $0x20] sm:$0xff]
        %v556 = vld [vmem:[%s374 + $0x30] sm:$0xff]
        %v557 = vld [vmem:[%s374 + $0x40] sm:$0xff]
        %v558 = vld [vmem:[%s374 + $0x50] sm:$0xff]
        %v559 = vld [vmem:[%s374 + $0x60] sm:$0xff]
        %v560 = vld [vmem:[%s374 + $0x70] sm:$0xff]
        %v561 = vpack.c.bf16 %v554, %v553
        %v562 = vpack.c.bf16 %v556, %v555
        %v563 = vpack.c.bf16 %v558, %v557
        %v564 = vpack.c.bf16 %v560, %v559
        %v569 = vunpack.c.l.b16 %v561
        %v570 = vunpack.c.h.b16 %v561
        %v571 = vunpack.c.l.b16 %v562
        %v572 = vunpack.c.h.b16 %v562
        %v573 = vunpack.c.l.b16 %v563
        %v574 = vunpack.c.h.b16 %v563
        %v575 = vunpack.c.l.b16 %v564
        %v576 = vunpack.c.h.b16 %v564
        %v577 = vpack.c.b16 %v569, %v569
        %v578 = vpack.c.b16 %v570, %v570
        %v579 = vpack.c.b16 %v571, %v571
        %v580 = vpack.c.b16 %v572, %v572
        %v581 = vpack.c.b16 %v573, %v573
        %v582 = vpack.c.b16 %v574, %v574
        %v583 = vpack.c.b16 %v575, %v575
        %v584 = vpack.c.b16 %v576, %v576
        %593 = vst [vmem:[#allocation3 + $0xc] sm:$0xf] %v577
        %594 = vst [vmem:[#allocation3 + $0x30] sm:$0xf] %v578
        %595 = vst [vmem:[#allocation3 + $0x54] sm:$0xf] %v579
        %596 = vst [vmem:[#allocation3 + $0x78] sm:$0xf] %v580
        %597 = vst [vmem:[#allocation3 + $0x9c] sm:$0xf] %v581
        %598 = vst [vmem:[#allocation3 + $0xc0] sm:$0xf] %v582
        %599 = vst [vmem:[#allocation3 + $0xe4] sm:$0xf] %v583
        %600 = vst [vmem:[#allocation3 + $0x108] sm:$0xf] %v584
        %v601 = vld [vmem:[%s374 + $0x1] sm:$0xff]
        %v602 = vld [vmem:[%s374 + $0x11] sm:$0xff]
        %v603 = vld [vmem:[%s374 + $0x21] sm:$0xff]
        %v604 = vld [vmem:[%s374 + $0x31] sm:$0xff]
        %v605 = vld [vmem:[%s374 + $0x41] sm:$0xff]
        %v606 = vld [vmem:[%s374 + $0x51] sm:$0xff]
        %v607 = vld [vmem:[%s374 + $0x61] sm:$0xff]
        %v608 = vld [vmem:[%s374 + $0x71] sm:$0xff]
        %v609 = vpack.c.bf16 %v602, %v601
        %v610 = vpack.c.bf16 %v604, %v603
        %v611 = vpack.c.bf16 %v606, %v605
        %v612 = vpack.c.bf16 %v608, %v607
        %v617 = vunpack.c.l.b16 %v609
        %v618 = vunpack.c.h.b16 %v609
        %v619 = vunpack.c.l.b16 %v610
        %v620 = vunpack.c.h.b16 %v610
        %v621 = vunpack.c.l.b16 %v611
        %v622 = vunpack.c.h.b16 %v611
        %v623 = vunpack.c.l.b16 %v612
        %v624 = vunpack.c.h.b16 %v612
        %v625 = vpack.c.b16 %v617, %v617
        %v626 = vpack.c.b16 %v618, %v618
        %v627 = vpack.c.b16 %v619, %v619
        %v628 = vpack.c.b16 %v620, %v620
        %v629 = vpack.c.b16 %v621, %v621
        %v630 = vpack.c.b16 %v622, %v622
        %v631 = vpack.c.b16 %v623, %v623
        %v632 = vpack.c.b16 %v624, %v624
        %641 = vst [vmem:[#allocation3 + $0x10] sm:$0xf] %v625
        %642 = vst [vmem:[#allocation3 + $0x34] sm:$0xf] %v626
        %643 = vst [vmem:[#allocation3 + $0x58] sm:$0xf] %v627
        %644 = vst [vmem:[#allocation3 + $0x7c] sm:$0xf] %v628
        %645 = vst [vmem:[#allocation3 + $0xa0] sm:$0xf] %v629
        %646 = vst [vmem:[#allocation3 + $0xc4] sm:$0xf] %v630
        %647 = vst [vmem:[#allocation3 + $0xe8] sm:$0xf] %v631
        %648 = vst [vmem:[#allocation3 + $0x10c] sm:$0xf] %v632
        %v649 = vld [vmem:[%s374 + $0x2] sm:$0xff]
        %v650 = vld [vmem:[%s374 + $0x12] sm:$0xff]
        %v651 = vld [vmem:[%s374 + $0x22] sm:$0xff]
        %v652 = vld [vmem:[%s374 + $0x32] sm:$0xff]
        %v653 = vld [vmem:[%s374 + $0x42] sm:$0xff]
        %v654 = vld [vmem:[%s374 + $0x52] sm:$0xff]
        %v655 = vld [vmem:[%s374 + $0x62] sm:$0xff]
        %v656 = vld [vmem:[%s374 + $0x72] sm:$0xff]
        %v657 = vpack.c.bf16 %v650, %v649
        %v658 = vpack.c.bf16 %v652, %v651
        %v659 = vpack.c.bf16 %v654, %v653
        %v660 = vpack.c.bf16 %v656, %v655
        %v665 = vunpack.c.l.b16 %v657
        %v666 = vunpack.c.h.b16 %v657
        %v667 = vunpack.c.l.b16 %v658
        %v668 = vunpack.c.h.b16 %v658
        %v669 = vunpack.c.l.b16 %v659
        %v670 = vunpack.c.h.b16 %v659
        %v671 = vunpack.c.l.b16 %v660
        %v672 = vunpack.c.h.b16 %v660
        %v673 = vpack.c.b16 %v665, %v665
        %v674 = vpack.c.b16 %v666, %v666
        %v675 = vpack.c.b16 %v667, %v667
        %v676 = vpack.c.b16 %v668, %v668
        %v677 = vpack.c.b16 %v669, %v669
        %v678 = vpack.c.b16 %v670, %v670
        %v679 = vpack.c.b16 %v671, %v671
        %v680 = vpack.c.b16 %v672, %v672
        %689 = vst [vmem:[#allocation3 + $0x14] sm:$0xf] %v673
        %690 = vst [vmem:[#allocation3 + $0x38] sm:$0xf] %v674
        %691 = vst [vmem:[#allocation3 + $0x5c] sm:$0xf] %v675
        %692 = vst [vmem:[#allocation3 + $0x80] sm:$0xf] %v676
        %693 = vst [vmem:[#allocation3 + $0xa4] sm:$0xf] %v677
        %694 = vst [vmem:[#allocation3 + $0xc8] sm:$0xf] %v678
        %695 = vst [vmem:[#allocation3 + $0xec] sm:$0xf] %v679
        %696 = vst [vmem:[#allocation3 + $0x110] sm:$0xf] %v680
        %s697 = scalar_lea.vmem [#allocation2], 32
        %v698 = vld [vmem:[%s697] sm:$0xff]
        %v699 = vld [vmem:[%s697 + $0x10] sm:$0xff]
        %v700 = vld [vmem:[%s697 + $0x20] sm:$0xff]
        %v701 = vld [vmem:[%s697 + $0x30] sm:$0xff]
        %v702 = vld [vmem:[%s697 + $0x40] sm:$0xff]
        %v703 = vld [vmem:[%s697 + $0x50] sm:$0xff]
        %v704 = vld [vmem:[%s697 + $0x60] sm:$0xff]
        %v705 = vld [vmem:[%s697 + $0x70] sm:$0xff]
        %v706 = vpack.c.bf16 %v699, %v698
        %v707 = vpack.c.bf16 %v701, %v700
        %v708 = vpack.c.bf16 %v703, %v702
        %v709 = vpack.c.bf16 %v705, %v704
        %v714 = vunpack.c.l.b16 %v706
        %v715 = vunpack.c.h.b16 %v706
        %v716 = vunpack.c.l.b16 %v707
        %v717 = vunpack.c.h.b16 %v707
        %v718 = vunpack.c.l.b16 %v708
        %v719 = vunpack.c.h.b16 %v708
        %v720 = vunpack.c.l.b16 %v709
        %v721 = vunpack.c.h.b16 %v709
        %v722 = vpack.c.b16 %v714, %v714
        %v723 = vpack.c.b16 %v715, %v715
        %v724 = vpack.c.b16 %v716, %v716
        %v725 = vpack.c.b16 %v717, %v717
        %v726 = vpack.c.b16 %v718, %v718
        %v727 = vpack.c.b16 %v719, %v719
        %v728 = vpack.c.b16 %v720, %v720
        %v729 = vpack.c.b16 %v721, %v721
        %738 = vst [vmem:[#allocation3 + $0x18] sm:$0xf] %v722
        %739 = vst [vmem:[#allocation3 + $0x3c] sm:$0xf] %v723
        %740 = vst [vmem:[#allocation3 + $0x60] sm:$0xf] %v724
        %741 = vst [vmem:[#allocation3 + $0x84] sm:$0xf] %v725
        %742 = vst [vmem:[#allocation3 + $0xa8] sm:$0xf] %v726
        %743 = vst [vmem:[#allocation3 + $0xcc] sm:$0xf] %v727
        %744 = vst [vmem:[#allocation3 + $0xf0] sm:$0xf] %v728
        %745 = vst [vmem:[#allocation3 + $0x114] sm:$0xf] %v729
        %v746 = vld [vmem:[%s697 + $0x1] sm:$0xff]
        %v747 = vld [vmem:[%s697 + $0x11] sm:$0xff]
        %v748 = vld [vmem:[%s697 + $0x21] sm:$0xff]
        %v749 = vld [vmem:[%s697 + $0x31] sm:$0xff]
        %v750 = vld [vmem:[%s697 + $0x41] sm:$0xff]
        %v751 = vld [vmem:[%s697 + $0x51] sm:$0xff]
        %v752 = vld [vmem:[%s697 + $0x61] sm:$0xff]
        %v753 = vld [vmem:[%s697 + $0x71] sm:$0xff]
        %v754 = vpack.c.bf16 %v747, %v746
        %v755 = vpack.c.bf16 %v749, %v748
        %v756 = vpack.c.bf16 %v751, %v750
        %v757 = vpack.c.bf16 %v753, %v752
        %v762 = vunpack.c.l.b16 %v754
        %v763 = vunpack.c.h.b16 %v754
        %v764 = vunpack.c.l.b16 %v755
        %v765 = vunpack.c.h.b16 %v755
        %v766 = vunpack.c.l.b16 %v756
        %v767 = vunpack.c.h.b16 %v756
        %v768 = vunpack.c.l.b16 %v757
        %v769 = vunpack.c.h.b16 %v757
        %v770 = vpack.c.b16 %v762, %v762
        %v771 = vpack.c.b16 %v763, %v763
        %v772 = vpack.c.b16 %v764, %v764
        %v773 = vpack.c.b16 %v765, %v765
        %v774 = vpack.c.b16 %v766, %v766
        %v775 = vpack.c.b16 %v767, %v767
        %v776 = vpack.c.b16 %v768, %v768
        %v777 = vpack.c.b16 %v769, %v769
        %786 = vst [vmem:[#allocation3 + $0x1c] sm:$0xf] %v770
        %787 = vst [vmem:[#allocation3 + $0x40] sm:$0xf] %v771
        %788 = vst [vmem:[#allocation3 + $0x64] sm:$0xf] %v772
        %789 = vst [vmem:[#allocation3 + $0x88] sm:$0xf] %v773
        %790 = vst [vmem:[#allocation3 + $0xac] sm:$0xf] %v774
        %791 = vst [vmem:[#allocation3 + $0xd0] sm:$0xf] %v775
        %792 = vst [vmem:[#allocation3 + $0xf4] sm:$0xf] %v776
        %793 = vst [vmem:[#allocation3 + $0x118] sm:$0xf] %v777
        %v794 = vld [vmem:[%s697 + $0x2] sm:$0xff]
        %v795 = vld [vmem:[%s697 + $0x12] sm:$0xff]
        %v796 = vld [vmem:[%s697 + $0x22] sm:$0xff]
        %v797 = vld [vmem:[%s697 + $0x32] sm:$0xff]
        %v798 = vld [vmem:[%s697 + $0x42] sm:$0xff]
        %v799 = vld [vmem:[%s697 + $0x52] sm:$0xff]
        %v800 = vld [vmem:[%s697 + $0x62] sm:$0xff]
        %v801 = vld [vmem:[%s697 + $0x72] sm:$0xff]
        %v802 = vpack.c.bf16 %v795, %v794
        %v803 = vpack.c.bf16 %v797, %v796
        %v804 = vpack.c.bf16 %v799, %v798
        %v805 = vpack.c.bf16 %v801, %v800
        %v810 = vunpack.c.l.b16 %v802
        %v811 = vunpack.c.h.b16 %v802
        %v812 = vunpack.c.l.b16 %v803
        %v813 = vunpack.c.h.b16 %v803
        %v814 = vunpack.c.l.b16 %v804
        %v815 = vunpack.c.h.b16 %v804
        %v816 = vunpack.c.l.b16 %v805
        %v817 = vunpack.c.h.b16 %v805
        %v818 = vpack.c.b16 %v810, %v810
        %v819 = vpack.c.b16 %v811, %v811
        %v820 = vpack.c.b16 %v812, %v812
        %v821 = vpack.c.b16 %v813, %v813
        %v822 = vpack.c.b16 %v814, %v814
        %v823 = vpack.c.b16 %v815, %v815
        %v824 = vpack.c.b16 %v816, %v816
        %v825 = vpack.c.b16 %v817, %v817
        %834 = vst [vmem:[#allocation3 + $0x20] sm:$0xf] %v818
        %835 = vst [vmem:[#allocation3 + $0x44] sm:$0xf] %v819
        %836 = vst [vmem:[#allocation3 + $0x68] sm:$0xf] %v820
        %837 = vst [vmem:[#allocation3 + $0x8c] sm:$0xf] %v821
        %838 = vst [vmem:[#allocation3 + $0xb0] sm:$0xf] %v822
        %839 = vst [vmem:[#allocation3 + $0xd4] sm:$0xf] %v823
        %840 = vst [vmem:[#allocation3 + $0xf8] sm:$0xf] %v824
        %841 = vst [vmem:[#allocation3 + $0x11c] sm:$0xf] %v825
        %v842 = vld [vmem:[#allocation3] sm:$0xff]
        %v843 = vld [vmem:[#allocation3 + $0x8] sm:$0xff]
        %v844 = vld [vmem:[#allocation3 + $0x10] sm:$0xff]
        %v845 = vld [vmem:[#allocation3 + $0x18] sm:$0xff]
        %v846 = vld [vmem:[#allocation3 + $0x20] sm:$0xf]
        %v847 = vld [vmem:[#allocation3 + $0x24] sm:$0xff]
        %v848 = vld [vmem:[#allocation3 + $0x2c] sm:$0xff]
        %v849 = vld [vmem:[#allocation3 + $0x34] sm:$0xff]
        %v850 = vld [vmem:[#allocation3 + $0x3c] sm:$0xff]
        %v851 = vld [vmem:[#allocation3 + $0x44] sm:$0xf]
        %v852 = vld [vmem:[#allocation3 + $0x48] sm:$0xff]
        %v853 = vld [vmem:[#allocation3 + $0x50] sm:$0xff]
        %v854 = vld [vmem:[#allocation3 + $0x58] sm:$0xff]
        %v855 = vld [vmem:[#allocation3 + $0x60] sm:$0xff]
        %v856 = vld [vmem:[#allocation3 + $0x68] sm:$0xf]
        %v857 = vld [vmem:[#allocation3 + $0x6c] sm:$0xff]
        %v858 = vld [vmem:[#allocation3 + $0x74] sm:$0xff]
        %v859 = vld [vmem:[#allocation3 + $0x7c] sm:$0xff]
        %v860 = vld [vmem:[#allocation3 + $0x84] sm:$0xff]
        %v861 = vld [vmem:[#allocation3 + $0x8c] sm:$0xf]
        %v862 = vld [vmem:[#allocation3 + $0x90] sm:$0xff]
        %v863 = vld [vmem:[#allocation3 + $0x98] sm:$0xff]
        %v864 = vld [vmem:[#allocation3 + $0xa0] sm:$0xff]
        %v865 = vld [vmem:[#allocation3 + $0xa8] sm:$0xff]
        %v866 = vld [vmem:[#allocation3 + $0xb0] sm:$0xf]
        %v867 = vld [vmem:[#allocation3 + $0xb4] sm:$0xff]
        %v868 = vld [vmem:[#allocation3 + $0xbc] sm:$0xff]
        %v869 = vld [vmem:[#allocation3 + $0xc4] sm:$0xff]
        %v870 = vld [vmem:[#allocation3 + $0xcc] sm:$0xff]
        %v871 = vld [vmem:[#allocation3 + $0xd4] sm:$0xf]
        %v872 = vld [vmem:[#allocation3 + $0xd8] sm:$0xff]
        %v873 = vld [vmem:[#allocation3 + $0xe0] sm:$0xff]
        %v874 = vld [vmem:[#allocation3 + $0xe8] sm:$0xff]
        %v875 = vld [vmem:[#allocation3 + $0xf0] sm:$0xff]
        %v876 = vld [vmem:[#allocation3 + $0xf8] sm:$0xf]
        %v877 = vld [vmem:[#allocation3 + $0xfc] sm:$0xff]
        %v878 = vld [vmem:[#allocation3 + $0x104] sm:$0xff]
        %v879 = vld [vmem:[#allocation3 + $0x10c] sm:$0xff]
        %v880 = vld [vmem:[#allocation3 + $0x114] sm:$0xff]
        %v881 = vld [vmem:[#allocation3 + $0x11c] sm:$0xf]
        %v882 = vld [vmem:[#allocation7] sm:$0xf]
        %v883 = vld [vmem:[#allocation7 + $0x4] sm:$0xf]
        %v884 = vld [vmem:[#allocation7 + $0x8] sm:$0xf]
        %v885 = vld [vmem:[#allocation7 + $0xc] sm:$0xf]
        %v886 = vld [vmem:[#allocation7 + $0x10] sm:$0xf]
        %v887 = vld [vmem:[#allocation7 + $0x14] sm:$0xf]
        %v888 = vld [vmem:[#allocation7 + $0x18] sm:$0xf]
        %v889 = vld [vmem:[#allocation7 + $0x1c] sm:$0xf]
        %v890 = vld [vmem:[#allocation7 + $0x20] sm:$0xf]
        %v891 = vld [vmem:[#allocation7 + $0x24] sm:$0xf]
        %v892 = vld [vmem:[#allocation7 + $0x28] sm:$0xf]
        %v893 = vld [vmem:[#allocation7 + $0x2c] sm:$0xf]
        %v894 = vld [vmem:[#allocation7 + $0x30] sm:$0xf]
        %v895 = vld [vmem:[#allocation7 + $0x34] sm:$0xf]
        %v896 = vld [vmem:[#allocation7 + $0x38] sm:$0xf]
        %v897 = vld [vmem:[#allocation7 + $0x3c] sm:$0xf]
        %v898 = vld [vmem:[#allocation7 + $0x40] sm:$0xf]
        %v899 = vld [vmem:[#allocation7 + $0x44] sm:$0xf]
        %v900 = vld [vmem:[#allocation7 + $0x48] sm:$0xf]
        %v901 = vld [vmem:[#allocation7 + $0x4c] sm:$0xf]
        %v902 = vld [vmem:[#allocation7 + $0x50] sm:$0xf]
        %v903 = vld [vmem:[#allocation7 + $0x54] sm:$0xf]
        %v904 = vld [vmem:[#allocation7 + $0x58] sm:$0xf]
        %v905 = vld [vmem:[#allocation7 + $0x5c] sm:$0xf]
        %v906 = vld [vmem:[#allocation7 + $0x60] sm:$0xf]
        %v907 = vld [vmem:[#allocation7 + $0x64] sm:$0xf]
        %v908 = vld [vmem:[#allocation7 + $0x68] sm:$0xf]
        %v909 = vld [vmem:[#allocation7 + $0x6c] sm:$0xf]
        %v910 = vld [vmem:[#allocation7 + $0x70] sm:$0xf]
        %v911 = vld [vmem:[#allocation7 + $0x74] sm:$0xf]
        %v912 = vld [vmem:[#allocation7 + $0x78] sm:$0xf]
        %v913 = vld [vmem:[#allocation7 + $0x7c] sm:$0xf]
        %v914 = vld [vmem:[#allocation7 + $0x80] sm:$0xf]
        %v915 = vld [vmem:[#allocation7 + $0x84] sm:$0xf]
        %v916 = vld [vmem:[#allocation7 + $0x88] sm:$0xf]
        %v917 = vld [vmem:[#allocation7 + $0x8c] sm:$0xf]
        %v918 = vld [vmem:[#allocation7 + $0x90] sm:$0xf]
        %v919 = vld [vmem:[#allocation7 + $0x94] sm:$0xf]
        %v920 = vld [vmem:[#allocation7 + $0x98] sm:$0xf]
        %v921 = vld [vmem:[#allocation7 + $0x9c] sm:$0xf]
        %v922 = vld [vmem:[#allocation7 + $0xa0] sm:$0xf]
        %v923 = vld [vmem:[#allocation7 + $0xa4] sm:$0xf]
        %v924 = vld [vmem:[#allocation7 + $0xa8] sm:$0xf]
        %v925 = vld [vmem:[#allocation7 + $0xac] sm:$0xf]
        %v926 = vld [vmem:[#allocation7 + $0xb0] sm:$0xf]
        %v927 = vld [vmem:[#allocation7 + $0xb4] sm:$0xf]
        %v928 = vld [vmem:[#allocation7 + $0xb8] sm:$0xf]
        %v929 = vld [vmem:[#allocation7 + $0xbc] sm:$0xf]
        %v930 = vld [vmem:[#allocation7 + $0xc0] sm:$0xf]
        %v931 = vld [vmem:[#allocation7 + $0xc4] sm:$0xf]
        %v932 = vld [vmem:[#allocation7 + $0xc8] sm:$0xf]
        %v933 = vld [vmem:[#allocation7 + $0xcc] sm:$0xf]
        %v934 = vld [vmem:[#allocation7 + $0xd0] sm:$0xf]
        %v935 = vld [vmem:[#allocation7 + $0xd4] sm:$0xf]
        %v936 = vld [vmem:[#allocation7 + $0xd8] sm:$0xf]
        %v937 = vld [vmem:[#allocation7 + $0xdc] sm:$0xf]
        %v938 = vld [vmem:[#allocation7 + $0xe0] sm:$0xf]
        %v939 = vld [vmem:[#allocation7 + $0xe4] sm:$0xf]
        %v940 = vld [vmem:[#allocation7 + $0xe8] sm:$0xf]
        %v941 = vld [vmem:[#allocation7 + $0xec] sm:$0xf]
        %v942 = vld [vmem:[#allocation7 + $0xf0] sm:$0xf]
        %v943 = vld [vmem:[#allocation7 + $0xf4] sm:$0xf]
        %v944 = vld [vmem:[#allocation7 + $0xf8] sm:$0xf]
        %v945 = vld [vmem:[#allocation7 + $0xfc] sm:$0xf]
        %v946 = vld [vmem:[#allocation7 + $0x100] sm:$0xf]
        %v947 = vld [vmem:[#allocation7 + $0x104] sm:$0xf]
        %v948 = vld [vmem:[#allocation7 + $0x108] sm:$0xf]
        %v949 = vld [vmem:[#allocation7 + $0x10c] sm:$0xf]
        %v950 = vld [vmem:[#allocation7 + $0x110] sm:$0xf]
        %v951 = vld [vmem:[#allocation7 + $0x114] sm:$0xf]
        %v952 = vld [vmem:[#allocation7 + $0x118] sm:$0xf]
        %v953 = vld [vmem:[#allocation7 + $0x11c] sm:$0xf]
        %v954 = vld [vmem:[#allocation7 + $0x120] sm:$0xf]
        %v955 = vld [vmem:[#allocation7 + $0x124] sm:$0xf]
        %v956 = vld [vmem:[#allocation7 + $0x128] sm:$0xf]
        %v957 = vld [vmem:[#allocation7 + $0x12c] sm:$0xf]
        %v958 = vld [vmem:[#allocation7 + $0x130] sm:$0xf]
        %v959 = vld [vmem:[#allocation7 + $0x134] sm:$0xf]
        %v960 = vld [vmem:[#allocation7 + $0x138] sm:$0xf]
        %v961 = vld [vmem:[#allocation7 + $0x13c] sm:$0xf]
        %v962 = vld [vmem:[#allocation7 + $0x140] sm:$0xf]
        %v963 = vld [vmem:[#allocation7 + $0x144] sm:$0xf]
        %v964 = vld [vmem:[#allocation7 + $0x148] sm:$0xf]
        %v965 = vld [vmem:[#allocation7 + $0x14c] sm:$0xf]
        %v966 = vld [vmem:[#allocation7 + $0x150] sm:$0xf]
        %v967 = vld [vmem:[#allocation7 + $0x154] sm:$0xf]
        %v968 = vld [vmem:[#allocation7 + $0x158] sm:$0xf]
        %v969 = vld [vmem:[#allocation7 + $0x15c] sm:$0xf]
        %v970 = vld [vmem:[#allocation7 + $0x160] sm:$0xf]
        %v971 = vld [vmem:[#allocation7 + $0x164] sm:$0xf]
        %v972 = vld [vmem:[#allocation7 + $0x168] sm:$0xf]
        %v973 = vld [vmem:[#allocation7 + $0x16c] sm:$0xf]
        %v974 = vld [vmem:[#allocation7 + $0x170] sm:$0xf]
        %v975 = vld [vmem:[#allocation7 + $0x174] sm:$0xf]
        %v976 = vld [vmem:[#allocation7 + $0x178] sm:$0xf]
        %v977 = vld [vmem:[#allocation7 + $0x17c] sm:$0xf]
        %v978 = vld [vmem:[#allocation7 + $0x180] sm:$0xf]
        %v979 = vld [vmem:[#allocation7 + $0x184] sm:$0xf]
        %v980 = vld [vmem:[#allocation7 + $0x188] sm:$0xf]
        %v981 = vld [vmem:[#allocation7 + $0x18c] sm:$0xf]
        %v982 = vld [vmem:[#allocation7 + $0x190] sm:$0xf]
        %v983 = vld [vmem:[#allocation7 + $0x194] sm:$0xf]
        %v984 = vld [vmem:[#allocation7 + $0x198] sm:$0xf]
        %v985 = vld [vmem:[#allocation7 + $0x19c] sm:$0xf]
        %v986 = vld [vmem:[#allocation7 + $0x1a0] sm:$0xf]
        %v987 = vld [vmem:[#allocation7 + $0x1a4] sm:$0xf]
        %v988 = vld [vmem:[#allocation7 + $0x1a8] sm:$0xf]
        %v989 = vld [vmem:[#allocation7 + $0x1ac] sm:$0xf]
        %v990 = vld [vmem:[#allocation7 + $0x1b0] sm:$0xf]
        %v991 = vld [vmem:[#allocation7 + $0x1b4] sm:$0xf]
        %v992 = vld [vmem:[#allocation7 + $0x1b8] sm:$0xf]
        %v993 = vld [vmem:[#allocation7 + $0x1bc] sm:$0xf]
        %v994 = vld [vmem:[#allocation7 + $0x1c0] sm:$0xf]
        %v995 = vld [vmem:[#allocation7 + $0x1c4] sm:$0xf]
        %v996 = vld [vmem:[#allocation7 + $0x1c8] sm:$0xf]
        %v997 = vld [vmem:[#allocation7 + $0x1cc] sm:$0xf]
        %v998 = vld [vmem:[#allocation7 + $0x1d0] sm:$0xf]
        %v999 = vld [vmem:[#allocation7 + $0x1d4] sm:$0xf]
        %v1000 = vld [vmem:[#allocation7 + $0x1d8] sm:$0xf]
        %v1001 = vld [vmem:[#allocation7 + $0x1dc] sm:$0xf]
        %v1002 = vld [vmem:[#allocation7 + $0x1e0] sm:$0xf]
        %v1003 = vld [vmem:[#allocation7 + $0x1e4] sm:$0xf]
        %v1004 = vld [vmem:[#allocation7 + $0x1e8] sm:$0xf]
        %v1005 = vld [vmem:[#allocation7 + $0x1ec] sm:$0xf]
        %v1006 = vld [vmem:[#allocation7 + $0x1f0] sm:$0xf]
        %v1007 = vld [vmem:[#allocation7 + $0x1f4] sm:$0xf]
        %v1008 = vld [vmem:[#allocation7 + $0x1f8] sm:$0xf]
        %v1009 = vld [vmem:[#allocation7 + $0x1fc] sm:$0xf]
        %v1010 = vld [vmem:[#allocation7 + $0x200] sm:$0xf]
        %v1011 = vld [vmem:[#allocation7 + $0x204] sm:$0xf]
        %v1012 = vld [vmem:[#allocation7 + $0x208] sm:$0xf]
        %v1013 = vld [vmem:[#allocation7 + $0x20c] sm:$0xf]
        %v1014 = vld [vmem:[#allocation7 + $0x210] sm:$0xf]
        %v1015 = vld [vmem:[#allocation7 + $0x214] sm:$0xf]
        %v1016 = vld [vmem:[#allocation7 + $0x218] sm:$0xf]
        %v1017 = vld [vmem:[#allocation7 + $0x21c] sm:$0xf]
        %v1018 = vld [vmem:[#allocation7 + $0x220] sm:$0xf]
        %v1019 = vld [vmem:[#allocation7 + $0x224] sm:$0xf]
        %v1020 = vld [vmem:[#allocation7 + $0x228] sm:$0xf]
        %v1021 = vld [vmem:[#allocation7 + $0x22c] sm:$0xf]
        %v1022 = vld [vmem:[#allocation7 + $0x230] sm:$0xf]
        %v1023 = vld [vmem:[#allocation7 + $0x234] sm:$0xf]
        %v1024 = vld [vmem:[#allocation7 + $0x238] sm:$0xf]
        %v1025 = vld [vmem:[#allocation7 + $0x23c] sm:$0xf]
        %v1066 = vunpack.c.l.b16 %v842
        %v1067 = vunpack.c.h.b16 %v842
        %v1068 = vunpack.c.l.b16 %v843
        %v1069 = vunpack.c.h.b16 %v843
        %v1070 = vunpack.c.l.b16 %v844
        %v1071 = vunpack.c.h.b16 %v844
        %v1072 = vunpack.c.l.b16 %v845
        %v1073 = vunpack.c.h.b16 %v845
        %v1074 = vunpack.c.l.b16 %v846
        %v1075 = vunpack.c.l.b16 %v847
        %v1076 = vunpack.c.h.b16 %v847
        %v1077 = vunpack.c.l.b16 %v848
        %v1078 = vunpack.c.h.b16 %v848
        %v1079 = vunpack.c.l.b16 %v849
        %v1080 = vunpack.c.h.b16 %v849
        %v1081 = vunpack.c.l.b16 %v850
        %v1082 = vunpack.c.h.b16 %v850
        %v1083 = vunpack.c.l.b16 %v851
        %v1084 = vunpack.c.l.b16 %v852
        %v1085 = vunpack.c.h.b16 %v852
        %v1086 = vunpack.c.l.b16 %v853
        %v1087 = vunpack.c.h.b16 %v853
        %v1088 = vunpack.c.l.b16 %v854
        %v1089 = vunpack.c.h.b16 %v854
        %v1090 = vunpack.c.l.b16 %v855
        %v1091 = vunpack.c.h.b16 %v855
        %v1092 = vunpack.c.l.b16 %v856
        %v1093 = vunpack.c.l.b16 %v857
        %v1094 = vunpack.c.h.b16 %v857
        %v1095 = vunpack.c.l.b16 %v858
        %v1096 = vunpack.c.h.b16 %v858
        %v1097 = vunpack.c.l.b16 %v859
        %v1098 = vunpack.c.h.b16 %v859
        %v1099 = vunpack.c.l.b16 %v860
        %v1100 = vunpack.c.h.b16 %v860
        %v1101 = vunpack.c.l.b16 %v861
        %v1102 = vunpack.c.l.b16 %v862
        %v1103 = vunpack.c.h.b16 %v862
        %v1104 = vunpack.c.l.b16 %v863
        %v1105 = vunpack.c.h.b16 %v863
        %v1106 = vunpack.c.l.b16 %v864
        %v1107 = vunpack.c.h.b16 %v864
        %v1108 = vunpack.c.l.b16 %v865
        %v1109 = vunpack.c.h.b16 %v865
        %v1110 = vunpack.c.l.b16 %v866
        %v1111 = vunpack.c.l.b16 %v867
        %v1112 = vunpack.c.h.b16 %v867
        %v1113 = vunpack.c.l.b16 %v868
        %v1114 = vunpack.c.h.b16 %v868
        %v1115 = vunpack.c.l.b16 %v869
        %v1116 = vunpack.c.h.b16 %v869
        %v1117 = vunpack.c.l.b16 %v870
        %v1118 = vunpack.c.h.b16 %v870
        %v1119 = vunpack.c.l.b16 %v871
        %v1120 = vunpack.c.l.b16 %v872
        %v1121 = vunpack.c.h.b16 %v872
        %v1122 = vunpack.c.l.b16 %v873
        %v1123 = vunpack.c.h.b16 %v873
        %v1124 = vunpack.c.l.b16 %v874
        %v1125 = vunpack.c.h.b16 %v874
        %v1126 = vunpack.c.l.b16 %v875
        %v1127 = vunpack.c.h.b16 %v875
        %v1128 = vunpack.c.l.b16 %v876
        %v1129 = vunpack.c.l.b16 %v877
        %v1130 = vunpack.c.h.b16 %v877
        %v1131 = vunpack.c.l.b16 %v878
        %v1132 = vunpack.c.h.b16 %v878
        %v1133 = vunpack.c.l.b16 %v879
        %v1134 = vunpack.c.h.b16 %v879
        %v1135 = vunpack.c.l.b16 %v880
        %v1136 = vunpack.c.h.b16 %v880
        %v1137 = vunpack.c.l.b16 %v881
        %v1138 = vpack.c.b16 %v1075, %v1066
        %v1139 = vpack.c.b16 %v1076, %v1067
        %v1140 = vpack.c.b16 %v1077, %v1068
        %v1141 = vpack.c.b16 %v1078, %v1069
        %v1142 = vpack.c.b16 %v1079, %v1070
        %v1143 = vpack.c.b16 %v1080, %v1071
        %v1144 = vpack.c.b16 %v1081, %v1072
        %v1145 = vpack.c.b16 %v1082, %v1073
        %v1146 = vpack.c.b16 %v1083, %v1074
        %v1147 = vpack.c.b16 %v1093, %v1084
        %v1148 = vpack.c.b16 %v1094, %v1085
        %v1149 = vpack.c.b16 %v1095, %v1086
        %v1150 = vpack.c.b16 %v1096, %v1087
        %v1151 = vpack.c.b16 %v1097, %v1088
        %v1152 = vpack.c.b16 %v1098, %v1089
        %v1153 = vpack.c.b16 %v1099, %v1090
        %v1154 = vpack.c.b16 %v1100, %v1091
        %v1155 = vpack.c.b16 %v1101, %v1092
        %v1156 = vpack.c.b16 %v1111, %v1102
        %v1157 = vpack.c.b16 %v1112, %v1103
        %v1158 = vpack.c.b16 %v1113, %v1104
        %v1159 = vpack.c.b16 %v1114, %v1105
        %v1160 = vpack.c.b16 %v1115, %v1106
        %v1161 = vpack.c.b16 %v1116, %v1107
        %v1162 = vpack.c.b16 %v1117, %v1108
        %v1163 = vpack.c.b16 %v1118, %v1109
        %v1164 = vpack.c.b16 %v1119, %v1110
        %v1165 = vpack.c.b16 %v1129, %v1120
        %v1166 = vpack.c.b16 %v1130, %v1121
        %v1167 = vpack.c.b16 %v1131, %v1122
        %v1168 = vpack.c.b16 %v1132, %v1123
        %v1169 = vpack.c.b16 %v1133, %v1124
        %v1170 = vpack.c.b16 %v1134, %v1125
        %v1171 = vpack.c.b16 %v1135, %v1126
        %v1172 = vpack.c.b16 %v1136, %v1127
        %v1173 = vpack.c.b16 %v1137, %v1128
        %v1354 = vunpack.c.l.b16 %v882
        %v1355 = vunpack.c.l.b16 %v883
        %v1356 = vunpack.c.l.b16 %v884
        %v1357 = vunpack.c.l.b16 %v885
        %v1358 = vunpack.c.l.b16 %v886
        %v1359 = vunpack.c.l.b16 %v887
        %v1360 = vunpack.c.l.b16 %v888
        %v1361 = vunpack.c.l.b16 %v889
        %v1362 = vunpack.c.l.b16 %v890
        %v1363 = vunpack.c.l.b16 %v891
        %v1364 = vunpack.c.l.b16 %v892
        %v1365 = vunpack.c.l.b16 %v893
        %v1366 = vunpack.c.l.b16 %v894
        %v1367 = vunpack.c.l.b16 %v895
        %v1368 = vunpack.c.l.b16 %v896
        %v1369 = vunpack.c.l.b16 %v897
        %v1370 = vunpack.c.l.b16 %v898
        %v1371 = vunpack.c.l.b16 %v899
        %v1372 = vunpack.c.l.b16 %v900
        %v1373 = vunpack.c.l.b16 %v901
        %v1374 = vunpack.c.l.b16 %v902
        %v1375 = vunpack.c.l.b16 %v903
        %v1376 = vunpack.c.l.b16 %v904
        %v1377 = vunpack.c.l.b16 %v905
        %v1378 = vunpack.c.l.b16 %v906
        %v1379 = vunpack.c.l.b16 %v907
        %v1380 = vunpack.c.l.b16 %v908
        %v1381 = vunpack.c.l.b16 %v909
        %v1382 = vunpack.c.l.b16 %v910
        %v1383 = vunpack.c.l.b16 %v911
        %v1384 = vunpack.c.l.b16 %v912
        %v1385 = vunpack.c.l.b16 %v913
        %v1386 = vunpack.c.l.b16 %v914
        %v1387 = vunpack.c.l.b16 %v915
        %v1388 = vunpack.c.l.b16 %v916
        %v1389 = vunpack.c.l.b16 %v917
        %v1390 = vunpack.c.l.b16 %v918
        %v1391 = vunpack.c.l.b16 %v919
        %v1392 = vunpack.c.l.b16 %v920
        %v1393 = vunpack.c.l.b16 %v921
        %v1394 = vunpack.c.l.b16 %v922
        %v1395 = vunpack.c.l.b16 %v923
        %v1396 = vunpack.c.l.b16 %v924
        %v1397 = vunpack.c.l.b16 %v925
        %v1398 = vunpack.c.l.b16 %v926
        %v1399 = vunpack.c.l.b16 %v927
        %v1400 = vunpack.c.l.b16 %v928
        %v1401 = vunpack.c.l.b16 %v929
        %v1402 = vunpack.c.l.b16 %v930
        %v1403 = vunpack.c.l.b16 %v931
        %v1404 = vunpack.c.l.b16 %v932
        %v1405 = vunpack.c.l.b16 %v933
        %v1406 = vunpack.c.l.b16 %v934
        %v1407 = vunpack.c.l.b16 %v935
        %v1408 = vunpack.c.l.b16 %v936
        %v1409 = vunpack.c.l.b16 %v937
        %v1410 = vunpack.c.l.b16 %v938
        %v1411 = vunpack.c.l.b16 %v939
        %v1412 = vunpack.c.l.b16 %v940
        %v1413 = vunpack.c.l.b16 %v941
        %v1414 = vunpack.c.l.b16 %v942
        %v1415 = vunpack.c.l.b16 %v943
        %v1416 = vunpack.c.l.b16 %v944
        %v1417 = vunpack.c.l.b16 %v945
        %v1418 = vunpack.c.l.b16 %v946
        %v1419 = vunpack.c.l.b16 %v947
        %v1420 = vunpack.c.l.b16 %v948
        %v1421 = vunpack.c.l.b16 %v949
        %v1422 = vunpack.c.l.b16 %v950
        %v1423 = vunpack.c.l.b16 %v951
        %v1424 = vunpack.c.l.b16 %v952
        %v1425 = vunpack.c.l.b16 %v953
        %v1426 = vunpack.c.l.b16 %v954
        %v1427 = vunpack.c.l.b16 %v955
        %v1428 = vunpack.c.l.b16 %v956
        %v1429 = vunpack.c.l.b16 %v957
        %v1430 = vunpack.c.l.b16 %v958
        %v1431 = vunpack.c.l.b16 %v959
        %v1432 = vunpack.c.l.b16 %v960
        %v1433 = vunpack.c.l.b16 %v961
        %v1434 = vunpack.c.l.b16 %v962
        %v1435 = vunpack.c.l.b16 %v963
        %v1436 = vunpack.c.l.b16 %v964
        %v1437 = vunpack.c.l.b16 %v965
        %v1438 = vunpack.c.l.b16 %v966
        %v1439 = vunpack.c.l.b16 %v967
        %v1440 = vunpack.c.l.b16 %v968
        %v1441 = vunpack.c.l.b16 %v969
        %v1442 = vunpack.c.l.b16 %v970
        %v1443 = vunpack.c.l.b16 %v971
        %v1444 = vunpack.c.l.b16 %v972
        %v1445 = vunpack.c.l.b16 %v973
        %v1446 = vunpack.c.l.b16 %v974
        %v1447 = vunpack.c.l.b16 %v975
        %v1448 = vunpack.c.l.b16 %v976
        %v1449 = vunpack.c.l.b16 %v977
        %v1450 = vunpack.c.l.b16 %v978
        %v1451 = vunpack.c.l.b16 %v979
        %v1452 = vunpack.c.l.b16 %v980
        %v1453 = vunpack.c.l.b16 %v981
        %v1454 = vunpack.c.l.b16 %v982
        %v1455 = vunpack.c.l.b16 %v983
        %v1456 = vunpack.c.l.b16 %v984
        %v1457 = vunpack.c.l.b16 %v985
        %v1458 = vunpack.c.l.b16 %v986
        %v1459 = vunpack.c.l.b16 %v987
        %v1460 = vunpack.c.l.b16 %v988
        %v1461 = vunpack.c.l.b16 %v989
        %v1462 = vunpack.c.l.b16 %v990
        %v1463 = vunpack.c.l.b16 %v991
        %v1464 = vunpack.c.l.b16 %v992
        %v1465 = vunpack.c.l.b16 %v993
        %v1466 = vunpack.c.l.b16 %v994
        %v1467 = vunpack.c.l.b16 %v995
        %v1468 = vunpack.c.l.b16 %v996
        %v1469 = vunpack.c.l.b16 %v997
        %v1470 = vunpack.c.l.b16 %v998
        %v1471 = vunpack.c.l.b16 %v999
        %v1472 = vunpack.c.l.b16 %v1000
        %v1473 = vunpack.c.l.b16 %v1001
        %v1474 = vunpack.c.l.b16 %v1002
        %v1475 = vunpack.c.l.b16 %v1003
        %v1476 = vunpack.c.l.b16 %v1004
        %v1477 = vunpack.c.l.b16 %v1005
        %v1478 = vunpack.c.l.b16 %v1006
        %v1479 = vunpack.c.l.b16 %v1007
        %v1480 = vunpack.c.l.b16 %v1008
        %v1481 = vunpack.c.l.b16 %v1009
        %v1482 = vunpack.c.l.b16 %v1010
        %v1483 = vunpack.c.l.b16 %v1011
        %v1484 = vunpack.c.l.b16 %v1012
        %v1485 = vunpack.c.l.b16 %v1013
        %v1486 = vunpack.c.l.b16 %v1014
        %v1487 = vunpack.c.l.b16 %v1015
        %v1488 = vunpack.c.l.b16 %v1016
        %v1489 = vunpack.c.l.b16 %v1017
        %v1490 = vunpack.c.l.b16 %v1018
        %v1491 = vunpack.c.l.b16 %v1019
        %v1492 = vunpack.c.l.b16 %v1020
        %v1493 = vunpack.c.l.b16 %v1021
        %v1494 = vunpack.c.l.b16 %v1022
        %v1495 = vunpack.c.l.b16 %v1023
        %v1496 = vunpack.c.l.b16 %v1024
        %v1497 = vunpack.c.l.b16 %v1025
        %v1498 = vpack.c.b16 %v1355, %v1354
        %v1499 = vpack.c.b16 %v1357, %v1356
        %v1500 = vpack.c.b16 %v1359, %v1358
        %v1501 = vpack.c.b16 %v1361, %v1360
        %v1502 = vpack.c.b16 %v1363, %v1362
        %v1503 = vpack.c.b16 %v1365, %v1364
        %v1504 = vpack.c.b16 %v1367, %v1366
        %v1505 = vpack.c.b16 %v1369, %v1368
        %v1506 = vpack.c.b16 %v1371, %v1370
        %v1507 = vpack.c.b16 %v1373, %v1372
        %v1508 = vpack.c.b16 %v1375, %v1374
        %v1509 = vpack.c.b16 %v1377, %v1376
        %v1510 = vpack.c.b16 %v1379, %v1378
        %v1511 = vpack.c.b16 %v1381, %v1380
        %v1512 = vpack.c.b16 %v1383, %v1382
        %v1513 = vpack.c.b16 %v1385, %v1384
        %v1514 = vpack.c.b16 %v1387, %v1386
        %v1515 = vpack.c.b16 %v1389, %v1388
        %v1516 = vpack.c.b16 %v1391, %v1390
        %v1517 = vpack.c.b16 %v1393, %v1392
        %v1518 = vpack.c.b16 %v1395, %v1394
        %v1519 = vpack.c.b16 %v1397, %v1396
        %v1520 = vpack.c.b16 %v1399, %v1398
        %v1521 = vpack.c.b16 %v1401, %v1400
        %v1522 = vpack.c.b16 %v1403, %v1402
        %v1523 = vpack.c.b16 %v1405, %v1404
        %v1524 = vpack.c.b16 %v1407, %v1406
        %v1525 = vpack.c.b16 %v1409, %v1408
        %v1526 = vpack.c.b16 %v1411, %v1410
        %v1527 = vpack.c.b16 %v1413, %v1412
        %v1528 = vpack.c.b16 %v1415, %v1414
        %v1529 = vpack.c.b16 %v1417, %v1416
        %v1530 = vpack.c.b16 %v1419, %v1418
        %v1531 = vpack.c.b16 %v1421, %v1420
        %v1532 = vpack.c.b16 %v1423, %v1422
        %v1533 = vpack.c.b16 %v1425, %v1424
        %v1534 = vpack.c.b16 %v1427, %v1426
        %v1535 = vpack.c.b16 %v1429, %v1428
        %v1536 = vpack.c.b16 %v1431, %v1430
        %v1537 = vpack.c.b16 %v1433, %v1432
        %v1538 = vpack.c.b16 %v1435, %v1434
        %v1539 = vpack.c.b16 %v1437, %v1436
        %v1540 = vpack.c.b16 %v1439, %v1438
        %v1541 = vpack.c.b16 %v1441, %v1440
        %v1542 = vpack.c.b16 %v1443, %v1442
        %v1543 = vpack.c.b16 %v1445, %v1444
        %v1544 = vpack.c.b16 %v1447, %v1446
        %v1545 = vpack.c.b16 %v1449, %v1448
        %v1546 = vpack.c.b16 %v1451, %v1450
        %v1547 = vpack.c.b16 %v1453, %v1452
        %v1548 = vpack.c.b16 %v1455, %v1454
        %v1549 = vpack.c.b16 %v1457, %v1456
        %v1550 = vpack.c.b16 %v1459, %v1458
        %v1551 = vpack.c.b16 %v1461, %v1460
        %v1552 = vpack.c.b16 %v1463, %v1462
        %v1553 = vpack.c.b16 %v1465, %v1464
        %v1554 = vpack.c.b16 %v1467, %v1466
        %v1555 = vpack.c.b16 %v1469, %v1468
        %v1556 = vpack.c.b16 %v1471, %v1470
        %v1557 = vpack.c.b16 %v1473, %v1472
        %v1558 = vpack.c.b16 %v1475, %v1474
        %v1559 = vpack.c.b16 %v1477, %v1476
        %v1560 = vpack.c.b16 %v1479, %v1478
        %v1561 = vpack.c.b16 %v1481, %v1480
        %v1562 = vpack.c.b16 %v1483, %v1482
        %v1563 = vpack.c.b16 %v1485, %v1484
        %v1564 = vpack.c.b16 %v1487, %v1486
        %v1565 = vpack.c.b16 %v1489, %v1488
        %v1566 = vpack.c.b16 %v1491, %v1490
        %v1567 = vpack.c.b16 %v1493, %v1492
        %v1568 = vpack.c.b16 %v1495, %v1494
        %v1569 = vpack.c.b16 %v1497, %v1496
        %1642 = vmatprep.subr.bf16.mxu0 0
        %1643 = vmatpush1.bf16.msra.mxu0 %v1505
        %1644 = vmatprep.subr.bf16.mxu0 0
        %1645 = vmatpush1.bf16.msra.mxu0 %v1504
        %1646 = vmatprep.subr.bf16.mxu0 0
        %1647 = vmatpush1.bf16.msra.mxu0 %v1503
        %1648 = vmatprep.subr.bf16.mxu0 0
        %1649 = vmatpush1.bf16.msra.mxu0 %v1502
        %1650 = vmatprep.subr.bf16.mxu0 0
        %1651 = vmatpush1.bf16.msra.mxu0 %v1501
        %1652 = vmatprep.subr.bf16.mxu0 0
        %1653 = vmatpush1.bf16.msra.mxu0 %v1500
        %1654 = vmatprep.subr.bf16.mxu0 0
        %1655 = vmatpush1.bf16.msra.mxu0 %v1499
        %1656 = vmatprep.subr.bf16.mxu0 0
        %1657 = vmatpush1.bf16.msra.mxu0 %v1498
        %1658 = vmatprep.subr.bf16.mxu0 0
        %1659 = vmatpush2.bf16.msra.mxu0 %v1513
        %1660 = vmatprep.subr.bf16.mxu0 0
        %1661 = vmatpush2.bf16.msra.mxu0 %v1512
        %1662 = vmatprep.subr.bf16.mxu0 0
        %1663 = vmatpush2.bf16.msra.mxu0 %v1511
        %1664 = vmatprep.subr.bf16.mxu0 0
        %1665 = vmatpush2.bf16.msra.mxu0 %v1510
        %1666 = vmatprep.subr.bf16.mxu0 0
        %1667 = vmatpush2.bf16.msra.mxu0 %v1509
        %1668 = vmatprep.subr.bf16.mxu0 0
        %1669 = vmatpush2.bf16.msra.mxu0 %v1508
        %1670 = vmatprep.subr.bf16.mxu0 0
        %1671 = vmatpush2.bf16.msra.mxu0 %v1507
        %1672 = vmatprep.subr.bf16.mxu0 0
        %1673 = vmatpush2.bf16.msra.mxu0 %v1506
        %1674 = vmatprep.mubr.bf16.mxu0 %v1139
        %1675 = vmatmul.mubr.bf16.gmra.mxu0 %v1138
        %v1676 = vpop.f32.mrf.mxu0
        %v1677 = vadd.f32 0.0, %v1676
        %v1678 = vpop.f32.mrf.mxu0
        %v1679 = vpop.f32.mrf.mxu0
        %v1680 = vadd.f32 0.0, %v1679
        %v1681 = vpop.f32.mrf.mxu0
        %1682 = vmatprep.mubr.bf16.mxu0 %v1148
        %1683 = vmatmul.mubr.bf16.gmra.mxu0 %v1147
        %v1684 = vpop.f32.mrf.mxu0
        %v1685 = vadd.f32 0.0, %v1684
        %v1686 = vpop.f32.mrf.mxu0
        %v1687 = vpop.f32.mrf.mxu0
        %v1688 = vadd.f32 0.0, %v1687
        %v1689 = vpop.f32.mrf.mxu0
        %1690 = vmatprep.mubr.bf16.mxu0 %v1157
        %1691 = vmatmul.mubr.bf16.gmra.mxu0 %v1156
        %v1692 = vpop.f32.mrf.mxu0
        %v1693 = vadd.f32 0.0, %v1692
        %v1694 = vpop.f32.mrf.mxu0
        %v1695 = vpop.f32.mrf.mxu0
        %v1696 = vadd.f32 0.0, %v1695
        %v1697 = vpop.f32.mrf.mxu0
        %1698 = vmatprep.mubr.bf16.mxu0 %v1166
        %1699 = vmatmul.mubr.bf16.gmra.mxu0 %v1165
        %v1700 = vpop.f32.mrf.mxu0
        %v1701 = vadd.f32 0.0, %v1700
        %v1702 = vpop.f32.mrf.mxu0
        %v1703 = vpop.f32.mrf.mxu0
        %v1704 = vadd.f32 0.0, %v1703
        %v1705 = vpop.f32.mrf.mxu0
        %1706 = vdwg.mxu0
        %1707 = vmatprep.subr.bf16.mxu0 0
        %1708 = vmatpush1.bf16.msra.mxu0 %v1521
        %1709 = vmatprep.subr.bf16.mxu0 0
        %1710 = vmatpush1.bf16.msra.mxu0 %v1520
        %1711 = vmatprep.subr.bf16.mxu0 0
        %1712 = vmatpush1.bf16.msra.mxu0 %v1519
        %1713 = vmatprep.subr.bf16.mxu0 0
        %1714 = vmatpush1.bf16.msra.mxu0 %v1518
        %1715 = vmatprep.subr.bf16.mxu0 0
        %1716 = vmatpush1.bf16.msra.mxu0 %v1517
        %1717 = vmatprep.subr.bf16.mxu0 0
        %1718 = vmatpush1.bf16.msra.mxu0 %v1516
        %1719 = vmatprep.subr.bf16.mxu0 0
        %1720 = vmatpush1.bf16.msra.mxu0 %v1515
        %1721 = vmatprep.subr.bf16.mxu0 0
        %1722 = vmatpush1.bf16.msra.mxu0 %v1514
        %1723 = vmatprep.subr.bf16.mxu0 0
        %1724 = vmatpush2.bf16.msra.mxu0 %v1529
        %1725 = vmatprep.subr.bf16.mxu0 0
        %1726 = vmatpush2.bf16.msra.mxu0 %v1528
        %1727 = vmatprep.subr.bf16.mxu0 0
        %1728 = vmatpush2.bf16.msra.mxu0 %v1527
        %1729 = vmatprep.subr.bf16.mxu0 0
        %1730 = vmatpush2.bf16.msra.mxu0 %v1526
        %1731 = vmatprep.subr.bf16.mxu0 0
        %1732 = vmatpush2.bf16.msra.mxu0 %v1525
        %1733 = vmatprep.subr.bf16.mxu0 0
        %1734 = vmatpush2.bf16.msra.mxu0 %v1524
        %1735 = vmatprep.subr.bf16.mxu0 0
        %1736 = vmatpush2.bf16.msra.mxu0 %v1523
        %1737 = vmatprep.subr.bf16.mxu0 0
        %1738 = vmatpush2.bf16.msra.mxu0 %v1522
        %1739 = vmatprep.mubr.bf16.mxu0 %v1141
        %1740 = vmatmul.mubr.bf16.gmra.mxu0 %v1140
        %v1741 = vpop.f32.mrf.mxu0
        %v1742 = vadd.f32 %v1677, %v1741
        %v1743 = vpop.f32.mrf.mxu0
        %v1744 = vpop.f32.mrf.mxu0
        %v1745 = vadd.f32 %v1680, %v1744
        %v1746 = vpop.f32.mrf.mxu0
        %1747 = vmatprep.mubr.bf16.mxu0 %v1150
        %1748 = vmatmul.mubr.bf16.gmra.mxu0 %v1149
        %v1749 = vpop.f32.mrf.mxu0
        %v1750 = vadd.f32 %v1685, %v1749
        %v1751 = vpop.f32.mrf.mxu0
        %v1752 = vpop.f32.mrf.mxu0
        %v1753 = vadd.f32 %v1688, %v1752
        %v1754 = vpop.f32.mrf.mxu0
        %1755 = vmatprep.mubr.bf16.mxu0 %v1159
        %1756 = vmatmul.mubr.bf16.gmra.mxu0 %v1158
        %v1757 = vpop.f32.mrf.mxu0
        %v1758 = vadd.f32 %v1693, %v1757
        %v1759 = vpop.f32.mrf.mxu0
        %v1760 = vpop.f32.mrf.mxu0
        %v1761 = vadd.f32 %v1696, %v1760
        %v1762 = vpop.f32.mrf.mxu0
        %1763 = vmatprep.mubr.bf16.mxu0 %v1168
        %1764 = vmatmul.mubr.bf16.gmra.mxu0 %v1167
        %v1765 = vpop.f32.mrf.mxu0
        %v1766 = vadd.f32 %v1701, %v1765
        %v1767 = vpop.f32.mrf.mxu0
        %v1768 = vpop.f32.mrf.mxu0
        %v1769 = vadd.f32 %v1704, %v1768
        %v1770 = vpop.f32.mrf.mxu0
        %1771 = vdwg.mxu0
        %1772 = vmatprep.subr.bf16.mxu0 0
        %1773 = vmatpush1.bf16.msra.mxu0 %v1537
        %1774 = vmatprep.subr.bf16.mxu0 0
        %1775 = vmatpush1.bf16.msra.mxu0 %v1536
        %1776 = vmatprep.subr.bf16.mxu0 0
        %1777 = vmatpush1.bf16.msra.mxu0 %v1535
        %1778 = vmatprep.subr.bf16.mxu0 0
        %1779 = vmatpush1.bf16.msra.mxu0 %v1534
        %1780 = vmatprep.subr.bf16.mxu0 0
        %1781 = vmatpush1.bf16.msra.mxu0 %v1533
        %1782 = vmatprep.subr.bf16.mxu0 0
        %1783 = vmatpush1.bf16.msra.mxu0 %v1532
        %1784 = vmatprep.subr.bf16.mxu0 0
        %1785 = vmatpush1.bf16.msra.mxu0 %v1531
        %1786 = vmatprep.subr.bf16.mxu0 0
        %1787 = vmatpush1.bf16.msra.mxu0 %v1530
        %1788 = vmatprep.subr.bf16.mxu0 0
        %1789 = vmatpush2.bf16.msra.mxu0 %v1545
        %1790 = vmatprep.subr.bf16.mxu0 0
        %1791 = vmatpush2.bf16.msra.mxu0 %v1544
        %1792 = vmatprep.subr.bf16.mxu0 0
        %1793 = vmatpush2.bf16.msra.mxu0 %v1543
        %1794 = vmatprep.subr.bf16.mxu0 0
        %1795 = vmatpush2.bf16.msra.mxu0 %v1542
        %1796 = vmatprep.subr.bf16.mxu0 0
        %1797 = vmatpush2.bf16.msra.mxu0 %v1541
        %1798 = vmatprep.subr.bf16.mxu0 0
        %1799 = vmatpush2.bf16.msra.mxu0 %v1540
        %1800 = vmatprep.subr.bf16.mxu0 0
        %1801 = vmatpush2.bf16.msra.mxu0 %v1539
        %1802 = vmatprep.subr.bf16.mxu0 0
        %1803 = vmatpush2.bf16.msra.mxu0 %v1538
        %1804 = vmatprep.mubr.bf16.mxu0 %v1143
        %1805 = vmatmul.mubr.bf16.gmra.mxu0 %v1142
        %v1806 = vpop.f32.mrf.mxu0
        %v1807 = vadd.f32 %v1742, %v1806
        %v1808 = vpop.f32.mrf.mxu0
        %v1809 = vpop.f32.mrf.mxu0
        %v1810 = vadd.f32 %v1745, %v1809
        %v1811 = vpop.f32.mrf.mxu0
        %1812 = vmatprep.mubr.bf16.mxu0 %v1152
        %1813 = vmatmul.mubr.bf16.gmra.mxu0 %v1151
        %v1814 = vpop.f32.mrf.mxu0
        %v1815 = vadd.f32 %v1750, %v1814
        %v1816 = vpop.f32.mrf.mxu0
        %v1817 = vpop.f32.mrf.mxu0
        %v1818 = vadd.f32 %v1753, %v1817
        %v1819 = vpop.f32.mrf.mxu0
        %1820 = vmatprep.mubr.bf16.mxu0 %v1161
        %1821 = vmatmul.mubr.bf16.gmra.mxu0 %v1160
        %v1822 = vpop.f32.mrf.mxu0
        %v1823 = vadd.f32 %v1758, %v1822
        %v1824 = vpop.f32.mrf.mxu0
        %v1825 = vpop.f32.mrf.mxu0
        %v1826 = vadd.f32 %v1761, %v1825
        %v1827 = vpop.f32.mrf.mxu0
        %1828 = vmatprep.mubr.bf16.mxu0 %v1170
        %1829 = vmatmul.mubr.bf16.gmra.mxu0 %v1169
        %v1830 = vpop.f32.mrf.mxu0
        %v1831 = vadd.f32 %v1766, %v1830
        %v1832 = vpop.f32.mrf.mxu0
        %v1833 = vpop.f32.mrf.mxu0
        %v1834 = vadd.f32 %v1769, %v1833
        %v1835 = vpop.f32.mrf.mxu0
        %1836 = vdwg.mxu0
        %1837 = vmatprep.subr.bf16.mxu0 0
        %1838 = vmatpush1.bf16.msra.mxu0 %v1553
        %1839 = vmatprep.subr.bf16.mxu0 0
        %1840 = vmatpush1.bf16.msra.mxu0 %v1552
        %1841 = vmatprep.subr.bf16.mxu0 0
        %1842 = vmatpush1.bf16.msra.mxu0 %v1551
        %1843 = vmatprep.subr.bf16.mxu0 0
        %1844 = vmatpush1.bf16.msra.mxu0 %v1550
        %1845 = vmatprep.subr.bf16.mxu0 0
        %1846 = vmatpush1.bf16.msra.mxu0 %v1549
        %1847 = vmatprep.subr.bf16.mxu0 0
        %1848 = vmatpush1.bf16.msra.mxu0 %v1548
        %1849 = vmatprep.subr.bf16.mxu0 0
        %1850 = vmatpush1.bf16.msra.mxu0 %v1547
        %1851 = vmatprep.subr.bf16.mxu0 0
        %1852 = vmatpush1.bf16.msra.mxu0 %v1546
        %1853 = vmatprep.subr.bf16.mxu0 0
        %1854 = vmatpush2.bf16.msra.mxu0 %v1561
        %1855 = vmatprep.subr.bf16.mxu0 0
        %1856 = vmatpush2.bf16.msra.mxu0 %v1560
        %1857 = vmatprep.subr.bf16.mxu0 0
        %1858 = vmatpush2.bf16.msra.mxu0 %v1559
        %1859 = vmatprep.subr.bf16.mxu0 0
        %1860 = vmatpush2.bf16.msra.mxu0 %v1558
        %1861 = vmatprep.subr.bf16.mxu0 0
        %1862 = vmatpush2.bf16.msra.mxu0 %v1557
        %1863 = vmatprep.subr.bf16.mxu0 0
        %1864 = vmatpush2.bf16.msra.mxu0 %v1556
        %1865 = vmatprep.subr.bf16.mxu0 0
        %1866 = vmatpush2.bf16.msra.mxu0 %v1555
        %1867 = vmatprep.subr.bf16.mxu0 0
        %1868 = vmatpush2.bf16.msra.mxu0 %v1554
        %1869 = vmatprep.mubr.bf16.mxu0 %v1145
        %1870 = vmatmul.mubr.bf16.gmra.mxu0 %v1144
        %v1871 = vpop.f32.mrf.mxu0
        %v1872 = vadd.f32 %v1807, %v1871
        %v1873 = vpop.f32.mrf.mxu0
        %v1874 = vpop.f32.mrf.mxu0
        %v1875 = vadd.f32 %v1810, %v1874
        %v1876 = vpop.f32.mrf.mxu0
        %1877 = vmatprep.mubr.bf16.mxu0 %v1154
        %1878 = vmatmul.mubr.bf16.gmra.mxu0 %v1153
        %v1879 = vpop.f32.mrf.mxu0
        %v1880 = vadd.f32 %v1815, %v1879
        %v1881 = vpop.f32.mrf.mxu0
        %v1882 = vpop.f32.mrf.mxu0
        %v1883 = vadd.f32 %v1818, %v1882
        %v1884 = vpop.f32.mrf.mxu0
        %1885 = vmatprep.mubr.bf16.mxu0 %v1163
        %1886 = vmatmul.mubr.bf16.gmra.mxu0 %v1162
        %v1887 = vpop.f32.mrf.mxu0
        %v1888 = vadd.f32 %v1823, %v1887
        %v1889 = vpop.f32.mrf.mxu0
        %v1890 = vpop.f32.mrf.mxu0
        %v1891 = vadd.f32 %v1826, %v1890
        %v1892 = vpop.f32.mrf.mxu0
        %1893 = vmatprep.mubr.bf16.mxu0 %v1172
        %1894 = vmatmul.mubr.bf16.gmra.mxu0 %v1171
        %v1895 = vpop.f32.mrf.mxu0
        %v1896 = vadd.f32 %v1831, %v1895
        %v1897 = vpop.f32.mrf.mxu0
        %v1898 = vpop.f32.mrf.mxu0
        %v1899 = vadd.f32 %v1834, %v1898
        %v1900 = vpop.f32.mrf.mxu0
        %1901 = vdwg.mxu0
        %1902 = vmatprep.subr.bf16.mxu0 0
        %1903 = vmatpush1.bf16.msra.mxu0 %v1569
        %1904 = vmatprep.subr.bf16.mxu0 0
        %1905 = vmatpush1.bf16.msra.mxu0 %v1568
        %1906 = vmatprep.subr.bf16.mxu0 0
        %1907 = vmatpush1.bf16.msra.mxu0 %v1567
        %1908 = vmatprep.subr.bf16.mxu0 0
        %1909 = vmatpush1.bf16.msra.mxu0 %v1566
        %1910 = vmatprep.subr.bf16.mxu0 0
        %1911 = vmatpush1.bf16.msra.mxu0 %v1565
        %1912 = vmatprep.subr.bf16.mxu0 0
        %1913 = vmatpush1.bf16.msra.mxu0 %v1564
        %1914 = vmatprep.subr.bf16.mxu0 0
        %1915 = vmatpush1.bf16.msra.mxu0 %v1563
        %1916 = vmatprep.subr.bf16.mxu0 0
        %1917 = vmatpush1.bf16.msra.mxu0 %v1562
        %1918 = vmatprep.subr.bf16.mxu0 0
        %1919 = vmatpush2.bf16.msra.mxu0 0
        %1920 = vmatprep.subr.bf16.mxu0 0
        %1921 = vmatpush2.bf16.msra.mxu0 0
        %1922 = vmatprep.subr.bf16.mxu0 0
        %1923 = vmatpush2.bf16.msra.mxu0 0
        %1924 = vmatprep.subr.bf16.mxu0 0
        %1925 = vmatpush2.bf16.msra.mxu0 0
        %1926 = vmatprep.subr.bf16.mxu0 0
        %1927 = vmatpush2.bf16.msra.mxu0 0
        %1928 = vmatprep.subr.bf16.mxu0 0
        %1929 = vmatpush2.bf16.msra.mxu0 0
        %1930 = vmatprep.subr.bf16.mxu0 0
        %1931 = vmatpush2.bf16.msra.mxu0 0
        %1932 = vmatprep.subr.bf16.mxu0 0
        %1933 = vmatpush2.bf16.msra.mxu0 0
        %1934 = vmatprep.mubr.bf16.mxu0 0
        %1935 = vmatmul.mubr.bf16.gmra.mxu0 %v1146
        %v1936 = vpop.f32.mrf.mxu0
        %v1937 = vadd.f32 %v1872, %v1936
        %v1938 = vpop.f32.mrf.mxu0
        %v1939 = vpop.f32.mrf.mxu0
        %v1940 = vadd.f32 %v1875, %v1939
        %v1941 = vpop.f32.mrf.mxu0
        %1942 = vmatprep.mubr.bf16.mxu0 0
        %1943 = vmatmul.mubr.bf16.gmra.mxu0 %v1155
        %v1944 = vpop.f32.mrf.mxu0
        %v1945 = vadd.f32 %v1880, %v1944
        %v1946 = vpop.f32.mrf.mxu0
        %v1947 = vpop.f32.mrf.mxu0
        %v1948 = vadd.f32 %v1883, %v1947
        %v1949 = vpop.f32.mrf.mxu0
        %1950 = vmatprep.mubr.bf16.mxu0 0
        %1951 = vmatmul.mubr.bf16.gmra.mxu0 %v1164
        %v1952 = vpop.f32.mrf.mxu0
        %v1953 = vadd.f32 %v1888, %v1952
        %v1954 = vpop.f32.mrf.mxu0
        %v1955 = vpop.f32.mrf.mxu0
        %v1956 = vadd.f32 %v1891, %v1955
        %v1957 = vpop.f32.mrf.mxu0
        %1958 = vmatprep.mubr.bf16.mxu0 0
        %1959 = vmatmul.mubr.bf16.gmra.mxu0 %v1173
        %v1960 = vpop.f32.mrf.mxu0
        %v1961 = vadd.f32 %v1896, %v1960
        %v1962 = vpop.f32.mrf.mxu0
        %v1963 = vpop.f32.mrf.mxu0
        %v1964 = vadd.f32 %v1899, %v1963
        %v1965 = vpop.f32.mrf.mxu0
        %1966 = vdwg.mxu0
        %v1967 = vadd.f32 %v1937, %v1940
        %v1968 = vadd.f32 %v1967, %v1945
        %v1969 = vadd.f32 %v1968, %v1948
        %v1970 = vadd.f32 %v1969, %v1953
        %v1971 = vadd.f32 %v1970, %v1956
        %v1972 = vadd.f32 %v1971, %v1961
        %v1973 = vadd.f32 %v1972, %v1964
        %v1974 = vrot.slane %v1973, 4
        %v1975 = vadd.f32 %v1973, %v1974
        %v1976 = vrot.slane %v1975, 2
        %v1977 = vadd.f32 %v1975, %v1976
        %v1978 = vrot.slane %v1977, 1
        %v1979 = vadd.f32 %v1977, %v1978
        %v1980 = vmul.f32 %v1937, %v1937
        %v1981 = vmul.f32 %v1940, %v1940
        %v1982 = vmul.f32 %v1945, %v1945
        %v1983 = vmul.f32 %v1948, %v1948
        %v1984 = vmul.f32 %v1953, %v1953
        %v1985 = vmul.f32 %v1956, %v1956
        %v1986 = vmul.f32 %v1961, %v1961
        %v1987 = vmul.f32 %v1964, %v1964
        %v1988 = vadd.f32 %v1980, %v1981
        %v1989 = vadd.f32 %v1988, %v1982
        %v1990 = vadd.f32 %v1989, %v1983
        %v1991 = vadd.f32 %v1990, %v1984
        %v1992 = vadd.f32 %v1991, %v1985
        %v1993 = vadd.f32 %v1992, %v1986
        %v1994 = vadd.f32 %v1993, %v1987
        %v1995 = vrot.slane %v1994, 4
        %v1996 = vadd.f32 %v1994, %v1995
        %v1997 = vrot.slane %v1996, 2
        %v1998 = vadd.f32 %v1996, %v1997
        %v1999 = vrot.slane %v1998, 1
        %v2000 = vadd.f32 %v1998, %v1999
        %vm2001 = vcmask 1040384
        %v2002 = vsel %vm2001, %v1979, %v2000
        %v2003 = vld [vmem:[#allocation10] sm:$0xff]
        %v2004 = vld [vmem:[#allocation10 + $0x8] sm:$0xff]
        %v2005 = vld [vmem:[#allocation10 + $0x10] sm:$0xff]
        %v2006 = vld [vmem:[#allocation10 + $0x18] sm:$0xff]
        %v2007 = vld [vmem:[#allocation10 + $0x20] sm:$0xff]
        %v2008 = vld [vmem:[#allocation10 + $0x28] sm:$0xff]
        %v2009 = vld [vmem:[#allocation10 + $0x30] sm:$0xff]
        %v2010 = vld [vmem:[#allocation10 + $0x38] sm:$0xff]
        %v2011 = vld [vmem:[#allocation10 + $0x40] sm:$0xff]
        %v2012 = vld [vmem:[#allocation10 + $0x48] sm:$0xff]
        %v2013 = vld [vmem:[#allocation10 + $0x50] sm:$0xff]
        %v2014 = vld [vmem:[#allocation10 + $0x58] sm:$0xff]
        %v2015 = vld [vmem:[#allocation10 + $0x60] sm:$0xff]
        %v2016 = vld [vmem:[#allocation10 + $0x68] sm:$0xff]
        %v2017 = vld [vmem:[#allocation10 + $0x70] sm:$0xff]
        %v2018 = vld [vmem:[#allocation10 + $0x78] sm:$0xff]
        %2019 = vmatprep.subr.mxu0 0.0
        %2020 = vmatpush1.msra.mxu0 %v2018
        %2021 = vmatprep.subr.mxu0 0.0
        %2022 = vmatpush1.msra.mxu0 %v2017
        %2023 = vmatprep.subr.mxu0 0.0
        %2024 = vmatpush1.msra.mxu0 %v2016
        %2025 = vmatprep.subr.mxu0 0.0
        %2026 = vmatpush1.msra.mxu0 %v2015
        %2027 = vmatprep.subr.mxu0 0.0
        %2028 = vmatpush1.msra.mxu0 %v2014
        %2029 = vmatprep.subr.mxu0 0.0
        %2030 = vmatpush1.msra.mxu0 %v2013
        %2031 = vmatprep.subr.mxu0 0.0
        %2032 = vmatpush1.msra.mxu0 %v2012
        %2033 = vmatprep.subr.mxu0 0.0
        %2034 = vmatpush1.msra.mxu0 %v2011
        %2035 = vmatprep.subr.mxu0 0.0
        %2036 = vmatpush1.msra.mxu0 %v2010
        %2037 = vmatprep.subr.mxu0 0.0
        %2038 = vmatpush1.msra.mxu0 %v2009
        %2039 = vmatprep.subr.mxu0 0.0
        %2040 = vmatpush1.msra.mxu0 %v2008
        %2041 = vmatprep.subr.mxu0 0.0
        %2042 = vmatpush1.msra.mxu0 %v2007
        %2043 = vmatprep.subr.mxu0 0.0
        %2044 = vmatpush1.msra.mxu0 %v2006
        %2045 = vmatprep.subr.mxu0 0.0
        %2046 = vmatpush1.msra.mxu0 %v2005
        %2047 = vmatprep.subr.mxu0 0.0
        %2048 = vmatpush1.msra.mxu0 %v2004
        %2049 = vmatprep.subr.mxu0 0.0
        %2050 = vmatpush1.msra.mxu0 %v2003
        %2051 = vmatprep.subr.mxu0 0.0
        %2052 = vmatpush2.msra.mxu0 0.0
        %2053 = vmatprep.subr.mxu0 0.0
        %2054 = vmatpush2.msra.mxu0 0.0
        %2055 = vmatprep.subr.mxu0 0.0
        %2056 = vmatpush2.msra.mxu0 0.0
        %2057 = vmatprep.subr.mxu0 0.0
        %2058 = vmatpush2.msra.mxu0 0.0
        %2059 = vmatprep.subr.mxu0 0.0
        %2060 = vmatpush2.msra.mxu0 0.0
        %2061 = vmatprep.subr.mxu0 0.0
        %2062 = vmatpush2.msra.mxu0 0.0
        %2063 = vmatprep.subr.mxu0 0.0
        %2064 = vmatpush2.msra.mxu0 0.0
        %2065 = vmatprep.subr.mxu0 0.0
        %2066 = vmatpush2.msra.mxu0 0.0
        %2067 = vmatprep.subr.mxu0 0.0
        %2068 = vmatpush2.msra.mxu0 0.0
        %2069 = vmatprep.subr.mxu0 0.0
        %2070 = vmatpush2.msra.mxu0 0.0
        %2071 = vmatprep.subr.mxu0 0.0
        %2072 = vmatpush2.msra.mxu0 0.0
        %2073 = vmatprep.subr.mxu0 0.0
        %2074 = vmatpush2.msra.mxu0 0.0
        %2075 = vmatprep.subr.mxu0 0.0
        %2076 = vmatpush2.msra.mxu0 0.0
        %2077 = vmatprep.subr.mxu0 0.0
        %2078 = vmatpush2.msra.mxu0 0.0
        %2079 = vmatprep.subr.mxu0 0.0
        %2080 = vmatpush2.msra.mxu0 0.0
        %2081 = vmatprep.subr.mxu0 0.0
        %2082 = vmatpush2.msra.mxu0 0.0
        %2083 = vmatprep.mubr.f32.mxu0 0.0
        %2084 = vmatmul.mubr.f32.gmra.mxu0 %v2002
        %v2085 = vpop.f32.mrf.mxu0
        %v2086 = vadd.f32 0.0, %v2085
        %v2087 = vpop.f32.mrf.mxu0
        %2088 = vdwg.mxu0
        %v2089 = vmul.f32 %v2086, 0.001953125
        %v2090 = vmul.f32 %v2089, %v2089
        %v2092 = vrot.slane %v2090, 7
        %v2094 = vsub.f32 %v2089, %v2092
        %v2095 = vlaneseq
        %v2096 = vshrl.u32 %v2095, 7
        %v2097 = vsub.s32 0, %v2096
        %v2098 = vrot.slane %v2089, %v2097
        %v2099 = vsub.f32 %v1937, %v2098
        %v2100 = vsub.f32 %v1940, %v2098
        %v2101 = vsub.f32 %v1945, %v2098
        %v2102 = vsub.f32 %v1948, %v2098
        %v2103 = vsub.f32 %v1953, %v2098
        %v2104 = vsub.f32 %v1956, %v2098
        %v2105 = vsub.f32 %v1961, %v2098
        %v2106 = vsub.f32 %v1964, %v2098
        %v2107 = vadd.f32 %v2094, 1e-05
        %v2108 = vrsqrt.pop %v2107
        %v2109 = vlaneseq
        %v2110 = vshrl.u32 %v2109, 7
        %v2111 = vsub.s32 1, %v2110
        %v2112 = vrot.slane %v2108, %v2111
        %v2113 = vmul.f32 %v2099, %v2112
        %v2114 = vmul.f32 %v2100, %v2112
        %v2115 = vmul.f32 %v2101, %v2112
        %v2116 = vmul.f32 %v2102, %v2112
        %v2117 = vmul.f32 %v2103, %v2112
        %v2118 = vmul.f32 %v2104, %v2112
        %v2119 = vmul.f32 %v2105, %v2112
        %v2120 = vmul.f32 %v2106, %v2112
        %v2122 = vlaneseq
        %v2123 = vshrl.u32 %v2122, 7
        %v2124 = vsub.s32 0, %v2123
        %v2125 = vrot.slane %v407, %v2124
        %v2127 = vmul.f32 %v2113, %v2125
        %v2128 = vmul.f32 %v2114, %v2125
        %v2129 = vmul.f32 %v2115, %v2125
        %v2130 = vmul.f32 %v2116, %v2125
        %v2131 = vmul.f32 %v2117, %v2125
        %v2132 = vmul.f32 %v2118, %v2125
        %v2133 = vmul.f32 %v2119, %v2125
        %v2134 = vmul.f32 %v2120, %v2125
        %v2136 = vlaneseq
        %v2137 = vshrl.u32 %v2136, 7
        %v2138 = vsub.s32 0, %v2137
        %v2139 = vrot.slane %v408, %v2138
        %v2141 = vadd.f32 %v2127, %v2139
        %v2142 = vadd.f32 %v2128, %v2139
        %v2143 = vadd.f32 %v2129, %v2139
        %v2144 = vadd.f32 %v2130, %v2139
        %v2145 = vadd.f32 %v2131, %v2139
        %v2146 = vadd.f32 %v2132, %v2139
        %v2147 = vadd.f32 %v2133, %v2139
        %v2148 = vadd.f32 %v2134, %v2139
        %vm2149 = vcmp.gt.f32.partialorder %v2141, 0.0
        %vm2150 = vcmp.gt.f32.partialorder %v2142, 0.0
        %vm2151 = vcmp.gt.f32.partialorder %v2143, 0.0
        %vm2152 = vcmp.gt.f32.partialorder %v2144, 0.0
        %vm2153 = vcmp.gt.f32.partialorder %v2145, 0.0
        %vm2154 = vcmp.gt.f32.partialorder %v2146, 0.0
        %vm2155 = vcmp.gt.f32.partialorder %v2147, 0.0
        %vm2156 = vcmp.gt.f32.partialorder %v2148, 0.0
        %v2157 = vmul.f32 %v2141, 0.01
        %v2158 = vmul.f32 %v2142, 0.01
        %v2159 = vmul.f32 %v2143, 0.01
        %v2160 = vmul.f32 %v2144, 0.01
        %v2161 = vmul.f32 %v2145, 0.01
        %v2162 = vmul.f32 %v2146, 0.01
        %v2163 = vmul.f32 %v2147, 0.01
        %v2164 = vmul.f32 %v2148, 0.01
        %v2165 = vsel %vm2149, %v2141, %v2157
        %v2166 = vsel %vm2150, %v2142, %v2158
        %v2167 = vsel %vm2151, %v2143, %v2159
        %v2168 = vsel %vm2152, %v2144, %v2160
        %v2169 = vsel %vm2153, %v2145, %v2161
        %v2170 = vsel %vm2154, %v2146, %v2162
        %v2171 = vsel %vm2155, %v2147, %v2163
        %v2172 = vsel %vm2156, %v2148, %v2164
        %2173 = vst [vmem:[%s374 + $0x1] sm:$0xff] %v2165
        %2174 = vst [vmem:[%s374 + $0x11] sm:$0xff] %v2166
        %2175 = vst [vmem:[%s374 + $0x21] sm:$0xff] %v2167
        %2176 = vst [vmem:[%s374 + $0x31] sm:$0xff] %v2168
        %2177 = vst [vmem:[%s374 + $0x41] sm:$0xff] %v2169
        %2178 = vst [vmem:[%s374 + $0x51] sm:$0xff] %v2170
        %2179 = vst [vmem:[%s374 + $0x61] sm:$0xff] %v2171
        %2180 = vst [vmem:[%s374 + $0x71] sm:$0xff] %v2172
        %v2181 = vld [vmem:[%s5] sm:$0x1]
        %v2182 = vld [vmem:[%s6] sm:$0x1]
        %v2183 = vld [vmem:[#allocation2] sm:$0xff]
        %v2184 = vld [vmem:[#allocation2 + $0x10] sm:$0xff]
        %v2185 = vld [vmem:[#allocation2 + $0x20] sm:$0xff]
        %v2186 = vld [vmem:[#allocation2 + $0x30] sm:$0xff]
        %v2187 = vld [vmem:[#allocation2 + $0x40] sm:$0xff]
        %v2188 = vld [vmem:[#allocation2 + $0x50] sm:$0xff]
        %v2189 = vld [vmem:[#allocation2 + $0x60] sm:$0xff]
        %v2190 = vld [vmem:[#allocation2 + $0x70] sm:$0xff]
        %v2191 = vpack.c.bf16 %v2184, %v2183
        %v2192 = vpack.c.bf16 %v2186, %v2185
        %v2193 = vpack.c.bf16 %v2188, %v2187
        %v2194 = vpack.c.bf16 %v2190, %v2189
        %v2199 = vunpack.c.l.b16 %v2191
        %v2200 = vunpack.c.h.b16 %v2191
        %v2201 = vunpack.c.l.b16 %v2192
        %v2202 = vunpack.c.h.b16 %v2192
        %v2203 = vunpack.c.l.b16 %v2193
        %v2204 = vunpack.c.h.b16 %v2193
        %v2205 = vunpack.c.l.b16 %v2194
        %v2206 = vunpack.c.h.b16 %v2194
        %v2207 = vpack.c.b16 %v2199, %v2199
        %v2208 = vpack.c.b16 %v2200, %v2200
        %v2209 = vpack.c.b16 %v2201, %v2201
        %v2210 = vpack.c.b16 %v2202, %v2202
        %v2211 = vpack.c.b16 %v2203, %v2203
        %v2212 = vpack.c.b16 %v2204, %v2204
        %v2213 = vpack.c.b16 %v2205, %v2205
        %v2214 = vpack.c.b16 %v2206, %v2206
        %2223 = vst [vmem:[#allocation3] sm:$0xf] %v2207
        %2224 = vst [vmem:[#allocation3 + $0x24] sm:$0xf] %v2208
        %2225 = vst [vmem:[#allocation3 + $0x48] sm:$0xf] %v2209
        %2226 = vst [vmem:[#allocation3 + $0x6c] sm:$0xf] %v2210
        %2227 = vst [vmem:[#allocation3 + $0x90] sm:$0xf] %v2211
        %2228 = vst [vmem:[#allocation3 + $0xb4] sm:$0xf] %v2212
        %2229 = vst [vmem:[#allocation3 + $0xd8] sm:$0xf] %v2213
        %2230 = vst [vmem:[#allocation3 + $0xfc] sm:$0xf] %v2214
        %v2231 = vld [vmem:[#allocation2 + $0x1] sm:$0xff]
        %v2232 = vld [vmem:[#allocation2 + $0x11] sm:$0xff]
        %v2233 = vld [vmem:[#allocation2 + $0x21] sm:$0xff]
        %v2234 = vld [vmem:[#allocation2 + $0x31] sm:$0xff]
        %v2235 = vld [vmem:[#allocation2 + $0x41] sm:$0xff]
        %v2236 = vld [vmem:[#allocation2 + $0x51] sm:$0xff]
        %v2237 = vld [vmem:[#allocation2 + $0x61] sm:$0xff]
        %v2238 = vld [vmem:[#allocation2 + $0x71] sm:$0xff]
        %v2239 = vpack.c.bf16 %v2232, %v2231
        %v2240 = vpack.c.bf16 %v2234, %v2233
        %v2241 = vpack.c.bf16 %v2236, %v2235
        %v2242 = vpack.c.bf16 %v2238, %v2237
        %v2247 = vunpack.c.l.b16 %v2239
        %v2248 = vunpack.c.h.b16 %v2239
        %v2249 = vunpack.c.l.b16 %v2240
        %v2250 = vunpack.c.h.b16 %v2240
        %v2251 = vunpack.c.l.b16 %v2241
        %v2252 = vunpack.c.h.b16 %v2241
        %v2253 = vunpack.c.l.b16 %v2242
        %v2254 = vunpack.c.h.b16 %v2242
        %v2255 = vpack.c.b16 %v2247, %v2247
        %v2256 = vpack.c.b16 %v2248, %v2248
        %v2257 = vpack.c.b16 %v2249, %v2249
        %v2258 = vpack.c.b16 %v2250, %v2250
        %v2259 = vpack.c.b16 %v2251, %v2251
        %v2260 = vpack.c.b16 %v2252, %v2252
        %v2261 = vpack.c.b16 %v2253, %v2253
        %v2262 = vpack.c.b16 %v2254, %v2254
        %2271 = vst [vmem:[#allocation3 + $0x4] sm:$0xf] %v2255
        %2272 = vst [vmem:[#allocation3 + $0x28] sm:$0xf] %v2256
        %2273 = vst [vmem:[#allocation3 + $0x4c] sm:$0xf] %v2257
        %2274 = vst [vmem:[#allocation3 + $0x70] sm:$0xf] %v2258
        %2275 = vst [vmem:[#allocation3 + $0x94] sm:$0xf] %v2259
        %2276 = vst [vmem:[#allocation3 + $0xb8] sm:$0xf] %v2260
        %2277 = vst [vmem:[#allocation3 + $0xdc] sm:$0xf] %v2261
        %2278 = vst [vmem:[#allocation3 + $0x100] sm:$0xf] %v2262
        %v2279 = vld [vmem:[#allocation2 + $0x2] sm:$0xff]
        %v2280 = vld [vmem:[#allocation2 + $0x12] sm:$0xff]
        %v2281 = vld [vmem:[#allocation2 + $0x22] sm:$0xff]
        %v2282 = vld [vmem:[#allocation2 + $0x32] sm:$0xff]
        %v2283 = vld [vmem:[#allocation2 + $0x42] sm:$0xff]
        %v2284 = vld [vmem:[#allocation2 + $0x52] sm:$0xff]
        %v2285 = vld [vmem:[#allocation2 + $0x62] sm:$0xff]
        %v2286 = vld [vmem:[#allocation2 + $0x72] sm:$0xff]
        %v2287 = vpack.c.bf16 %v2280, %v2279
        %v2288 = vpack.c.bf16 %v2282, %v2281
        %v2289 = vpack.c.bf16 %v2284, %v2283
        %v2290 = vpack.c.bf16 %v2286, %v2285
        %v2295 = vunpack.c.l.b16 %v2287
        %v2296 = vunpack.c.h.b16 %v2287
        %v2297 = vunpack.c.l.b16 %v2288
        %v2298 = vunpack.c.h.b16 %v2288
        %v2299 = vunpack.c.l.b16 %v2289
        %v2300 = vunpack.c.h.b16 %v2289
        %v2301 = vunpack.c.l.b16 %v2290
        %v2302 = vunpack.c.h.b16 %v2290
        %v2303 = vpack.c.b16 %v2295, %v2295
        %v2304 = vpack.c.b16 %v2296, %v2296
        %v2305 = vpack.c.b16 %v2297, %v2297
        %v2306 = vpack.c.b16 %v2298, %v2298
        %v2307 = vpack.c.b16 %v2299, %v2299
        %v2308 = vpack.c.b16 %v2300, %v2300
        %v2309 = vpack.c.b16 %v2301, %v2301
        %v2310 = vpack.c.b16 %v2302, %v2302
        %2319 = vst [vmem:[#allocation3 + $0x8] sm:$0xf] %v2303
        %2320 = vst [vmem:[#allocation3 + $0x2c] sm:$0xf] %v2304
        %2321 = vst [vmem:[#allocation3 + $0x50] sm:$0xf] %v2305
        %2322 = vst [vmem:[#allocation3 + $0x74] sm:$0xf] %v2306
        %2323 = vst [vmem:[#allocation3 + $0x98] sm:$0xf] %v2307
        %2324 = vst [vmem:[#allocation3 + $0xbc] sm:$0xf] %v2308
        %2325 = vst [vmem:[#allocation3 + $0xe0] sm:$0xf] %v2309
        %2326 = vst [vmem:[#allocation3 + $0x104] sm:$0xf] %v2310
        %v2327 = vld [vmem:[%s374] sm:$0xff]
        %v2328 = vld [vmem:[%s374 + $0x10] sm:$0xff]
        %v2329 = vld [vmem:[%s374 + $0x20] sm:$0xff]
        %v2330 = vld [vmem:[%s374 + $0x30] sm:$0xff]
        %v2331 = vld [vmem:[%s374 + $0x40] sm:$0xff]
        %v2332 = vld [vmem:[%s374 + $0x50] sm:$0xff]
        %v2333 = vld [vmem:[%s374 + $0x60] sm:$0xff]
        %v2334 = vld [vmem:[%s374 + $0x70] sm:$0xff]
        %v2335 = vpack.c.bf16 %v2328, %v2327
        %v2336 = vpack.c.bf16 %v2330, %v2329
        %v2337 = vpack.c.bf16 %v2332, %v2331
        %v2338 = vpack.c.bf16 %v2334, %v2333
        %v2343 = vunpack.c.l.b16 %v2335
        %v2344 = vunpack.c.h.b16 %v2335
        %v2345 = vunpack.c.l.b16 %v2336
        %v2346 = vunpack.c.h.b16 %v2336
        %v2347 = vunpack.c.l.b16 %v2337
        %v2348 = vunpack.c.h.b16 %v2337
        %v2349 = vunpack.c.l.b16 %v2338
        %v2350 = vunpack.c.h.b16 %v2338
        %v2351 = vpack.c.b16 %v2343, %v2343
        %v2352 = vpack.c.b16 %v2344, %v2344
        %v2353 = vpack.c.b16 %v2345, %v2345
        %v2354 = vpack.c.b16 %v2346, %v2346
        %v2355 = vpack.c.b16 %v2347, %v2347
        %v2356 = vpack.c.b16 %v2348, %v2348
        %v2357 = vpack.c.b16 %v2349, %v2349
        %v2358 = vpack.c.b16 %v2350, %v2350
        %2367 = vst [vmem:[#allocation3 + $0xc] sm:$0xf] %v2351
        %2368 = vst [vmem:[#allocation3 + $0x30] sm:$0xf] %v2352
        %2369 = vst [vmem:[#allocation3 + $0x54] sm:$0xf] %v2353
        %2370 = vst [vmem:[#allocation3 + $0x78] sm:$0xf] %v2354
        %2371 = vst [vmem:[#allocation3 + $0x9c] sm:$0xf] %v2355
        %2372 = vst [vmem:[#allocation3 + $0xc0] sm:$0xf] %v2356
        %2373 = vst [vmem:[#allocation3 + $0xe4] sm:$0xf] %v2357
        %2374 = vst [vmem:[#allocation3 + $0x108] sm:$0xf] %v2358
        %v2375 = vld [vmem:[%s374 + $0x1] sm:$0xff]
        %v2376 = vld [vmem:[%s374 + $0x11] sm:$0xff]
        %v2377 = vld [vmem:[%s374 + $0x21] sm:$0xff]
        %v2378 = vld [vmem:[%s374 + $0x31] sm:$0xff]
        %v2379 = vld [vmem:[%s374 + $0x41] sm:$0xff]
        %v2380 = vld [vmem:[%s374 + $0x51] sm:$0xff]
        %v2381 = vld [vmem:[%s374 + $0x61] sm:$0xff]
        %v2382 = vld [vmem:[%s374 + $0x71] sm:$0xff]
        %v2383 = vpack.c.bf16 %v2376, %v2375
        %v2384 = vpack.c.bf16 %v2378, %v2377
        %v2385 = vpack.c.bf16 %v2380, %v2379
        %v2386 = vpack.c.bf16 %v2382, %v2381
        %v2391 = vunpack.c.l.b16 %v2383
        %v2392 = vunpack.c.h.b16 %v2383
        %v2393 = vunpack.c.l.b16 %v2384
        %v2394 = vunpack.c.h.b16 %v2384
        %v2395 = vunpack.c.l.b16 %v2385
        %v2396 = vunpack.c.h.b16 %v2385
        %v2397 = vunpack.c.l.b16 %v2386
        %v2398 = vunpack.c.h.b16 %v2386
        %v2399 = vpack.c.b16 %v2391, %v2391
        %v2400 = vpack.c.b16 %v2392, %v2392
        %v2401 = vpack.c.b16 %v2393, %v2393
        %v2402 = vpack.c.b16 %v2394, %v2394
        %v2403 = vpack.c.b16 %v2395, %v2395
        %v2404 = vpack.c.b16 %v2396, %v2396
        %v2405 = vpack.c.b16 %v2397, %v2397
        %v2406 = vpack.c.b16 %v2398, %v2398
        %2415 = vst [vmem:[#allocation3 + $0x10] sm:$0xf] %v2399
        %2416 = vst [vmem:[#allocation3 + $0x34] sm:$0xf] %v2400
        %2417 = vst [vmem:[#allocation3 + $0x58] sm:$0xf] %v2401
        %2418 = vst [vmem:[#allocation3 + $0x7c] sm:$0xf] %v2402
        %2419 = vst [vmem:[#allocation3 + $0xa0] sm:$0xf] %v2403
        %2420 = vst [vmem:[#allocation3 + $0xc4] sm:$0xf] %v2404
        %2421 = vst [vmem:[#allocation3 + $0xe8] sm:$0xf] %v2405
        %2422 = vst [vmem:[#allocation3 + $0x10c] sm:$0xf] %v2406
        %v2423 = vld [vmem:[%s374 + $0x2] sm:$0xff]
        %v2424 = vld [vmem:[%s374 + $0x12] sm:$0xff]
        %v2425 = vld [vmem:[%s374 + $0x22] sm:$0xff]
        %v2426 = vld [vmem:[%s374 + $0x32] sm:$0xff]
        %v2427 = vld [vmem:[%s374 + $0x42] sm:$0xff]
        %v2428 = vld [vmem:[%s374 + $0x52] sm:$0xff]
        %v2429 = vld [vmem:[%s374 + $0x62] sm:$0xff]
        %v2430 = vld [vmem:[%s374 + $0x72] sm:$0xff]
        %v2431 = vpack.c.bf16 %v2424, %v2423
        %v2432 = vpack.c.bf16 %v2426, %v2425
        %v2433 = vpack.c.bf16 %v2428, %v2427
        %v2434 = vpack.c.bf16 %v2430, %v2429
        %v2439 = vunpack.c.l.b16 %v2431
        %v2440 = vunpack.c.h.b16 %v2431
        %v2441 = vunpack.c.l.b16 %v2432
        %v2442 = vunpack.c.h.b16 %v2432
        %v2443 = vunpack.c.l.b16 %v2433
        %v2444 = vunpack.c.h.b16 %v2433
        %v2445 = vunpack.c.l.b16 %v2434
        %v2446 = vunpack.c.h.b16 %v2434
        %v2447 = vpack.c.b16 %v2439, %v2439
        %v2448 = vpack.c.b16 %v2440, %v2440
        %v2449 = vpack.c.b16 %v2441, %v2441
        %v2450 = vpack.c.b16 %v2442, %v2442
        %v2451 = vpack.c.b16 %v2443, %v2443
        %v2452 = vpack.c.b16 %v2444, %v2444
        %v2453 = vpack.c.b16 %v2445, %v2445
        %v2454 = vpack.c.b16 %v2446, %v2446
        %2463 = vst [vmem:[#allocation3 + $0x14] sm:$0xf] %v2447
        %2464 = vst [vmem:[#allocation3 + $0x38] sm:$0xf] %v2448
        %2465 = vst [vmem:[#allocation3 + $0x5c] sm:$0xf] %v2449
        %2466 = vst [vmem:[#allocation3 + $0x80] sm:$0xf] %v2450
        %2467 = vst [vmem:[#allocation3 + $0xa4] sm:$0xf] %v2451
        %2468 = vst [vmem:[#allocation3 + $0xc8] sm:$0xf] %v2452
        %2469 = vst [vmem:[#allocation3 + $0xec] sm:$0xf] %v2453
        %2470 = vst [vmem:[#allocation3 + $0x110] sm:$0xf] %v2454
        %v2471 = vld [vmem:[%s697] sm:$0xff]
        %v2472 = vld [vmem:[%s697 + $0x10] sm:$0xff]
        %v2473 = vld [vmem:[%s697 + $0x20] sm:$0xff]
        %v2474 = vld [vmem:[%s697 + $0x30] sm:$0xff]
        %v2475 = vld [vmem:[%s697 + $0x40] sm:$0xff]
        %v2476 = vld [vmem:[%s697 + $0x50] sm:$0xff]
        %v2477 = vld [vmem:[%s697 + $0x60] sm:$0xff]
        %v2478 = vld [vmem:[%s697 + $0x70] sm:$0xff]
        %v2479 = vpack.c.bf16 %v2472, %v2471
        %v2480 = vpack.c.bf16 %v2474, %v2473
        %v2481 = vpack.c.bf16 %v2476, %v2475
        %v2482 = vpack.c.bf16 %v2478, %v2477
        %v2487 = vunpack.c.l.b16 %v2479
        %v2488 = vunpack.c.h.b16 %v2479
        %v2489 = vunpack.c.l.b16 %v2480
        %v2490 = vunpack.c.h.b16 %v2480
        %v2491 = vunpack.c.l.b16 %v2481
        %v2492 = vunpack.c.h.b16 %v2481
        %v2493 = vunpack.c.l.b16 %v2482
        %v2494 = vunpack.c.h.b16 %v2482
        %v2495 = vpack.c.b16 %v2487, %v2487
        %v2496 = vpack.c.b16 %v2488, %v2488
        %v2497 = vpack.c.b16 %v2489, %v2489
        %v2498 = vpack.c.b16 %v2490, %v2490
        %v2499 = vpack.c.b16 %v2491, %v2491
        %v2500 = vpack.c.b16 %v2492, %v2492
        %v2501 = vpack.c.b16 %v2493, %v2493
        %v2502 = vpack.c.b16 %v2494, %v2494
        %2511 = vst [vmem:[#allocation3 + $0x18] sm:$0xf] %v2495
        %2512 = vst [vmem:[#allocation3 + $0x3c] sm:$0xf] %v2496
        %2513 = vst [vmem:[#allocation3 + $0x60] sm:$0xf] %v2497
        %2514 = vst [vmem:[#allocation3 + $0x84] sm:$0xf] %v2498
        %2515 = vst [vmem:[#allocation3 + $0xa8] sm:$0xf] %v2499
        %2516 = vst [vmem:[#allocation3 + $0xcc] sm:$0xf] %v2500
        %2517 = vst [vmem:[#allocation3 + $0xf0] sm:$0xf] %v2501
        %2518 = vst [vmem:[#allocation3 + $0x114] sm:$0xf] %v2502
        %v2519 = vld [vmem:[%s697 + $0x1] sm:$0xff]
        %v2520 = vld [vmem:[%s697 + $0x11] sm:$0xff]
        %v2521 = vld [vmem:[%s697 + $0x21] sm:$0xff]
        %v2522 = vld [vmem:[%s697 + $0x31] sm:$0xff]
        %v2523 = vld [vmem:[%s697 + $0x41] sm:$0xff]
        %v2524 = vld [vmem:[%s697 + $0x51] sm:$0xff]
        %v2525 = vld [vmem:[%s697 + $0x61] sm:$0xff]
        %v2526 = vld [vmem:[%s697 + $0x71] sm:$0xff]
        %v2527 = vpack.c.bf16 %v2520, %v2519
        %v2528 = vpack.c.bf16 %v2522, %v2521
        %v2529 = vpack.c.bf16 %v2524, %v2523
        %v2530 = vpack.c.bf16 %v2526, %v2525
        %v2535 = vunpack.c.l.b16 %v2527
        %v2536 = vunpack.c.h.b16 %v2527
        %v2537 = vunpack.c.l.b16 %v2528
        %v2538 = vunpack.c.h.b16 %v2528
        %v2539 = vunpack.c.l.b16 %v2529
        %v2540 = vunpack.c.h.b16 %v2529
        %v2541 = vunpack.c.l.b16 %v2530
        %v2542 = vunpack.c.h.b16 %v2530
        %v2543 = vpack.c.b16 %v2535, %v2535
        %v2544 = vpack.c.b16 %v2536, %v2536
        %v2545 = vpack.c.b16 %v2537, %v2537
        %v2546 = vpack.c.b16 %v2538, %v2538
        %v2547 = vpack.c.b16 %v2539, %v2539
        %v2548 = vpack.c.b16 %v2540, %v2540
        %v2549 = vpack.c.b16 %v2541, %v2541
        %v2550 = vpack.c.b16 %v2542, %v2542
        %2559 = vst [vmem:[#allocation3 + $0x1c] sm:$0xf] %v2543
        %2560 = vst [vmem:[#allocation3 + $0x40] sm:$0xf] %v2544
        %2561 = vst [vmem:[#allocation3 + $0x64] sm:$0xf] %v2545
        %2562 = vst [vmem:[#allocation3 + $0x88] sm:$0xf] %v2546
        %2563 = vst [vmem:[#allocation3 + $0xac] sm:$0xf] %v2547
        %2564 = vst [vmem:[#allocation3 + $0xd0] sm:$0xf] %v2548
        %2565 = vst [vmem:[#allocation3 + $0xf4] sm:$0xf] %v2549
        %2566 = vst [vmem:[#allocation3 + $0x118] sm:$0xf] %v2550
        %v2567 = vld [vmem:[%s697 + $0x2] sm:$0xff]
        %v2568 = vld [vmem:[%s697 + $0x12] sm:$0xff]
        %v2569 = vld [vmem:[%s697 + $0x22] sm:$0xff]
        %v2570 = vld [vmem:[%s697 + $0x32] sm:$0xff]
        %v2571 = vld [vmem:[%s697 + $0x42] sm:$0xff]
        %v2572 = vld [vmem:[%s697 + $0x52] sm:$0xff]
        %v2573 = vld [vmem:[%s697 + $0x62] sm:$0xff]
        %v2574 = vld [vmem:[%s697 + $0x72] sm:$0xff]
        %v2575 = vpack.c.bf16 %v2568, %v2567
        %v2576 = vpack.c.bf16 %v2570, %v2569
        %v2577 = vpack.c.bf16 %v2572, %v2571
        %v2578 = vpack.c.bf16 %v2574, %v2573
        %v2583 = vunpack.c.l.b16 %v2575
        %v2584 = vunpack.c.h.b16 %v2575
        %v2585 = vunpack.c.l.b16 %v2576
        %v2586 = vunpack.c.h.b16 %v2576
        %v2587 = vunpack.c.l.b16 %v2577
        %v2588 = vunpack.c.h.b16 %v2577
        %v2589 = vunpack.c.l.b16 %v2578
        %v2590 = vunpack.c.h.b16 %v2578
        %v2591 = vpack.c.b16 %v2583, %v2583
        %v2592 = vpack.c.b16 %v2584, %v2584
        %v2593 = vpack.c.b16 %v2585, %v2585
        %v2594 = vpack.c.b16 %v2586, %v2586
        %v2595 = vpack.c.b16 %v2587, %v2587
        %v2596 = vpack.c.b16 %v2588, %v2588
        %v2597 = vpack.c.b16 %v2589, %v2589
        %v2598 = vpack.c.b16 %v2590, %v2590
        %2607 = vst [vmem:[#allocation3 + $0x20] sm:$0xf] %v2591
        %2608 = vst [vmem:[#allocation3 + $0x44] sm:$0xf] %v2592
        %2609 = vst [vmem:[#allocation3 + $0x68] sm:$0xf] %v2593
        %2610 = vst [vmem:[#allocation3 + $0x8c] sm:$0xf] %v2594
        %2611 = vst [vmem:[#allocation3 + $0xb0] sm:$0xf] %v2595
        %2612 = vst [vmem:[#allocation3 + $0xd4] sm:$0xf] %v2596
        %2613 = vst [vmem:[#allocation3 + $0xf8] sm:$0xf] %v2597
        %2614 = vst [vmem:[#allocation3 + $0x11c] sm:$0xf] %v2598
        %v2615 = vld [vmem:[#allocation3] sm:$0xff]
        %v2616 = vld [vmem:[#allocation3 + $0x8] sm:$0xff]
        %v2617 = vld [vmem:[#allocation3 + $0x10] sm:$0xff]
        %v2618 = vld [vmem:[#allocation3 + $0x18] sm:$0xff]
        %v2619 = vld [vmem:[#allocation3 + $0x20] sm:$0xf]
        %v2620 = vld [vmem:[#allocation3 + $0x24] sm:$0xff]
        %v2621 = vld [vmem:[#allocation3 + $0x2c] sm:$0xff]
        %v2622 = vld [vmem:[#allocation3 + $0x34] sm:$0xff]
        %v2623 = vld [vmem:[#allocation3 + $0x3c] sm:$0xff]
        %v2624 = vld [vmem:[#allocation3 + $0x44] sm:$0xf]
        %v2625 = vld [vmem:[#allocation3 + $0x48] sm:$0xff]
        %v2626 = vld [vmem:[#allocation3 + $0x50] sm:$0xff]
        %v2627 = vld [vmem:[#allocation3 + $0x58] sm:$0xff]
        %v2628 = vld [vmem:[#allocation3 + $0x60] sm:$0xff]
        %v2629 = vld [vmem:[#allocation3 + $0x68] sm:$0xf]
        %v2630 = vld [vmem:[#allocation3 + $0x6c] sm:$0xff]
        %v2631 = vld [vmem:[#allocation3 + $0x74] sm:$0xff]
        %v2632 = vld [vmem:[#allocation3 + $0x7c] sm:$0xff]
        %v2633 = vld [vmem:[#allocation3 + $0x84] sm:$0xff]
        %v2634 = vld [vmem:[#allocation3 + $0x8c] sm:$0xf]
        %v2635 = vld [vmem:[#allocation3 + $0x90] sm:$0xff]
        %v2636 = vld [vmem:[#allocation3 + $0x98] sm:$0xff]
        %v2637 = vld [vmem:[#allocation3 + $0xa0] sm:$0xff]
        %v2638 = vld [vmem:[#allocation3 + $0xa8] sm:$0xff]
        %v2639 = vld [vmem:[#allocation3 + $0xb0] sm:$0xf]
        %v2640 = vld [vmem:[#allocation3 + $0xb4] sm:$0xff]
        %v2641 = vld [vmem:[#allocation3 + $0xbc] sm:$0xff]
        %v2642 = vld [vmem:[#allocation3 + $0xc4] sm:$0xff]
        %v2643 = vld [vmem:[#allocation3 + $0xcc] sm:$0xff]
        %v2644 = vld [vmem:[#allocation3 + $0xd4] sm:$0xf]
        %v2645 = vld [vmem:[#allocation3 + $0xd8] sm:$0xff]
        %v2646 = vld [vmem:[#allocation3 + $0xe0] sm:$0xff]
        %v2647 = vld [vmem:[#allocation3 + $0xe8] sm:$0xff]
        %v2648 = vld [vmem:[#allocation3 + $0xf0] sm:$0xff]
        %v2649 = vld [vmem:[#allocation3 + $0xf8] sm:$0xf]
        %v2650 = vld [vmem:[#allocation3 + $0xfc] sm:$0xff]
        %v2651 = vld [vmem:[#allocation3 + $0x104] sm:$0xff]
        %v2652 = vld [vmem:[#allocation3 + $0x10c] sm:$0xff]
        %v2653 = vld [vmem:[#allocation3 + $0x114] sm:$0xff]
        %v2654 = vld [vmem:[#allocation3 + $0x11c] sm:$0xf]
        %v2655 = vld [vmem:[#allocation9] sm:$0xf]
        %v2656 = vld [vmem:[#allocation9 + $0x4] sm:$0xf]
        %v2657 = vld [vmem:[#allocation9 + $0x8] sm:$0xf]
        %v2658 = vld [vmem:[#allocation9 + $0xc] sm:$0xf]
        %v2659 = vld [vmem:[#allocation9 + $0x10] sm:$0xf]
        %v2660 = vld [vmem:[#allocation9 + $0x14] sm:$0xf]
        %v2661 = vld [vmem:[#allocation9 + $0x18] sm:$0xf]
        %v2662 = vld [vmem:[#allocation9 + $0x1c] sm:$0xf]
        %v2663 = vld [vmem:[#allocation9 + $0x20] sm:$0xf]
        %v2664 = vld [vmem:[#allocation9 + $0x24] sm:$0xf]
        %v2665 = vld [vmem:[#allocation9 + $0x28] sm:$0xf]
        %v2666 = vld [vmem:[#allocation9 + $0x2c] sm:$0xf]
        %v2667 = vld [vmem:[#allocation9 + $0x30] sm:$0xf]
        %v2668 = vld [vmem:[#allocation9 + $0x34] sm:$0xf]
        %v2669 = vld [vmem:[#allocation9 + $0x38] sm:$0xf]
        %v2670 = vld [vmem:[#allocation9 + $0x3c] sm:$0xf]
        %v2671 = vld [vmem:[#allocation9 + $0x40] sm:$0xf]
        %v2672 = vld [vmem:[#allocation9 + $0x44] sm:$0xf]
        %v2673 = vld [vmem:[#allocation9 + $0x48] sm:$0xf]
        %v2674 = vld [vmem:[#allocation9 + $0x4c] sm:$0xf]
        %v2675 = vld [vmem:[#allocation9 + $0x50] sm:$0xf]
        %v2676 = vld [vmem:[#allocation9 + $0x54] sm:$0xf]
        %v2677 = vld [vmem:[#allocation9 + $0x58] sm:$0xf]
        %v2678 = vld [vmem:[#allocation9 + $0x5c] sm:$0xf]
        %v2679 = vld [vmem:[#allocation9 + $0x60] sm:$0xf]
        %v2680 = vld [vmem:[#allocation9 + $0x64] sm:$0xf]
        %v2681 = vld [vmem:[#allocation9 + $0x68] sm:$0xf]
        %v2682 = vld [vmem:[#allocation9 + $0x6c] sm:$0xf]
        %v2683 = vld [vmem:[#allocation9 + $0x70] sm:$0xf]
        %v2684 = vld [vmem:[#allocation9 + $0x74] sm:$0xf]
        %v2685 = vld [vmem:[#allocation9 + $0x78] sm:$0xf]
        %v2686 = vld [vmem:[#allocation9 + $0x7c] sm:$0xf]
        %v2687 = vld [vmem:[#allocation9 + $0x80] sm:$0xf]
        %v2688 = vld [vmem:[#allocation9 + $0x84] sm:$0xf]
        %v2689 = vld [vmem:[#allocation9 + $0x88] sm:$0xf]
        %v2690 = vld [vmem:[#allocation9 + $0x8c] sm:$0xf]
        %v2691 = vld [vmem:[#allocation9 + $0x90] sm:$0xf]
        %v2692 = vld [vmem:[#allocation9 + $0x94] sm:$0xf]
        %v2693 = vld [vmem:[#allocation9 + $0x98] sm:$0xf]
        %v2694 = vld [vmem:[#allocation9 + $0x9c] sm:$0xf]
        %v2695 = vld [vmem:[#allocation9 + $0xa0] sm:$0xf]
        %v2696 = vld [vmem:[#allocation9 + $0xa4] sm:$0xf]
        %v2697 = vld [vmem:[#allocation9 + $0xa8] sm:$0xf]
        %v2698 = vld [vmem:[#allocation9 + $0xac] sm:$0xf]
        %v2699 = vld [vmem:[#allocation9 + $0xb0] sm:$0xf]
        %v2700 = vld [vmem:[#allocation9 + $0xb4] sm:$0xf]
        %v2701 = vld [vmem:[#allocation9 + $0xb8] sm:$0xf]
        %v2702 = vld [vmem:[#allocation9 + $0xbc] sm:$0xf]
        %v2703 = vld [vmem:[#allocation9 + $0xc0] sm:$0xf]
        %v2704 = vld [vmem:[#allocation9 + $0xc4] sm:$0xf]
        %v2705 = vld [vmem:[#allocation9 + $0xc8] sm:$0xf]
        %v2706 = vld [vmem:[#allocation9 + $0xcc] sm:$0xf]
        %v2707 = vld [vmem:[#allocation9 + $0xd0] sm:$0xf]
        %v2708 = vld [vmem:[#allocation9 + $0xd4] sm:$0xf]
        %v2709 = vld [vmem:[#allocation9 + $0xd8] sm:$0xf]
        %v2710 = vld [vmem:[#allocation9 + $0xdc] sm:$0xf]
        %v2711 = vld [vmem:[#allocation9 + $0xe0] sm:$0xf]
        %v2712 = vld [vmem:[#allocation9 + $0xe4] sm:$0xf]
        %v2713 = vld [vmem:[#allocation9 + $0xe8] sm:$0xf]
        %v2714 = vld [vmem:[#allocation9 + $0xec] sm:$0xf]
        %v2715 = vld [vmem:[#allocation9 + $0xf0] sm:$0xf]
        %v2716 = vld [vmem:[#allocation9 + $0xf4] sm:$0xf]
        %v2717 = vld [vmem:[#allocation9 + $0xf8] sm:$0xf]
        %v2718 = vld [vmem:[#allocation9 + $0xfc] sm:$0xf]
        %v2719 = vld [vmem:[#allocation9 + $0x100] sm:$0xf]
        %v2720 = vld [vmem:[#allocation9 + $0x104] sm:$0xf]
        %v2721 = vld [vmem:[#allocation9 + $0x108] sm:$0xf]
        %v2722 = vld [vmem:[#allocation9 + $0x10c] sm:$0xf]
        %v2723 = vld [vmem:[#allocation9 + $0x110] sm:$0xf]
        %v2724 = vld [vmem:[#allocation9 + $0x114] sm:$0xf]
        %v2725 = vld [vmem:[#allocation9 + $0x118] sm:$0xf]
        %v2726 = vld [vmem:[#allocation9 + $0x11c] sm:$0xf]
        %v2727 = vld [vmem:[#allocation9 + $0x120] sm:$0xf]
        %v2728 = vld [vmem:[#allocation9 + $0x124] sm:$0xf]
        %v2729 = vld [vmem:[#allocation9 + $0x128] sm:$0xf]
        %v2730 = vld [vmem:[#allocation9 + $0x12c] sm:$0xf]
        %v2731 = vld [vmem:[#allocation9 + $0x130] sm:$0xf]
        %v2732 = vld [vmem:[#allocation9 + $0x134] sm:$0xf]
        %v2733 = vld [vmem:[#allocation9 + $0x138] sm:$0xf]
        %v2734 = vld [vmem:[#allocation9 + $0x13c] sm:$0xf]
        %v2735 = vld [vmem:[#allocation9 + $0x140] sm:$0xf]
        %v2736 = vld [vmem:[#allocation9 + $0x144] sm:$0xf]
        %v2737 = vld [vmem:[#allocation9 + $0x148] sm:$0xf]
        %v2738 = vld [vmem:[#allocation9 + $0x14c] sm:$0xf]
        %v2739 = vld [vmem:[#allocation9 + $0x150] sm:$0xf]
        %v2740 = vld [vmem:[#allocation9 + $0x154] sm:$0xf]
        %v2741 = vld [vmem:[#allocation9 + $0x158] sm:$0xf]
        %v2742 = vld [vmem:[#allocation9 + $0x15c] sm:$0xf]
        %v2743 = vld [vmem:[#allocation9 + $0x160] sm:$0xf]
        %v2744 = vld [vmem:[#allocation9 + $0x164] sm:$0xf]
        %v2745 = vld [vmem:[#allocation9 + $0x168] sm:$0xf]
        %v2746 = vld [vmem:[#allocation9 + $0x16c] sm:$0xf]
        %v2747 = vld [vmem:[#allocation9 + $0x170] sm:$0xf]
        %v2748 = vld [vmem:[#allocation9 + $0x174] sm:$0xf]
        %v2749 = vld [vmem:[#allocation9 + $0x178] sm:$0xf]
        %v2750 = vld [vmem:[#allocation9 + $0x17c] sm:$0xf]
        %v2751 = vld [vmem:[#allocation9 + $0x180] sm:$0xf]
        %v2752 = vld [vmem:[#allocation9 + $0x184] sm:$0xf]
        %v2753 = vld [vmem:[#allocation9 + $0x188] sm:$0xf]
        %v2754 = vld [vmem:[#allocation9 + $0x18c] sm:$0xf]
        %v2755 = vld [vmem:[#allocation9 + $0x190] sm:$0xf]
        %v2756 = vld [vmem:[#allocation9 + $0x194] sm:$0xf]
        %v2757 = vld [vmem:[#allocation9 + $0x198] sm:$0xf]
        %v2758 = vld [vmem:[#allocation9 + $0x19c] sm:$0xf]
        %v2759 = vld [vmem:[#allocation9 + $0x1a0] sm:$0xf]
        %v2760 = vld [vmem:[#allocation9 + $0x1a4] sm:$0xf]
        %v2761 = vld [vmem:[#allocation9 + $0x1a8] sm:$0xf]
        %v2762 = vld [vmem:[#allocation9 + $0x1ac] sm:$0xf]
        %v2763 = vld [vmem:[#allocation9 + $0x1b0] sm:$0xf]
        %v2764 = vld [vmem:[#allocation9 + $0x1b4] sm:$0xf]
        %v2765 = vld [vmem:[#allocation9 + $0x1b8] sm:$0xf]
        %v2766 = vld [vmem:[#allocation9 + $0x1bc] sm:$0xf]
        %v2767 = vld [vmem:[#allocation9 + $0x1c0] sm:$0xf]
        %v2768 = vld [vmem:[#allocation9 + $0x1c4] sm:$0xf]
        %v2769 = vld [vmem:[#allocation9 + $0x1c8] sm:$0xf]
        %v2770 = vld [vmem:[#allocation9 + $0x1cc] sm:$0xf]
        %v2771 = vld [vmem:[#allocation9 + $0x1d0] sm:$0xf]
        %v2772 = vld [vmem:[#allocation9 + $0x1d4] sm:$0xf]
        %v2773 = vld [vmem:[#allocation9 + $0x1d8] sm:$0xf]
        %v2774 = vld [vmem:[#allocation9 + $0x1dc] sm:$0xf]
        %v2775 = vld [vmem:[#allocation9 + $0x1e0] sm:$0xf]
        %v2776 = vld [vmem:[#allocation9 + $0x1e4] sm:$0xf]
        %v2777 = vld [vmem:[#allocation9 + $0x1e8] sm:$0xf]
        %v2778 = vld [vmem:[#allocation9 + $0x1ec] sm:$0xf]
        %v2779 = vld [vmem:[#allocation9 + $0x1f0] sm:$0xf]
        %v2780 = vld [vmem:[#allocation9 + $0x1f4] sm:$0xf]
        %v2781 = vld [vmem:[#allocation9 + $0x1f8] sm:$0xf]
        %v2782 = vld [vmem:[#allocation9 + $0x1fc] sm:$0xf]
        %v2783 = vld [vmem:[#allocation9 + $0x200] sm:$0xf]
        %v2784 = vld [vmem:[#allocation9 + $0x204] sm:$0xf]
        %v2785 = vld [vmem:[#allocation9 + $0x208] sm:$0xf]
        %v2786 = vld [vmem:[#allocation9 + $0x20c] sm:$0xf]
        %v2787 = vld [vmem:[#allocation9 + $0x210] sm:$0xf]
        %v2788 = vld [vmem:[#allocation9 + $0x214] sm:$0xf]
        %v2789 = vld [vmem:[#allocation9 + $0x218] sm:$0xf]
        %v2790 = vld [vmem:[#allocation9 + $0x21c] sm:$0xf]
        %v2791 = vld [vmem:[#allocation9 + $0x220] sm:$0xf]
        %v2792 = vld [vmem:[#allocation9 + $0x224] sm:$0xf]
        %v2793 = vld [vmem:[#allocation9 + $0x228] sm:$0xf]
        %v2794 = vld [vmem:[#allocation9 + $0x22c] sm:$0xf]
        %v2795 = vld [vmem:[#allocation9 + $0x230] sm:$0xf]
        %v2796 = vld [vmem:[#allocation9 + $0x234] sm:$0xf]
        %v2797 = vld [vmem:[#allocation9 + $0x238] sm:$0xf]
        %v2798 = vld [vmem:[#allocation9 + $0x23c] sm:$0xf]
        %v2839 = vunpack.c.l.b16 %v2615
        %v2840 = vunpack.c.h.b16 %v2615
        %v2841 = vunpack.c.l.b16 %v2616
        %v2842 = vunpack.c.h.b16 %v2616
        %v2843 = vunpack.c.l.b16 %v2617
        %v2844 = vunpack.c.h.b16 %v2617
        %v2845 = vunpack.c.l.b16 %v2618
        %v2846 = vunpack.c.h.b16 %v2618
        %v2847 = vunpack.c.l.b16 %v2619
        %v2848 = vunpack.c.l.b16 %v2620
        %v2849 = vunpack.c.h.b16 %v2620
        %v2850 = vunpack.c.l.b16 %v2621
        %v2851 = vunpack.c.h.b16 %v2621
        %v2852 = vunpack.c.l.b16 %v2622
        %v2853 = vunpack.c.h.b16 %v2622
        %v2854 = vunpack.c.l.b16 %v2623
        %v2855 = vunpack.c.h.b16 %v2623
        %v2856 = vunpack.c.l.b16 %v2624
        %v2857 = vunpack.c.l.b16 %v2625
        %v2858 = vunpack.c.h.b16 %v2625
        %v2859 = vunpack.c.l.b16 %v2626
        %v2860 = vunpack.c.h.b16 %v2626
        %v2861 = vunpack.c.l.b16 %v2627
        %v2862 = vunpack.c.h.b16 %v2627
        %v2863 = vunpack.c.l.b16 %v2628
        %v2864 = vunpack.c.h.b16 %v2628
        %v2865 = vunpack.c.l.b16 %v2629
        %v2866 = vunpack.c.l.b16 %v2630
        %v2867 = vunpack.c.h.b16 %v2630
        %v2868 = vunpack.c.l.b16 %v2631
        %v2869 = vunpack.c.h.b16 %v2631
        %v2870 = vunpack.c.l.b16 %v2632
        %v2871 = vunpack.c.h.b16 %v2632
        %v2872 = vunpack.c.l.b16 %v2633
        %v2873 = vunpack.c.h.b16 %v2633
        %v2874 = vunpack.c.l.b16 %v2634
        %v2875 = vunpack.c.l.b16 %v2635
        %v2876 = vunpack.c.h.b16 %v2635
        %v2877 = vunpack.c.l.b16 %v2636
        %v2878 = vunpack.c.h.b16 %v2636
        %v2879 = vunpack.c.l.b16 %v2637
        %v2880 = vunpack.c.h.b16 %v2637
        %v2881 = vunpack.c.l.b16 %v2638
        %v2882 = vunpack.c.h.b16 %v2638
        %v2883 = vunpack.c.l.b16 %v2639
        %v2884 = vunpack.c.l.b16 %v2640
        %v2885 = vunpack.c.h.b16 %v2640
        %v2886 = vunpack.c.l.b16 %v2641
        %v2887 = vunpack.c.h.b16 %v2641
        %v2888 = vunpack.c.l.b16 %v2642
        %v2889 = vunpack.c.h.b16 %v2642
        %v2890 = vunpack.c.l.b16 %v2643
        %v2891 = vunpack.c.h.b16 %v2643
        %v2892 = vunpack.c.l.b16 %v2644
        %v2893 = vunpack.c.l.b16 %v2645
        %v2894 = vunpack.c.h.b16 %v2645
        %v2895 = vunpack.c.l.b16 %v2646
        %v2896 = vunpack.c.h.b16 %v2646
        %v2897 = vunpack.c.l.b16 %v2647
        %v2898 = vunpack.c.h.b16 %v2647
        %v2899 = vunpack.c.l.b16 %v2648
        %v2900 = vunpack.c.h.b16 %v2648
        %v2901 = vunpack.c.l.b16 %v2649
        %v2902 = vunpack.c.l.b16 %v2650
        %v2903 = vunpack.c.h.b16 %v2650
        %v2904 = vunpack.c.l.b16 %v2651
        %v2905 = vunpack.c.h.b16 %v2651
        %v2906 = vunpack.c.l.b16 %v2652
        %v2907 = vunpack.c.h.b16 %v2652
        %v2908 = vunpack.c.l.b16 %v2653
        %v2909 = vunpack.c.h.b16 %v2653
        %v2910 = vunpack.c.l.b16 %v2654
        %v2911 = vpack.c.b16 %v2848, %v2839
        %v2912 = vpack.c.b16 %v2849, %v2840
        %v2913 = vpack.c.b16 %v2850, %v2841
        %v2914 = vpack.c.b16 %v2851, %v2842
        %v2915 = vpack.c.b16 %v2852, %v2843
        %v2916 = vpack.c.b16 %v2853, %v2844
        %v2917 = vpack.c.b16 %v2854, %v2845
        %v2918 = vpack.c.b16 %v2855, %v2846
        %v2919 = vpack.c.b16 %v2856, %v2847
        %v2920 = vpack.c.b16 %v2866, %v2857
        %v2921 = vpack.c.b16 %v2867, %v2858
        %v2922 = vpack.c.b16 %v2868, %v2859
        %v2923 = vpack.c.b16 %v2869, %v2860
        %v2924 = vpack.c.b16 %v2870, %v2861
        %v2925 = vpack.c.b16 %v2871, %v2862
        %v2926 = vpack.c.b16 %v2872, %v2863
        %v2927 = vpack.c.b16 %v2873, %v2864
        %v2928 = vpack.c.b16 %v2874, %v2865
        %v2929 = vpack.c.b16 %v2884, %v2875
        %v2930 = vpack.c.b16 %v2885, %v2876
        %v2931 = vpack.c.b16 %v2886, %v2877
        %v2932 = vpack.c.b16 %v2887, %v2878
        %v2933 = vpack.c.b16 %v2888, %v2879
        %v2934 = vpack.c.b16 %v2889, %v2880
        %v2935 = vpack.c.b16 %v2890, %v2881
        %v2936 = vpack.c.b16 %v2891, %v2882
        %v2937 = vpack.c.b16 %v2892, %v2883
        %v2938 = vpack.c.b16 %v2902, %v2893
        %v2939 = vpack.c.b16 %v2903, %v2894
        %v2940 = vpack.c.b16 %v2904, %v2895
        %v2941 = vpack.c.b16 %v2905, %v2896
        %v2942 = vpack.c.b16 %v2906, %v2897
        %v2943 = vpack.c.b16 %v2907, %v2898
        %v2944 = vpack.c.b16 %v2908, %v2899
        %v2945 = vpack.c.b16 %v2909, %v2900
        %v2946 = vpack.c.b16 %v2910, %v2901
        %v3127 = vunpack.c.l.b16 %v2655
        %v3128 = vunpack.c.l.b16 %v2656
        %v3129 = vunpack.c.l.b16 %v2657
        %v3130 = vunpack.c.l.b16 %v2658
        %v3131 = vunpack.c.l.b16 %v2659
        %v3132 = vunpack.c.l.b16 %v2660
        %v3133 = vunpack.c.l.b16 %v2661
        %v3134 = vunpack.c.l.b16 %v2662
        %v3135 = vunpack.c.l.b16 %v2663
        %v3136 = vunpack.c.l.b16 %v2664
        %v3137 = vunpack.c.l.b16 %v2665
        %v3138 = vunpack.c.l.b16 %v2666
        %v3139 = vunpack.c.l.b16 %v2667
        %v3140 = vunpack.c.l.b16 %v2668
        %v3141 = vunpack.c.l.b16 %v2669
        %v3142 = vunpack.c.l.b16 %v2670
        %v3143 = vunpack.c.l.b16 %v2671
        %v3144 = vunpack.c.l.b16 %v2672
        %v3145 = vunpack.c.l.b16 %v2673
        %v3146 = vunpack.c.l.b16 %v2674
        %v3147 = vunpack.c.l.b16 %v2675
        %v3148 = vunpack.c.l.b16 %v2676
        %v3149 = vunpack.c.l.b16 %v2677
        %v3150 = vunpack.c.l.b16 %v2678
        %v3151 = vunpack.c.l.b16 %v2679
        %v3152 = vunpack.c.l.b16 %v2680
        %v3153 = vunpack.c.l.b16 %v2681
        %v3154 = vunpack.c.l.b16 %v2682
        %v3155 = vunpack.c.l.b16 %v2683
        %v3156 = vunpack.c.l.b16 %v2684
        %v3157 = vunpack.c.l.b16 %v2685
        %v3158 = vunpack.c.l.b16 %v2686
        %v3159 = vunpack.c.l.b16 %v2687
        %v3160 = vunpack.c.l.b16 %v2688
        %v3161 = vunpack.c.l.b16 %v2689
        %v3162 = vunpack.c.l.b16 %v2690
        %v3163 = vunpack.c.l.b16 %v2691
        %v3164 = vunpack.c.l.b16 %v2692
        %v3165 = vunpack.c.l.b16 %v2693
        %v3166 = vunpack.c.l.b16 %v2694
        %v3167 = vunpack.c.l.b16 %v2695
        %v3168 = vunpack.c.l.b16 %v2696
        %v3169 = vunpack.c.l.b16 %v2697
        %v3170 = vunpack.c.l.b16 %v2698
        %v3171 = vunpack.c.l.b16 %v2699
        %v3172 = vunpack.c.l.b16 %v2700
        %v3173 = vunpack.c.l.b16 %v2701
        %v3174 = vunpack.c.l.b16 %v2702
        %v3175 = vunpack.c.l.b16 %v2703
        %v3176 = vunpack.c.l.b16 %v2704
        %v3177 = vunpack.c.l.b16 %v2705
        %v3178 = vunpack.c.l.b16 %v2706
        %v3179 = vunpack.c.l.b16 %v2707
        %v3180 = vunpack.c.l.b16 %v2708
        %v3181 = vunpack.c.l.b16 %v2709
        %v3182 = vunpack.c.l.b16 %v2710
        %v3183 = vunpack.c.l.b16 %v2711
        %v3184 = vunpack.c.l.b16 %v2712
        %v3185 = vunpack.c.l.b16 %v2713
        %v3186 = vunpack.c.l.b16 %v2714
        %v3187 = vunpack.c.l.b16 %v2715
        %v3188 = vunpack.c.l.b16 %v2716
        %v3189 = vunpack.c.l.b16 %v2717
        %v3190 = vunpack.c.l.b16 %v2718
        %v3191 = vunpack.c.l.b16 %v2719
        %v3192 = vunpack.c.l.b16 %v2720
        %v3193 = vunpack.c.l.b16 %v2721
        %v3194 = vunpack.c.l.b16 %v2722
        %v3195 = vunpack.c.l.b16 %v2723
        %v3196 = vunpack.c.l.b16 %v2724
        %v3197 = vunpack.c.l.b16 %v2725
        %v3198 = vunpack.c.l.b16 %v2726
        %v3199 = vunpack.c.l.b16 %v2727
        %v3200 = vunpack.c.l.b16 %v2728
        %v3201 = vunpack.c.l.b16 %v2729
        %v3202 = vunpack.c.l.b16 %v2730
        %v3203 = vunpack.c.l.b16 %v2731
        %v3204 = vunpack.c.l.b16 %v2732
        %v3205 = vunpack.c.l.b16 %v2733
        %v3206 = vunpack.c.l.b16 %v2734
        %v3207 = vunpack.c.l.b16 %v2735
        %v3208 = vunpack.c.l.b16 %v2736
        %v3209 = vunpack.c.l.b16 %v2737
        %v3210 = vunpack.c.l.b16 %v2738
        %v3211 = vunpack.c.l.b16 %v2739
        %v3212 = vunpack.c.l.b16 %v2740
        %v3213 = vunpack.c.l.b16 %v2741
        %v3214 = vunpack.c.l.b16 %v2742
        %v3215 = vunpack.c.l.b16 %v2743
        %v3216 = vunpack.c.l.b16 %v2744
        %v3217 = vunpack.c.l.b16 %v2745
        %v3218 = vunpack.c.l.b16 %v2746
        %v3219 = vunpack.c.l.b16 %v2747
        %v3220 = vunpack.c.l.b16 %v2748
        %v3221 = vunpack.c.l.b16 %v2749
        %v3222 = vunpack.c.l.b16 %v2750
        %v3223 = vunpack.c.l.b16 %v2751
        %v3224 = vunpack.c.l.b16 %v2752
        %v3225 = vunpack.c.l.b16 %v2753
        %v3226 = vunpack.c.l.b16 %v2754
        %v3227 = vunpack.c.l.b16 %v2755
        %v3228 = vunpack.c.l.b16 %v2756
        %v3229 = vunpack.c.l.b16 %v2757
        %v3230 = vunpack.c.l.b16 %v2758
        %v3231 = vunpack.c.l.b16 %v2759
        %v3232 = vunpack.c.l.b16 %v2760
        %v3233 = vunpack.c.l.b16 %v2761
        %v3234 = vunpack.c.l.b16 %v2762
        %v3235 = vunpack.c.l.b16 %v2763
        %v3236 = vunpack.c.l.b16 %v2764
        %v3237 = vunpack.c.l.b16 %v2765
        %v3238 = vunpack.c.l.b16 %v2766
        %v3239 = vunpack.c.l.b16 %v2767
        %v3240 = vunpack.c.l.b16 %v2768
        %v3241 = vunpack.c.l.b16 %v2769
        %v3242 = vunpack.c.l.b16 %v2770
        %v3243 = vunpack.c.l.b16 %v2771
        %v3244 = vunpack.c.l.b16 %v2772
        %v3245 = vunpack.c.l.b16 %v2773
        %v3246 = vunpack.c.l.b16 %v2774
        %v3247 = vunpack.c.l.b16 %v2775
        %v3248 = vunpack.c.l.b16 %v2776
        %v3249 = vunpack.c.l.b16 %v2777
        %v3250 = vunpack.c.l.b16 %v2778
        %v3251 = vunpack.c.l.b16 %v2779
        %v3252 = vunpack.c.l.b16 %v2780
        %v3253 = vunpack.c.l.b16 %v2781
        %v3254 = vunpack.c.l.b16 %v2782
        %v3255 = vunpack.c.l.b16 %v2783
        %v3256 = vunpack.c.l.b16 %v2784
        %v3257 = vunpack.c.l.b16 %v2785
        %v3258 = vunpack.c.l.b16 %v2786
        %v3259 = vunpack.c.l.b16 %v2787
        %v3260 = vunpack.c.l.b16 %v2788
        %v3261 = vunpack.c.l.b16 %v2789
        %v3262 = vunpack.c.l.b16 %v2790
        %v3263 = vunpack.c.l.b16 %v2791
        %v3264 = vunpack.c.l.b16 %v2792
        %v3265 = vunpack.c.l.b16 %v2793
        %v3266 = vunpack.c.l.b16 %v2794
        %v3267 = vunpack.c.l.b16 %v2795
        %v3268 = vunpack.c.l.b16 %v2796
        %v3269 = vunpack.c.l.b16 %v2797
        %v3270 = vunpack.c.l.b16 %v2798
        %v3271 = vpack.c.b16 %v3128, %v3127
        %v3272 = vpack.c.b16 %v3130, %v3129
        %v3273 = vpack.c.b16 %v3132, %v3131
        %v3274 = vpack.c.b16 %v3134, %v3133
        %v3275 = vpack.c.b16 %v3136, %v3135
        %v3276 = vpack.c.b16 %v3138, %v3137
        %v3277 = vpack.c.b16 %v3140, %v3139
        %v3278 = vpack.c.b16 %v3142, %v3141
        %v3279 = vpack.c.b16 %v3144, %v3143
        %v3280 = vpack.c.b16 %v3146, %v3145
        %v3281 = vpack.c.b16 %v3148, %v3147
        %v3282 = vpack.c.b16 %v3150, %v3149
        %v3283 = vpack.c.b16 %v3152, %v3151
        %v3284 = vpack.c.b16 %v3154, %v3153
        %v3285 = vpack.c.b16 %v3156, %v3155
        %v3286 = vpack.c.b16 %v3158, %v3157
        %v3287 = vpack.c.b16 %v3160, %v3159
        %v3288 = vpack.c.b16 %v3162, %v3161
        %v3289 = vpack.c.b16 %v3164, %v3163
        %v3290 = vpack.c.b16 %v3166, %v3165
        %v3291 = vpack.c.b16 %v3168, %v3167
        %v3292 = vpack.c.b16 %v3170, %v3169
        %v3293 = vpack.c.b16 %v3172, %v3171
        %v3294 = vpack.c.b16 %v3174, %v3173
        %v3295 = vpack.c.b16 %v3176, %v3175
        %v3296 = vpack.c.b16 %v3178, %v3177
        %v3297 = vpack.c.b16 %v3180, %v3179
        %v3298 = vpack.c.b16 %v3182, %v3181
        %v3299 = vpack.c.b16 %v3184, %v3183
        %v3300 = vpack.c.b16 %v3186, %v3185
        %v3301 = vpack.c.b16 %v3188, %v3187
        %v3302 = vpack.c.b16 %v3190, %v3189
        %v3303 = vpack.c.b16 %v3192, %v3191
        %v3304 = vpack.c.b16 %v3194, %v3193
        %v3305 = vpack.c.b16 %v3196, %v3195
        %v3306 = vpack.c.b16 %v3198, %v3197
        %v3307 = vpack.c.b16 %v3200, %v3199
        %v3308 = vpack.c.b16 %v3202, %v3201
        %v3309 = vpack.c.b16 %v3204, %v3203
        %v3310 = vpack.c.b16 %v3206, %v3205
        %v3311 = vpack.c.b16 %v3208, %v3207
        %v3312 = vpack.c.b16 %v3210, %v3209
        %v3313 = vpack.c.b16 %v3212, %v3211
        %v3314 = vpack.c.b16 %v3214, %v3213
        %v3315 = vpack.c.b16 %v3216, %v3215
        %v3316 = vpack.c.b16 %v3218, %v3217
        %v3317 = vpack.c.b16 %v3220, %v3219
        %v3318 = vpack.c.b16 %v3222, %v3221
        %v3319 = vpack.c.b16 %v3224, %v3223
        %v3320 = vpack.c.b16 %v3226, %v3225
        %v3321 = vpack.c.b16 %v3228, %v3227
        %v3322 = vpack.c.b16 %v3230, %v3229
        %v3323 = vpack.c.b16 %v3232, %v3231
        %v3324 = vpack.c.b16 %v3234, %v3233
        %v3325 = vpack.c.b16 %v3236, %v3235
        %v3326 = vpack.c.b16 %v3238, %v3237
        %v3327 = vpack.c.b16 %v3240, %v3239
        %v3328 = vpack.c.b16 %v3242, %v3241
        %v3329 = vpack.c.b16 %v3244, %v3243
        %v3330 = vpack.c.b16 %v3246, %v3245
        %v3331 = vpack.c.b16 %v3248, %v3247
        %v3332 = vpack.c.b16 %v3250, %v3249
        %v3333 = vpack.c.b16 %v3252, %v3251
        %v3334 = vpack.c.b16 %v3254, %v3253
        %v3335 = vpack.c.b16 %v3256, %v3255
        %v3336 = vpack.c.b16 %v3258, %v3257
        %v3337 = vpack.c.b16 %v3260, %v3259
        %v3338 = vpack.c.b16 %v3262, %v3261
        %v3339 = vpack.c.b16 %v3264, %v3263
        %v3340 = vpack.c.b16 %v3266, %v3265
        %v3341 = vpack.c.b16 %v3268, %v3267
        %v3342 = vpack.c.b16 %v3270, %v3269
        %3415 = vmatprep.subr.bf16.mxu0 0
        %3416 = vmatpush1.bf16.msra.mxu0 %v3278
        %3417 = vmatprep.subr.bf16.mxu0 0
        %3418 = vmatpush1.bf16.msra.mxu0 %v3277
        %3419 = vmatprep.subr.bf16.mxu0 0
        %3420 = vmatpush1.bf16.msra.mxu0 %v3276
        %3421 = vmatprep.subr.bf16.mxu0 0
        %3422 = vmatpush1.bf16.msra.mxu0 %v3275
        %3423 = vmatprep.subr.bf16.mxu0 0
        %3424 = vmatpush1.bf16.msra.mxu0 %v3274
        %3425 = vmatprep.subr.bf16.mxu0 0
        %3426 = vmatpush1.bf16.msra.mxu0 %v3273
        %3427 = vmatprep.subr.bf16.mxu0 0
        %3428 = vmatpush1.bf16.msra.mxu0 %v3272
        %3429 = vmatprep.subr.bf16.mxu0 0
        %3430 = vmatpush1.bf16.msra.mxu0 %v3271
        %3431 = vmatprep.subr.bf16.mxu0 0
        %3432 = vmatpush2.bf16.msra.mxu0 %v3286
        %3433 = vmatprep.subr.bf16.mxu0 0
        %3434 = vmatpush2.bf16.msra.mxu0 %v3285
        %3435 = vmatprep.subr.bf16.mxu0 0
        %3436 = vmatpush2.bf16.msra.mxu0 %v3284
        %3437 = vmatprep.subr.bf16.mxu0 0
        %3438 = vmatpush2.bf16.msra.mxu0 %v3283
        %3439 = vmatprep.subr.bf16.mxu0 0
        %3440 = vmatpush2.bf16.msra.mxu0 %v3282
        %3441 = vmatprep.subr.bf16.mxu0 0
        %3442 = vmatpush2.bf16.msra.mxu0 %v3281
        %3443 = vmatprep.subr.bf16.mxu0 0
        %3444 = vmatpush2.bf16.msra.mxu0 %v3280
        %3445 = vmatprep.subr.bf16.mxu0 0
        %3446 = vmatpush2.bf16.msra.mxu0 %v3279
        %3447 = vmatprep.mubr.bf16.mxu0 %v2912
        %3448 = vmatmul.mubr.bf16.gmra.mxu0 %v2911
        %v3449 = vpop.f32.mrf.mxu0
        %v3450 = vadd.f32 0.0, %v3449
        %v3451 = vpop.f32.mrf.mxu0
        %v3452 = vpop.f32.mrf.mxu0
        %v3453 = vadd.f32 0.0, %v3452
        %v3454 = vpop.f32.mrf.mxu0
        %3455 = vmatprep.mubr.bf16.mxu0 %v2921
        %3456 = vmatmul.mubr.bf16.gmra.mxu0 %v2920
        %v3457 = vpop.f32.mrf.mxu0
        %v3458 = vadd.f32 0.0, %v3457
        %v3459 = vpop.f32.mrf.mxu0
        %v3460 = vpop.f32.mrf.mxu0
        %v3461 = vadd.f32 0.0, %v3460
        %v3462 = vpop.f32.mrf.mxu0
        %3463 = vmatprep.mubr.bf16.mxu0 %v2930
        %3464 = vmatmul.mubr.bf16.gmra.mxu0 %v2929
        %v3465 = vpop.f32.mrf.mxu0
        %v3466 = vadd.f32 0.0, %v3465
        %v3467 = vpop.f32.mrf.mxu0
        %v3468 = vpop.f32.mrf.mxu0
        %v3469 = vadd.f32 0.0, %v3468
        %v3470 = vpop.f32.mrf.mxu0
        %3471 = vmatprep.mubr.bf16.mxu0 %v2939
        %3472 = vmatmul.mubr.bf16.gmra.mxu0 %v2938
        %v3473 = vpop.f32.mrf.mxu0
        %v3474 = vadd.f32 0.0, %v3473
        %v3475 = vpop.f32.mrf.mxu0
        %v3476 = vpop.f32.mrf.mxu0
        %v3477 = vadd.f32 0.0, %v3476
        %v3478 = vpop.f32.mrf.mxu0
        %3479 = vdwg.mxu0
        %3480 = vmatprep.subr.bf16.mxu0 0
        %3481 = vmatpush1.bf16.msra.mxu0 %v3294
        %3482 = vmatprep.subr.bf16.mxu0 0
        %3483 = vmatpush1.bf16.msra.mxu0 %v3293
        %3484 = vmatprep.subr.bf16.mxu0 0
        %3485 = vmatpush1.bf16.msra.mxu0 %v3292
        %3486 = vmatprep.subr.bf16.mxu0 0
        %3487 = vmatpush1.bf16.msra.mxu0 %v3291
        %3488 = vmatprep.subr.bf16.mxu0 0
        %3489 = vmatpush1.bf16.msra.mxu0 %v3290
        %3490 = vmatprep.subr.bf16.mxu0 0
        %3491 = vmatpush1.bf16.msra.mxu0 %v3289
        %3492 = vmatprep.subr.bf16.mxu0 0
        %3493 = vmatpush1.bf16.msra.mxu0 %v3288
        %3494 = vmatprep.subr.bf16.mxu0 0
        %3495 = vmatpush1.bf16.msra.mxu0 %v3287
        %3496 = vmatprep.subr.bf16.mxu0 0
        %3497 = vmatpush2.bf16.msra.mxu0 %v3302
        %3498 = vmatprep.subr.bf16.mxu0 0
        %3499 = vmatpush2.bf16.msra.mxu0 %v3301
        %3500 = vmatprep.subr.bf16.mxu0 0
        %3501 = vmatpush2.bf16.msra.mxu0 %v3300
        %3502 = vmatprep.subr.bf16.mxu0 0
        %3503 = vmatpush2.bf16.msra.mxu0 %v3299
        %3504 = vmatprep.subr.bf16.mxu0 0
        %3505 = vmatpush2.bf16.msra.mxu0 %v3298
        %3506 = vmatprep.subr.bf16.mxu0 0
        %3507 = vmatpush2.bf16.msra.mxu0 %v3297
        %3508 = vmatprep.subr.bf16.mxu0 0
        %3509 = vmatpush2.bf16.msra.mxu0 %v3296
        %3510 = vmatprep.subr.bf16.mxu0 0
        %3511 = vmatpush2.bf16.msra.mxu0 %v3295
        %3512 = vmatprep.mubr.bf16.mxu0 %v2914
        %3513 = vmatmul.mubr.bf16.gmra.mxu0 %v2913
        %v3514 = vpop.f32.mrf.mxu0
        %v3515 = vadd.f32 %v3450, %v3514
        %v3516 = vpop.f32.mrf.mxu0
        %v3517 = vpop.f32.mrf.mxu0
        %v3518 = vadd.f32 %v3453, %v3517
        %v3519 = vpop.f32.mrf.mxu0
        %3520 = vmatprep.mubr.bf16.mxu0 %v2923
        %3521 = vmatmul.mubr.bf16.gmra.mxu0 %v2922
        %v3522 = vpop.f32.mrf.mxu0
        %v3523 = vadd.f32 %v3458, %v3522
        %v3524 = vpop.f32.mrf.mxu0
        %v3525 = vpop.f32.mrf.mxu0
        %v3526 = vadd.f32 %v3461, %v3525
        %v3527 = vpop.f32.mrf.mxu0
        %3528 = vmatprep.mubr.bf16.mxu0 %v2932
        %3529 = vmatmul.mubr.bf16.gmra.mxu0 %v2931
        %v3530 = vpop.f32.mrf.mxu0
        %v3531 = vadd.f32 %v3466, %v3530
        %v3532 = vpop.f32.mrf.mxu0
        %v3533 = vpop.f32.mrf.mxu0
        %v3534 = vadd.f32 %v3469, %v3533
        %v3535 = vpop.f32.mrf.mxu0
        %3536 = vmatprep.mubr.bf16.mxu0 %v2941
        %3537 = vmatmul.mubr.bf16.gmra.mxu0 %v2940
        %v3538 = vpop.f32.mrf.mxu0
        %v3539 = vadd.f32 %v3474, %v3538
        %v3540 = vpop.f32.mrf.mxu0
        %v3541 = vpop.f32.mrf.mxu0
        %v3542 = vadd.f32 %v3477, %v3541
        %v3543 = vpop.f32.mrf.mxu0
        %3544 = vdwg.mxu0
        %3545 = vmatprep.subr.bf16.mxu0 0
        %3546 = vmatpush1.bf16.msra.mxu0 %v3310
        %3547 = vmatprep.subr.bf16.mxu0 0
        %3548 = vmatpush1.bf16.msra.mxu0 %v3309
        %3549 = vmatprep.subr.bf16.mxu0 0
        %3550 = vmatpush1.bf16.msra.mxu0 %v3308
        %3551 = vmatprep.subr.bf16.mxu0 0
        %3552 = vmatpush1.bf16.msra.mxu0 %v3307
        %3553 = vmatprep.subr.bf16.mxu0 0
        %3554 = vmatpush1.bf16.msra.mxu0 %v3306
        %3555 = vmatprep.subr.bf16.mxu0 0
        %3556 = vmatpush1.bf16.msra.mxu0 %v3305
        %3557 = vmatprep.subr.bf16.mxu0 0
        %3558 = vmatpush1.bf16.msra.mxu0 %v3304
        %3559 = vmatprep.subr.bf16.mxu0 0
        %3560 = vmatpush1.bf16.msra.mxu0 %v3303
        %3561 = vmatprep.subr.bf16.mxu0 0
        %3562 = vmatpush2.bf16.msra.mxu0 %v3318
        %3563 = vmatprep.subr.bf16.mxu0 0
        %3564 = vmatpush2.bf16.msra.mxu0 %v3317
        %3565 = vmatprep.subr.bf16.mxu0 0
        %3566 = vmatpush2.bf16.msra.mxu0 %v3316
        %3567 = vmatprep.subr.bf16.mxu0 0
        %3568 = vmatpush2.bf16.msra.mxu0 %v3315
        %3569 = vmatprep.subr.bf16.mxu0 0
        %3570 = vmatpush2.bf16.msra.mxu0 %v3314
        %3571 = vmatprep.subr.bf16.mxu0 0
        %3572 = vmatpush2.bf16.msra.mxu0 %v3313
        %3573 = vmatprep.subr.bf16.mxu0 0
        %3574 = vmatpush2.bf16.msra.mxu0 %v3312
        %3575 = vmatprep.subr.bf16.mxu0 0
        %3576 = vmatpush2.bf16.msra.mxu0 %v3311
        %3577 = vmatprep.mubr.bf16.mxu0 %v2916
        %3578 = vmatmul.mubr.bf16.gmra.mxu0 %v2915
        %v3579 = vpop.f32.mrf.mxu0
        %v3580 = vadd.f32 %v3515, %v3579
        %v3581 = vpop.f32.mrf.mxu0
        %v3582 = vpop.f32.mrf.mxu0
        %v3583 = vadd.f32 %v3518, %v3582
        %v3584 = vpop.f32.mrf.mxu0
        %3585 = vmatprep.mubr.bf16.mxu0 %v2925
        %3586 = vmatmul.mubr.bf16.gmra.mxu0 %v2924
        %v3587 = vpop.f32.mrf.mxu0
        %v3588 = vadd.f32 %v3523, %v3587
        %v3589 = vpop.f32.mrf.mxu0
        %v3590 = vpop.f32.mrf.mxu0
        %v3591 = vadd.f32 %v3526, %v3590
        %v3592 = vpop.f32.mrf.mxu0
        %3593 = vmatprep.mubr.bf16.mxu0 %v2934
        %3594 = vmatmul.mubr.bf16.gmra.mxu0 %v2933
        %v3595 = vpop.f32.mrf.mxu0
        %v3596 = vadd.f32 %v3531, %v3595
        %v3597 = vpop.f32.mrf.mxu0
        %v3598 = vpop.f32.mrf.mxu0
        %v3599 = vadd.f32 %v3534, %v3598
        %v3600 = vpop.f32.mrf.mxu0
        %3601 = vmatprep.mubr.bf16.mxu0 %v2943
        %3602 = vmatmul.mubr.bf16.gmra.mxu0 %v2942
        %v3603 = vpop.f32.mrf.mxu0
        %v3604 = vadd.f32 %v3539, %v3603
        %v3605 = vpop.f32.mrf.mxu0
        %v3606 = vpop.f32.mrf.mxu0
        %v3607 = vadd.f32 %v3542, %v3606
        %v3608 = vpop.f32.mrf.mxu0
        %3609 = vdwg.mxu0
        %3610 = vmatprep.subr.bf16.mxu0 0
        %3611 = vmatpush1.bf16.msra.mxu0 %v3326
        %3612 = vmatprep.subr.bf16.mxu0 0
        %3613 = vmatpush1.bf16.msra.mxu0 %v3325
        %3614 = vmatprep.subr.bf16.mxu0 0
        %3615 = vmatpush1.bf16.msra.mxu0 %v3324
        %3616 = vmatprep.subr.bf16.mxu0 0
        %3617 = vmatpush1.bf16.msra.mxu0 %v3323
        %3618 = vmatprep.subr.bf16.mxu0 0
        %3619 = vmatpush1.bf16.msra.mxu0 %v3322
        %3620 = vmatprep.subr.bf16.mxu0 0
        %3621 = vmatpush1.bf16.msra.mxu0 %v3321
        %3622 = vmatprep.subr.bf16.mxu0 0
        %3623 = vmatpush1.bf16.msra.mxu0 %v3320
        %3624 = vmatprep.subr.bf16.mxu0 0
        %3625 = vmatpush1.bf16.msra.mxu0 %v3319
        %3626 = vmatprep.subr.bf16.mxu0 0
        %3627 = vmatpush2.bf16.msra.mxu0 %v3334
        %3628 = vmatprep.subr.bf16.mxu0 0
        %3629 = vmatpush2.bf16.msra.mxu0 %v3333
        %3630 = vmatprep.subr.bf16.mxu0 0
        %3631 = vmatpush2.bf16.msra.mxu0 %v3332
        %3632 = vmatprep.subr.bf16.mxu0 0
        %3633 = vmatpush2.bf16.msra.mxu0 %v3331
        %3634 = vmatprep.subr.bf16.mxu0 0
        %3635 = vmatpush2.bf16.msra.mxu0 %v3330
        %3636 = vmatprep.subr.bf16.mxu0 0
        %3637 = vmatpush2.bf16.msra.mxu0 %v3329
        %3638 = vmatprep.subr.bf16.mxu0 0
        %3639 = vmatpush2.bf16.msra.mxu0 %v3328
        %3640 = vmatprep.subr.bf16.mxu0 0
        %3641 = vmatpush2.bf16.msra.mxu0 %v3327
        %3642 = vmatprep.mubr.bf16.mxu0 %v2918
        %3643 = vmatmul.mubr.bf16.gmra.mxu0 %v2917
        %v3644 = vpop.f32.mrf.mxu0
        %v3645 = vadd.f32 %v3580, %v3644
        %v3646 = vpop.f32.mrf.mxu0
        %v3647 = vpop.f32.mrf.mxu0
        %v3648 = vadd.f32 %v3583, %v3647
        %v3649 = vpop.f32.mrf.mxu0
        %3650 = vmatprep.mubr.bf16.mxu0 %v2927
        %3651 = vmatmul.mubr.bf16.gmra.mxu0 %v2926
        %v3652 = vpop.f32.mrf.mxu0
        %v3653 = vadd.f32 %v3588, %v3652
        %v3654 = vpop.f32.mrf.mxu0
        %v3655 = vpop.f32.mrf.mxu0
        %v3656 = vadd.f32 %v3591, %v3655
        %v3657 = vpop.f32.mrf.mxu0
        %3658 = vmatprep.mubr.bf16.mxu0 %v2936
        %3659 = vmatmul.mubr.bf16.gmra.mxu0 %v2935
        %v3660 = vpop.f32.mrf.mxu0
        %v3661 = vadd.f32 %v3596, %v3660
        %v3662 = vpop.f32.mrf.mxu0
        %v3663 = vpop.f32.mrf.mxu0
        %v3664 = vadd.f32 %v3599, %v3663
        %v3665 = vpop.f32.mrf.mxu0
        %3666 = vmatprep.mubr.bf16.mxu0 %v2945
        %3667 = vmatmul.mubr.bf16.gmra.mxu0 %v2944
        %v3668 = vpop.f32.mrf.mxu0
        %v3669 = vadd.f32 %v3604, %v3668
        %v3670 = vpop.f32.mrf.mxu0
        %v3671 = vpop.f32.mrf.mxu0
        %v3672 = vadd.f32 %v3607, %v3671
        %v3673 = vpop.f32.mrf.mxu0
        %3674 = vdwg.mxu0
        %3675 = vmatprep.subr.bf16.mxu0 0
        %3676 = vmatpush1.bf16.msra.mxu0 %v3342
        %3677 = vmatprep.subr.bf16.mxu0 0
        %3678 = vmatpush1.bf16.msra.mxu0 %v3341
        %3679 = vmatprep.subr.bf16.mxu0 0
        %3680 = vmatpush1.bf16.msra.mxu0 %v3340
        %3681 = vmatprep.subr.bf16.mxu0 0
        %3682 = vmatpush1.bf16.msra.mxu0 %v3339
        %3683 = vmatprep.subr.bf16.mxu0 0
        %3684 = vmatpush1.bf16.msra.mxu0 %v3338
        %3685 = vmatprep.subr.bf16.mxu0 0
        %3686 = vmatpush1.bf16.msra.mxu0 %v3337
        %3687 = vmatprep.subr.bf16.mxu0 0
        %3688 = vmatpush1.bf16.msra.mxu0 %v3336
        %3689 = vmatprep.subr.bf16.mxu0 0
        %3690 = vmatpush1.bf16.msra.mxu0 %v3335
        %3691 = vmatprep.subr.bf16.mxu0 0
        %3692 = vmatpush2.bf16.msra.mxu0 0
        %3693 = vmatprep.subr.bf16.mxu0 0
        %3694 = vmatpush2.bf16.msra.mxu0 0
        %3695 = vmatprep.subr.bf16.mxu0 0
        %3696 = vmatpush2.bf16.msra.mxu0 0
        %3697 = vmatprep.subr.bf16.mxu0 0
        %3698 = vmatpush2.bf16.msra.mxu0 0
        %3699 = vmatprep.subr.bf16.mxu0 0
        %3700 = vmatpush2.bf16.msra.mxu0 0
        %3701 = vmatprep.subr.bf16.mxu0 0
        %3702 = vmatpush2.bf16.msra.mxu0 0
        %3703 = vmatprep.subr.bf16.mxu0 0
        %3704 = vmatpush2.bf16.msra.mxu0 0
        %3705 = vmatprep.subr.bf16.mxu0 0
        %3706 = vmatpush2.bf16.msra.mxu0 0
        %3707 = vmatprep.mubr.bf16.mxu0 0
        %3708 = vmatmul.mubr.bf16.gmra.mxu0 %v2919
        %v3709 = vpop.f32.mrf.mxu0
        %v3710 = vadd.f32 %v3645, %v3709
        %v3711 = vpop.f32.mrf.mxu0
        %v3712 = vpop.f32.mrf.mxu0
        %v3713 = vadd.f32 %v3648, %v3712
        %v3714 = vpop.f32.mrf.mxu0
        %3715 = vmatprep.mubr.bf16.mxu0 0
        %3716 = vmatmul.mubr.bf16.gmra.mxu0 %v2928
        %v3717 = vpop.f32.mrf.mxu0
        %v3718 = vadd.f32 %v3653, %v3717
        %v3719 = vpop.f32.mrf.mxu0
        %v3720 = vpop.f32.mrf.mxu0
        %v3721 = vadd.f32 %v3656, %v3720
        %v3722 = vpop.f32.mrf.mxu0
        %3723 = vmatprep.mubr.bf16.mxu0 0
        %3724 = vmatmul.mubr.bf16.gmra.mxu0 %v2937
        %v3725 = vpop.f32.mrf.mxu0
        %v3726 = vadd.f32 %v3661, %v3725
        %v3727 = vpop.f32.mrf.mxu0
        %v3728 = vpop.f32.mrf.mxu0
        %v3729 = vadd.f32 %v3664, %v3728
        %v3730 = vpop.f32.mrf.mxu0
        %3731 = vmatprep.mubr.bf16.mxu0 0
        %3732 = vmatmul.mubr.bf16.gmra.mxu0 %v2946
        %v3733 = vpop.f32.mrf.mxu0
        %v3734 = vadd.f32 %v3669, %v3733
        %v3735 = vpop.f32.mrf.mxu0
        %v3736 = vpop.f32.mrf.mxu0
        %v3737 = vadd.f32 %v3672, %v3736
        %v3738 = vpop.f32.mrf.mxu0
        %3739 = vdwg.mxu0
        %v3740 = vadd.f32 %v3710, %v3713
        %v3741 = vadd.f32 %v3740, %v3718
        %v3742 = vadd.f32 %v3741, %v3721
        %v3743 = vadd.f32 %v3742, %v3726
        %v3744 = vadd.f32 %v3743, %v3729
        %v3745 = vadd.f32 %v3744, %v3734
        %v3746 = vadd.f32 %v3745, %v3737
        %v3747 = vrot.slane %v3746, 4
        %v3748 = vadd.f32 %v3746, %v3747
        %v3749 = vrot.slane %v3748, 2
        %v3750 = vadd.f32 %v3748, %v3749
        %v3751 = vrot.slane %v3750, 1
        %v3752 = vadd.f32 %v3750, %v3751
        %v3753 = vmul.f32 %v3710, %v3710
        %v3754 = vmul.f32 %v3713, %v3713
        %v3755 = vmul.f32 %v3718, %v3718
        %v3756 = vmul.f32 %v3721, %v3721
        %v3757 = vmul.f32 %v3726, %v3726
        %v3758 = vmul.f32 %v3729, %v3729
        %v3759 = vmul.f32 %v3734, %v3734
        %v3760 = vmul.f32 %v3737, %v3737
        %v3761 = vadd.f32 %v3753, %v3754
        %v3762 = vadd.f32 %v3761, %v3755
        %v3763 = vadd.f32 %v3762, %v3756
        %v3764 = vadd.f32 %v3763, %v3757
        %v3765 = vadd.f32 %v3764, %v3758
        %v3766 = vadd.f32 %v3765, %v3759
        %v3767 = vadd.f32 %v3766, %v3760
        %v3768 = vrot.slane %v3767, 4
        %v3769 = vadd.f32 %v3767, %v3768
        %v3770 = vrot.slane %v3769, 2
        %v3771 = vadd.f32 %v3769, %v3770
        %v3772 = vrot.slane %v3771, 1
        %v3773 = vadd.f32 %v3771, %v3772
        %v3774 = vsel %vm2001, %v3752, %v3773
        %v3775 = vld [vmem:[#allocation10] sm:$0xff]
        %v3776 = vld [vmem:[#allocation10 + $0x8] sm:$0xff]
        %v3777 = vld [vmem:[#allocation10 + $0x10] sm:$0xff]
        %v3778 = vld [vmem:[#allocation10 + $0x18] sm:$0xff]
        %v3779 = vld [vmem:[#allocation10 + $0x20] sm:$0xff]
        %v3780 = vld [vmem:[#allocation10 + $0x28] sm:$0xff]
        %v3781 = vld [vmem:[#allocation10 + $0x30] sm:$0xff]
        %v3782 = vld [vmem:[#allocation10 + $0x38] sm:$0xff]
        %v3783 = vld [vmem:[#allocation10 + $0x40] sm:$0xff]
        %v3784 = vld [vmem:[#allocation10 + $0x48] sm:$0xff]
        %v3785 = vld [vmem:[#allocation10 + $0x50] sm:$0xff]
        %v3786 = vld [vmem:[#allocation10 + $0x58] sm:$0xff]
        %v3787 = vld [vmem:[#allocation10 + $0x60] sm:$0xff]
        %v3788 = vld [vmem:[#allocation10 + $0x68] sm:$0xff]
        %v3789 = vld [vmem:[#allocation10 + $0x70] sm:$0xff]
        %v3790 = vld [vmem:[#allocation10 + $0x78] sm:$0xff]
        %3791 = vmatprep.subr.mxu0 0.0
        %3792 = vmatpush1.msra.mxu0 %v3790
        %3793 = vmatprep.subr.mxu0 0.0
        %3794 = vmatpush1.msra.mxu0 %v3789
        %3795 = vmatprep.subr.mxu0 0.0
        %3796 = vmatpush1.msra.mxu0 %v3788
        %3797 = vmatprep.subr.mxu0 0.0
        %3798 = vmatpush1.msra.mxu0 %v3787
        %3799 = vmatprep.subr.mxu0 0.0
        %3800 = vmatpush1.msra.mxu0 %v3786
        %3801 = vmatprep.subr.mxu0 0.0
        %3802 = vmatpush1.msra.mxu0 %v3785
        %3803 = vmatprep.subr.mxu0 0.0
        %3804 = vmatpush1.msra.mxu0 %v3784
        %3805 = vmatprep.subr.mxu0 0.0
        %3806 = vmatpush1.msra.mxu0 %v3783
        %3807 = vmatprep.subr.mxu0 0.0
        %3808 = vmatpush1.msra.mxu0 %v3782
        %3809 = vmatprep.subr.mxu0 0.0
        %3810 = vmatpush1.msra.mxu0 %v3781
        %3811 = vmatprep.subr.mxu0 0.0
        %3812 = vmatpush1.msra.mxu0 %v3780
        %3813 = vmatprep.subr.mxu0 0.0
        %3814 = vmatpush1.msra.mxu0 %v3779
        %3815 = vmatprep.subr.mxu0 0.0
        %3816 = vmatpush1.msra.mxu0 %v3778
        %3817 = vmatprep.subr.mxu0 0.0
        %3818 = vmatpush1.msra.mxu0 %v3777
        %3819 = vmatprep.subr.mxu0 0.0
        %3820 = vmatpush1.msra.mxu0 %v3776
        %3821 = vmatprep.subr.mxu0 0.0
        %3822 = vmatpush1.msra.mxu0 %v3775
        %3823 = vmatprep.subr.mxu0 0.0
        %3824 = vmatpush2.msra.mxu0 0.0
        %3825 = vmatprep.subr.mxu0 0.0
        %3826 = vmatpush2.msra.mxu0 0.0
        %3827 = vmatprep.subr.mxu0 0.0
        %3828 = vmatpush2.msra.mxu0 0.0
        %3829 = vmatprep.subr.mxu0 0.0
        %3830 = vmatpush2.msra.mxu0 0.0
        %3831 = vmatprep.subr.mxu0 0.0
        %3832 = vmatpush2.msra.mxu0 0.0
        %3833 = vmatprep.subr.mxu0 0.0
        %3834 = vmatpush2.msra.mxu0 0.0
        %3835 = vmatprep.subr.mxu0 0.0
        %3836 = vmatpush2.msra.mxu0 0.0
        %3837 = vmatprep.subr.mxu0 0.0
        %3838 = vmatpush2.msra.mxu0 0.0
        %3839 = vmatprep.subr.mxu0 0.0
        %3840 = vmatpush2.msra.mxu0 0.0
        %3841 = vmatprep.subr.mxu0 0.0
        %3842 = vmatpush2.msra.mxu0 0.0
        %3843 = vmatprep.subr.mxu0 0.0
        %3844 = vmatpush2.msra.mxu0 0.0
        %3845 = vmatprep.subr.mxu0 0.0
        %3846 = vmatpush2.msra.mxu0 0.0
        %3847 = vmatprep.subr.mxu0 0.0
        %3848 = vmatpush2.msra.mxu0 0.0
        %3849 = vmatprep.subr.mxu0 0.0
        %3850 = vmatpush2.msra.mxu0 0.0
        %3851 = vmatprep.subr.mxu0 0.0
        %3852 = vmatpush2.msra.mxu0 0.0
        %3853 = vmatprep.subr.mxu0 0.0
        %3854 = vmatpush2.msra.mxu0 0.0
        %3855 = vmatprep.mubr.f32.mxu0 0.0
        %3856 = vmatmul.mubr.f32.gmra.mxu0 %v3774
        %v3857 = vpop.f32.mrf.mxu0
        %v3858 = vadd.f32 0.0, %v3857
        %v3859 = vpop.f32.mrf.mxu0
        %3860 = vdwg.mxu0
        %v3861 = vmul.f32 %v3858, 0.001953125
        %v3862 = vmul.f32 %v3861, %v3861
        %v3864 = vrot.slane %v3862, 7
        %v3866 = vsub.f32 %v3861, %v3864
        %v3867 = vlaneseq
        %v3868 = vshrl.u32 %v3867, 7
        %v3869 = vsub.s32 0, %v3868
        %v3870 = vrot.slane %v3861, %v3869
        %v3871 = vsub.f32 %v3710, %v3870
        %v3872 = vsub.f32 %v3713, %v3870
        %v3873 = vsub.f32 %v3718, %v3870
        %v3874 = vsub.f32 %v3721, %v3870
        %v3875 = vsub.f32 %v3726, %v3870
        %v3876 = vsub.f32 %v3729, %v3870
        %v3877 = vsub.f32 %v3734, %v3870
        %v3878 = vsub.f32 %v3737, %v3870
        %v3879 = vadd.f32 %v3866, 1e-05
        %v3880 = vrsqrt.pop %v3879
        %v3881 = vlaneseq
        %v3882 = vshrl.u32 %v3881, 7
        %v3883 = vsub.s32 1, %v3882
        %v3884 = vrot.slane %v3880, %v3883
        %v3885 = vmul.f32 %v3871, %v3884
        %v3886 = vmul.f32 %v3872, %v3884
        %v3887 = vmul.f32 %v3873, %v3884
        %v3888 = vmul.f32 %v3874, %v3884
        %v3889 = vmul.f32 %v3875, %v3884
        %v3890 = vmul.f32 %v3876, %v3884
        %v3891 = vmul.f32 %v3877, %v3884
        %v3892 = vmul.f32 %v3878, %v3884
        %v3894 = vlaneseq
        %v3895 = vshrl.u32 %v3894, 7
        %v3896 = vsub.s32 0, %v3895
        %v3897 = vrot.slane %v2181, %v3896
        %v3899 = vmul.f32 %v3885, %v3897
        %v3900 = vmul.f32 %v3886, %v3897
        %v3901 = vmul.f32 %v3887, %v3897
        %v3902 = vmul.f32 %v3888, %v3897
        %v3903 = vmul.f32 %v3889, %v3897
        %v3904 = vmul.f32 %v3890, %v3897
        %v3905 = vmul.f32 %v3891, %v3897
        %v3906 = vmul.f32 %v3892, %v3897
        %v3908 = vlaneseq
        %v3909 = vshrl.u32 %v3908, 7
        %v3910 = vsub.s32 0, %v3909
        %v3911 = vrot.slane %v2182, %v3910
        %v3913 = vadd.f32 %v3899, %v3911
        %v3914 = vadd.f32 %v3900, %v3911
        %v3915 = vadd.f32 %v3901, %v3911
        %v3916 = vadd.f32 %v3902, %v3911
        %v3917 = vadd.f32 %v3903, %v3911
        %v3918 = vadd.f32 %v3904, %v3911
        %v3919 = vadd.f32 %v3905, %v3911
        %v3920 = vadd.f32 %v3906, %v3911
        %v3921 = vadd.f32 %v3913, %v391
        %v3922 = vadd.f32 %v3914, %v392
        %v3923 = vadd.f32 %v3915, %v393
        %v3924 = vadd.f32 %v3916, %v394
        %v3925 = vadd.f32 %v3917, %v395
        %v3926 = vadd.f32 %v3918, %v396
        %v3927 = vadd.f32 %v3919, %v397
        %v3928 = vadd.f32 %v3920, %v398
        %vm3929 = vcmp.gt.f32.partialorder %v3921, 0.0
        %vm3930 = vcmp.gt.f32.partialorder %v3922, 0.0
        %vm3931 = vcmp.gt.f32.partialorder %v3923, 0.0
        %vm3932 = vcmp.gt.f32.partialorder %v3924, 0.0
        %vm3933 = vcmp.gt.f32.partialorder %v3925, 0.0
        %vm3934 = vcmp.gt.f32.partialorder %v3926, 0.0
        %vm3935 = vcmp.gt.f32.partialorder %v3927, 0.0
        %vm3936 = vcmp.gt.f32.partialorder %v3928, 0.0
        %v3937 = vmul.f32 %v3921, 0.01
        %v3938 = vmul.f32 %v3922, 0.01
        %v3939 = vmul.f32 %v3923, 0.01
        %v3940 = vmul.f32 %v3924, 0.01
        %v3941 = vmul.f32 %v3925, 0.01
        %v3942 = vmul.f32 %v3926, 0.01
        %v3943 = vmul.f32 %v3927, 0.01
        %v3944 = vmul.f32 %v3928, 0.01
        %v3945 = vsel %vm3929, %v3921, %v3937
        %v3946 = vsel %vm3930, %v3922, %v3938
        %v3947 = vsel %vm3931, %v3923, %v3939
        %v3948 = vsel %vm3932, %v3924, %v3940
        %v3949 = vsel %vm3933, %v3925, %v3941
        %v3950 = vsel %vm3934, %v3926, %v3942
        %v3951 = vsel %vm3935, %v3927, %v3943
        %v3952 = vsel %vm3936, %v3928, %v3944
        %3953 = vst [vmem:[%s367] sm:$0xff] %v3945
        %3954 = vst [vmem:[%s367 + $0x8] sm:$0xff] %v3946
        %3955 = vst [vmem:[%s367 + $0x10] sm:$0xff] %v3947
        %3956 = vst [vmem:[%s367 + $0x18] sm:$0xff] %v3948
        %3957 = vst [vmem:[%s367 + $0x20] sm:$0xff] %v3949
        %3958 = vst [vmem:[%s367 + $0x28] sm:$0xff] %v3950
        %3959 = vst [vmem:[%s367 + $0x30] sm:$0xff] %v3951
        %3960 = vst [vmem:[%s367 + $0x38] sm:$0xff] %v3952
        %s3961 = sand.u32 %s208, 1
        %s3962 = scalar_lea.sflag [#allocation6], %s3961
        %s3963 = sand.u32 %s208, 1
        %s3964 = smul.addr %s3963, 64
        %s3965 = scalar_lea.vmem [#allocation12], %s3964
        // Predicated region
        $region69: #{tpu_custom_call.1} parent=51 // pred_check
          %p3966 = pneg %p218
        $region70: #{tpu_custom_call.1} parent=51 // pred_check_branch
          %3968 = sbr.rel (%p3966) target = $region72
        $region71: #{tpu_custom_call.1} parent=51 // pred_region
          %s3970 = ssub.s32 1024, 1024
          %3971 = vsyncadd %s3962, %s3970
          %s3972 = smul.addr %s27, 8
          %s3973 = smul.addr %s3972, 128
          %s3974 = scalar_lea.hbm %s8, %s3973
          %s3975 = sshll.u32 %s3965, 4
          %s3976 = int_to_ptr.vmem [resolvable:$true] %s3975
          %3981 = dma.vmem_to_hbm [thread:$0]  %s3976, 1024, %s3974, %s3962, 128, 128, 8
        $region72: #{tpu_custom_call.1} parent=51 // pred_fallthru
          _
      $region52: #{tpu_custom_call.1} parent=5 // pred_fallthru
        _
      %p3982 = scmp.le.s32.totalorder 2, %s22
      // Predicated region
      $region73: #{tpu_custom_call.1} parent=5 // pred_check
        %p3983 = pneg %p3982
      $region74: #{tpu_custom_call.1} parent=5 // pred_check_branch
        %3985 = sbr.rel (%p3983) target = $region76
      $region75: #{tpu_custom_call.1} parent=5 // pred_region
        %s3986 = ssub.s32 %s22, 2
        // Predicated region
        $region77: #{tpu_custom_call.1} parent=75 // pred_check
          %p3987 = pneg %p224
        $region78: #{tpu_custom_call.1} parent=75 // pred_check_branch
          %3989 = sbr.rel (%p3987) target = $region80
        $region79: #{tpu_custom_call.1} parent=75 // pred_region
          %s3990 = sand.u32 %s209, 1
          %s3991 = scalar_lea.sflag [#allocation6], %s3990
          %s3992 = sand.u32 %s209, 1
          %s3993 = smul.addr %s3992, 64
          %s3994 = scalar_lea.vmem [#allocation12], %s3993
          %3995 = dma.done %s3991, 1024
        $region80: #{tpu_custom_call.1} parent=75 // pred_fallthru
          _
      $region76: #{tpu_custom_call.1} parent=5 // pred_fallthru
        _
    $region6: #{tpu_custom_call.1} parent=1 // loop_footer
      %s26 = sadd.s32 1, %s22
    $region7: #{tpu_custom_call.1} parent=1 // loop_footer_branch
      %21 = sbr.rel target = $region3
    $region8: #{tpu_custom_call.1} parent=1 // loop_exit
      _
    %3996 = vsyncpa [#allocation5], 1
    %s3997 = scalar_lea.sflag [#allocation5], 1
    %3998 = vsyncpa %s3997, 1
    %3999 = vsyncpa [#allocation8], 1
    %4000 = vsyncpa [#allocation11], 1
    %4001 = vsyncpa [#allocation6], 1
    %s4002 = scalar_lea.sflag [#allocation6], 1
    %4003 = vsyncpa %s4002, 1

</llo_original>
